<compile_context>
chip_gen: v7x
topology: tpu7x:2x2x1
jax: 0.10.0
libtpu: 0.0.40
codegen_flags: <defaults>
</compile_context>

<pallas_src>
import functools

import jax
import jax.numpy as jnp
import numpy as np
from jax.experimental import pallas as pl
from jax.experimental.pallas import tpu as pltpu


# ---------------------------------------------------------------------------
# Fused kernel: conv1 -> BN2 -> ReLU -> conv2 -> BN2 -> (+identity) -> ReLU
# One grid step processes NB batch items.
# ---------------------------------------------------------------------------
def _make_block_kernel(NB, H, W, Cin, Cout):
    M = NB * H            # matmul M dimension (batch * rows)
    KC = W * Cin          # conv1 contraction width (lanes of the input rows)
    NC = W * Cout         # lane-dense output width

    def kernel(x_ref, w1_ref, w2_ref, scale_ref, bias_ref, o_ref, ypad_ref):
        scale = scale_ref[0]          # (NC,) f32, per-channel scale tiled over W
        bias = bias_ref[0]            # (NC,) f32

        # ---- conv1: 3 banded MXU matmuls, one per kernel row kh -------------
        # x_ref block: (NB, H+2, W*Cin) f32, H-padded. Slicing kh:kh+H along
        # the row axis is the only "shift" needed; kw shifts + W padding live
        # inside the banded weight matrix.
        def conv1_tap(kh):
            xs = x_ref[:, kh:kh + H, :].astype(jnp.bfloat16).reshape(M, KC)
            return jnp.dot(xs, w1_ref[kh], preferred_element_type=jnp.float32)

        z1 = conv1_tap(0) + conv1_tap(1) + conv1_tap(2)        # (M, NC) f32

        # batch_norm2 + ReLU (the PyTorch forward applies batch_norm2 here too)
        y1 = jnp.maximum(z1 * scale + bias, 0.0)               # (M, NC) f32

        # ---- stage y1 into an H-padded bf16 VMEM scratch --------------------
        # Zeroed every step: no cross-step state, so the "parallel" batch axis
        # is safe on multi-TensorCore parts (v7x megacore sharding).
        ypad_ref[...] = jnp.zeros_like(ypad_ref)
        ypad_ref[:, 1:H + 1, :] = y1.astype(jnp.bfloat16).reshape(NB, H, NC)

        # ---- conv2: 3 banded MXU matmuls + batch_norm2 ----------------------
        def conv2_tap(kh):
            ys = ypad_ref[:, kh:kh + H, :].reshape(M, NC)      # bf16
            return jnp.dot(ys, w2_ref[kh], preferred_element_type=jnp.float32)

        z2 = conv2_tap(0) + conv2_tap(1) + conv2_tap(2)        # (M, NC) f32
        y2 = z2 * scale + bias

        # ---- identity residual (shortcut=None) + final ReLU -----------------
        identity = x_ref[:, 1:H + 1, :].reshape(M, KC)         # f32, Cin == Cout
        out = jnp.maximum(y2 + identity, 0.0)
        o_ref[...] = out.reshape(NB, H, NC).astype(o_ref.dtype)

    return kernel


# ---------------------------------------------------------------------------
# Wrapper: PyTorch (NCHW / OIHW) tensors in, PyTorch-layout NCHW out.
# ---------------------------------------------------------------------------
def block_forward(x, w1, w2, gamma2, beta2, mean2, var2, eps=1e-5,
                  batch_block=8):
    N, Cin, H, W = x.shape
    Cout = w1.shape[0]
    # Identity residual (shortcut=None, stride=1) requires matching shapes.
    assert Cin == Cout, "identity residual requires in_channels == out_channels"

    NB = max(1, min(batch_block, N))
    n_steps = -(-N // NB)          # cdiv
    N_pad = n_steps * NB

    # Fold BN2 (eval mode) into per-channel scale/bias, used after BOTH convs.
    # Tile across W so the elementwise stage is lane-dense (last dim W*Cout).
    inv_std = 1.0 / jnp.sqrt(var2.astype(jnp.float32) + eps)
    scale_c = gamma2.astype(jnp.float32) * inv_std
    bias_c = beta2.astype(jnp.float32) - mean2.astype(jnp.float32) * scale_c
    scale_row = jnp.tile(scale_c, W).reshape(1, W * Cout)
    bias_row = jnp.tile(bias_c, W).reshape(1, W * Cout)

    # Banded weight matrices: B[kh, w'*Ci + ci, w*Co + co] = w[kh, kw, ci, co]
    # with kw = w' - w + 1 when |w' - w| <= 1, else 0.  This folds the kw taps
    # AND the W-dim zero padding into a single (W*Ci, W*Co) matmul operand.
    sel = np.zeros((3, W, W), np.float32)
    for kw in range(3):
        for w in range(W):
            wp = w + kw - 1
            if 0 <= wp < W:
                sel[kw, wp, w] = 1.0
    sel = jnp.asarray(sel)

    def band(w_oihw, Ci):
        w_hwio = jnp.transpose(w_oihw.astype(jnp.float32), (2, 3, 1, 0))  # (3,3,Ci,Co)
        B = jnp.einsum('kpq,hkio->hpiqo', sel, w_hwio)                    # (3,W,Ci,W,Co)
        return B.reshape(3, W * Ci, W * Cout).astype(jnp.bfloat16)

    w1b = band(w1, Cin)    # (3, W*Cin,  W*Cout) bf16
    w2b = band(w2, Cout)   # (3, W*Cout, W*Cout) bf16

    # Layout plumbing (wrapper-side, tiny and fused by XLA):
    # NCHW -> NHWC, pad only H by 1 (W padding is inside the banded weights),
    # pad batch to a multiple of NB, then merge (W, C) into the lane dim.
    x_nhwc = jnp.transpose(x.astype(jnp.float32), (0, 2, 3, 1))           # (N,H,W,C)
    x_hpad = jnp.pad(x_nhwc, ((0, N_pad - N), (1, 1), (0, 0), (0, 0)))    # (Np,H+2,W,C)
    x_flat = x_hpad.reshape(N_pad, H + 2, W * Cin)

    kernel = _make_block_kernel(NB, H, W, Cin, Cout)

    out = pl.pallas_call(
        kernel,
        out_shape=jax.ShapeDtypeStruct((N_pad, H, W * Cout), jnp.float32),
        grid_spec=pltpu.PrefetchScalarGridSpec(
            num_scalar_prefetch=0,
            grid=(n_steps,),
            in_specs=[
                pl.BlockSpec((NB, H + 2, W * Cin), lambda b: (b, 0, 0)),
                pl.BlockSpec((3, W * Cin, W * Cout), lambda b: (0, 0, 0)),
                pl.BlockSpec((3, W * Cout, W * Cout), lambda b: (0, 0, 0)),
                pl.BlockSpec((1, W * Cout), lambda b: (0, 0)),
                pl.BlockSpec((1, W * Cout), lambda b: (0, 0)),
            ],
            out_specs=pl.BlockSpec((NB, H, W * Cout), lambda b: (b, 0, 0)),
            scratch_shapes=[pltpu.VMEM((NB, H + 2, W * Cout), jnp.bfloat16)],
        ),
        compiler_params=pltpu.CompilerParams(
            dimension_semantics=("parallel",),
        ),
    )(x_flat, w1b, w2b, scale_row, bias_row)

    # Back to PyTorch layout: (Np, H, W*C) -> (N, H, W, C) -> (N, C, H, W)
    out = out[:N].reshape(N, H, W, Cout)
    return jnp.transpose(out, (0, 3, 1, 2))


# ---------------------------------------------------------------------------
# Pure-JAX reference (mirrors the PyTorch forward in eval mode, f32).
# ---------------------------------------------------------------------------
def block_reference(x, w1, w2, gamma2, beta2, mean2, var2, eps=1e-5):
    def conv(z, w):
        return jax.lax.conv_general_dilated(
            z, w, window_strides=(1, 1), padding="SAME",
            dimension_numbers=("NCHW", "OIHW", "NCHW"),
            precision=jax.lax.Precision.HIGHEST)

    s = gamma2 / jnp.sqrt(var2 + eps)
    b = beta2 - mean2 * s

    def bn2(z):
        return z * s[None, :, None, None] + b[None, :, None, None]

    identity = x
    h = jax.nn.relu(bn2(conv(x, w1)))
    h = bn2(conv(h, w2))
    return jax.nn.relu(h + identity)


if __name__ == "__main__":
    key = jax.random.PRNGKey(0)
    kx, k1, k2, kg, kb, km, kv = jax.random.split(key, 7)

    # Small shapes consistent with the module (batch=2, channels=32, 16x16).
    N, C, H, W = 2, 32, 16, 16
    eps = 1e-5

    x = jax.random.normal(kx, (N, C, H, W), jnp.float32)
    w1 = jax.random.normal(k1, (C, C, 3, 3), jnp.float32) * 0.1
    w2 = jax.random.normal(k2, (C, C, 3, 3), jnp.float32) * 0.1
    gamma2 = 1.0 + 0.1 * jax.random.normal(kg, (C,), jnp.float32)
    beta2 = 0.1 * jax.random.normal(kb, (C,), jnp.float32)
    mean2 = 0.1 * jax.random.normal(km, (C,), jnp.float32)
    var2 = 1.0 + 0.1 * jax.random.uniform(kv, (C,), jnp.float32)

    out = jax.block_until_ready(
        block_forward(x, w1, w2, gamma2, beta2, mean2, var2, eps))
    ref = jax.block_until_ready(
        block_reference(x, w1, w2, gamma2, beta2, mean2, var2, eps))

    # Kernel uses native bf16 MXU passes (f32 accumulation); tolerance is set
    # accordingly vs. the f32 HIGHEST-precision reference.
    np.testing.assert_allclose(np.asarray(out), np.asarray(ref),
                               rtol=5e-2, atol=5e-2)
    print("KERNEL_OK")
</pallas_src>

<mosaic_0001>
module attributes {stable_mosaic.version = 11 : i64} {
  func.func @kernel(%arg0: i32, %arg1: memref<2x18x512xf32, #tpu.memory_space<vmem>>, %arg2: memref<3x512x512xbf16, #tpu.memory_space<vmem>>, %arg3: memref<3x512x512xbf16, #tpu.memory_space<vmem>>, %arg4: memref<1x512xf32, #tpu.memory_space<vmem>>, %arg5: memref<1x512xf32, #tpu.memory_space<vmem>>, %arg6: memref<2x16x512xf32, #tpu.memory_space<vmem>>, %arg7: memref<2x18x512xbf16, #tpu.memory_space<vmem>>) attributes {dimension_semantics = [#tpu.dimension_semantics<parallel>], iteration_bounds = array<i64: 1>, scalar_prefetch = 0 : i64, scratch_operands = 1 : i64, tpu.core_type = #tpu.core_type<tc>, window_params = [{transform_indices = @transform_0, window_bounds = array<i64: 2, 18, 512>}, {pipeline_mode = #tpu.pipeline_mode<synchronous>, transform_indices = @transform_1, window_bounds = array<i64: 3, 512, 512>}, {pipeline_mode = #tpu.pipeline_mode<synchronous>, transform_indices = @transform_2, window_bounds = array<i64: 3, 512, 512>}, {pipeline_mode = #tpu.pipeline_mode<synchronous>, transform_indices = @transform_3, window_bounds = array<i64: 1, 512>}, {pipeline_mode = #tpu.pipeline_mode<synchronous>, transform_indices = @transform_4, window_bounds = array<i64: 1, 512>}, {transform_indices = @transform_5, window_bounds = array<i64: 2, 16, 512>}]} {
    %c0 = arith.constant 0 : index
    %c0_0 = arith.constant 0 : index
    %0 = vector.load %arg4[%c0, %c0_0] : memref<1x512xf32, #tpu.memory_space<vmem>>, vector<1x512xf32>
    %1 = vector.shape_cast %0 : vector<1x512xf32> to vector<512xf32>
    %c0_1 = arith.constant 0 : index
    %c0_2 = arith.constant 0 : index
    %2 = vector.load %arg5[%c0_1, %c0_2] : memref<1x512xf32, #tpu.memory_space<vmem>>, vector<1x512xf32>
    %3 = vector.shape_cast %2 : vector<1x512xf32> to vector<512xf32>
    %c0_3 = arith.constant 0 : index
    %c0_4 = arith.constant 0 : index
    %c0_5 = arith.constant 0 : index
    %4 = vector.load %arg1[%c0_3, %c0_4, %c0_5] : memref<2x18x512xf32, #tpu.memory_space<vmem>>, vector<2x16x512xf32>
    %5 = arith.truncf %4 : vector<2x16x512xf32> to vector<2x16x512xbf16>
    %6 = vector.shape_cast %5 : vector<2x16x512xbf16> to vector<32x512xbf16>
    %c0_6 = arith.constant 0 : index
    %c0_7 = arith.constant 0 : index
    %c0_8 = arith.constant 0 : index
    %7 = vector.load %arg2[%c0_6, %c0_7, %c0_8] : memref<3x512x512xbf16, #tpu.memory_space<vmem>>, vector<1x512x512xbf16>
    %8 = vector.shape_cast %7 : vector<1x512x512xbf16> to vector<512x512xbf16>
    %cst = arith.constant dense<0.000000e+00> : vector<32x512xf32>
    %9 = tpu.matmul %6, %8, %cst {dimension_numbers = #tpu.dot_dimension_numbers<[1], [0], [0], [1], [0, 0, 1, 1], [], []>} : vector<32x512xbf16>, vector<512x512xbf16>, vector<32x512xf32> -> vector<32x512xf32>
    %c0_9 = arith.constant 0 : index
    %c1 = arith.constant 1 : index
    %c0_10 = arith.constant 0 : index
    %10 = vector.load %arg1[%c0_9, %c1, %c0_10] : memref<2x18x512xf32, #tpu.memory_space<vmem>>, vector<2x16x512xf32>
    %11 = arith.truncf %10 : vector<2x16x512xf32> to vector<2x16x512xbf16>
    %12 = vector.shape_cast %11 : vector<2x16x512xbf16> to vector<32x512xbf16>
    %c1_11 = arith.constant 1 : index
    %c0_12 = arith.constant 0 : index
    %c0_13 = arith.constant 0 : index
    %13 = vector.load %arg2[%c1_11, %c0_12, %c0_13] : memref<3x512x512xbf16, #tpu.memory_space<vmem>>, vector<1x512x512xbf16>
    %14 = vector.shape_cast %13 : vector<1x512x512xbf16> to vector<512x512xbf16>
    %cst_14 = arith.constant dense<0.000000e+00> : vector<32x512xf32>
    %15 = tpu.matmul %12, %14, %cst_14 {dimension_numbers = #tpu.dot_dimension_numbers<[1], [0], [0], [1], [0, 0, 1, 1], [], []>} : vector<32x512xbf16>, vector<512x512xbf16>, vector<32x512xf32> -> vector<32x512xf32>
    %16 = arith.addf %9, %15 : vector<32x512xf32>
    %c0_15 = arith.constant 0 : index
    %c2 = arith.constant 2 : index
    %c0_16 = arith.constant 0 : index
    %17 = vector.load %arg1[%c0_15, %c2, %c0_16] : memref<2x18x512xf32, #tpu.memory_space<vmem>>, vector<2x16x512xf32>
    %18 = arith.truncf %17 : vector<2x16x512xf32> to vector<2x16x512xbf16>
    %19 = vector.shape_cast %18 : vector<2x16x512xbf16> to vector<32x512xbf16>
    %c2_17 = arith.constant 2 : index
    %c0_18 = arith.constant 0 : index
    %c0_19 = arith.constant 0 : index
    %20 = vector.load %arg2[%c2_17, %c0_18, %c0_19] : memref<3x512x512xbf16, #tpu.memory_space<vmem>>, vector<1x512x512xbf16>
    %21 = vector.shape_cast %20 : vector<1x512x512xbf16> to vector<512x512xbf16>
    %cst_20 = arith.constant dense<0.000000e+00> : vector<32x512xf32>
    %22 = tpu.matmul %19, %21, %cst_20 {dimension_numbers = #tpu.dot_dimension_numbers<[1], [0], [0], [1], [0, 0, 1, 1], [], []>} : vector<32x512xbf16>, vector<512x512xbf16>, vector<32x512xf32> -> vector<32x512xf32>
    %23 = arith.addf %16, %22 : vector<32x512xf32>
    %24 = vector.shape_cast %1 : vector<512xf32> to vector<1x512xf32>
    %25 = vector.broadcast %24 : vector<1x512xf32> to vector<32x512xf32>
    %26 = arith.mulf %23, %25 : vector<32x512xf32>
    %27 = vector.shape_cast %3 : vector<512xf32> to vector<1x512xf32>
    %28 = vector.broadcast %27 : vector<1x512xf32> to vector<32x512xf32>
    %29 = arith.addf %26, %28 : vector<32x512xf32>
    %cst_21 = arith.constant 0.000000e+00 : f32
    %30 = vector.broadcast %cst_21 : f32 to vector<32x512xf32>
    %31 = arith.maximumf %29, %30 : vector<32x512xf32>
    %cst_22 = arith.constant 0.000000e+00 : bf16
    %32 = vector.broadcast %cst_22 : bf16 to vector<2x18x512xbf16>
    %c0_23 = arith.constant 0 : index
    %c0_24 = arith.constant 0 : index
    %c0_25 = arith.constant 0 : index
    %33 = vector.load %arg7[%c0_23, %c0_24, %c0_25] : memref<2x18x512xbf16, #tpu.memory_space<vmem>>, vector<2x18x512xbf16>
    tpu.vector_store %arg7[%c0_23, %c0_24, %c0_25], %32 {strides = array<i32>} : memref<2x18x512xbf16, #tpu.memory_space<vmem>>, vector<2x18x512xbf16>,
    %34 = arith.truncf %31 : vector<32x512xf32> to vector<32x512xbf16>
    %35 = vector.shape_cast %34 : vector<32x512xbf16> to vector<2x16x512xbf16>
    %c0_26 = arith.constant 0 : index
    %c1_27 = arith.constant 1 : index
    %c0_28 = arith.constant 0 : index
    %36 = vector.load %arg7[%c0_26, %c1_27, %c0_28] : memref<2x18x512xbf16, #tpu.memory_space<vmem>>, vector<2x16x512xbf16>
    tpu.vector_store %arg7[%c0_26, %c1_27, %c0_28], %35 {strides = array<i32>} : memref<2x18x512xbf16, #tpu.memory_space<vmem>>, vector<2x16x512xbf16>,
    %c0_29 = arith.constant 0 : index
    %c0_30 = arith.constant 0 : index
    %c0_31 = arith.constant 0 : index
    %37 = vector.load %arg7[%c0_29, %c0_30, %c0_31] : memref<2x18x512xbf16, #tpu.memory_space<vmem>>, vector<2x16x512xbf16>
    %38 = vector.shape_cast %37 : vector<2x16x512xbf16> to vector<32x512xbf16>
    %c0_32 = arith.constant 0 : index
    %c0_33 = arith.constant 0 : index
    %c0_34 = arith.constant 0 : index
    %39 = vector.load %arg3[%c0_32, %c0_33, %c0_34] : memref<3x512x512xbf16, #tpu.memory_space<vmem>>, vector<1x512x512xbf16>
    %40 = vector.shape_cast %39 : vector<1x512x512xbf16> to vector<512x512xbf16>
    %cst_35 = arith.constant dense<0.000000e+00> : vector<32x512xf32>
    %41 = tpu.matmul %38, %40, %cst_35 {dimension_numbers = #tpu.dot_dimension_numbers<[1], [0], [0], [1], [0, 0, 1, 1], [], []>} : vector<32x512xbf16>, vector<512x512xbf16>, vector<32x512xf32> -> vector<32x512xf32>
    %c0_36 = arith.constant 0 : index
    %c1_37 = arith.constant 1 : index
    %c0_38 = arith.constant 0 : index
    %42 = vector.load %arg7[%c0_36, %c1_37, %c0_38] : memref<2x18x512xbf16, #tpu.memory_space<vmem>>, vector<2x16x512xbf16>
    %43 = vector.shape_cast %42 : vector<2x16x512xbf16> to vector<32x512xbf16>
    %c1_39 = arith.constant 1 : index
    %c0_40 = arith.constant 0 : index
    %c0_41 = arith.constant 0 : index
    %44 = vector.load %arg3[%c1_39, %c0_40, %c0_41] : memref<3x512x512xbf16, #tpu.memory_space<vmem>>, vector<1x512x512xbf16>
    %45 = vector.shape_cast %44 : vector<1x512x512xbf16> to vector<512x512xbf16>
    %cst_42 = arith.constant dense<0.000000e+00> : vector<32x512xf32>
    %46 = tpu.matmul %43, %45, %cst_42 {dimension_numbers = #tpu.dot_dimension_numbers<[1], [0], [0], [1], [0, 0, 1, 1], [], []>} : vector<32x512xbf16>, vector<512x512xbf16>, vector<32x512xf32> -> vector<32x512xf32>
    %47 = arith.addf %41, %46 : vector<32x512xf32>
    %c0_43 = arith.constant 0 : index
    %c2_44 = arith.constant 2 : index
    %c0_45 = arith.constant 0 : index
    %48 = vector.load %arg7[%c0_43, %c2_44, %c0_45] : memref<2x18x512xbf16, #tpu.memory_space<vmem>>, vector<2x16x512xbf16>
    %49 = vector.shape_cast %48 : vector<2x16x512xbf16> to vector<32x512xbf16>
    %c2_46 = arith.constant 2 : index
    %c0_47 = arith.constant 0 : index
    %c0_48 = arith.constant 0 : index
    %50 = vector.load %arg3[%c2_46, %c0_47, %c0_48] : memref<3x512x512xbf16, #tpu.memory_space<vmem>>, vector<1x512x512xbf16>
    %51 = vector.shape_cast %50 : vector<1x512x512xbf16> to vector<512x512xbf16>
    %cst_49 = arith.constant dense<0.000000e+00> : vector<32x512xf32>
    %52 = tpu.matmul %49, %51, %cst_49 {dimension_numbers = #tpu.dot_dimension_numbers<[1], [0], [0], [1], [0, 0, 1, 1], [], []>} : vector<32x512xbf16>, vector<512x512xbf16>, vector<32x512xf32> -> vector<32x512xf32>
    %53 = arith.addf %47, %52 : vector<32x512xf32>
    %54 = vector.shape_cast %1 : vector<512xf32> to vector<1x512xf32>
    %55 = vector.broadcast %54 : vector<1x512xf32> to vector<32x512xf32>
    %56 = arith.mulf %53, %55 : vector<32x512xf32>
    %57 = vector.shape_cast %3 : vector<512xf32> to vector<1x512xf32>
    %58 = vector.broadcast %57 : vector<1x512xf32> to vector<32x512xf32>
    %59 = arith.addf %56, %58 : vector<32x512xf32>
    %c0_50 = arith.constant 0 : index
    %c1_51 = arith.constant 1 : index
    %c0_52 = arith.constant 0 : index
    %60 = vector.load %arg1[%c0_50, %c1_51, %c0_52] : memref<2x18x512xf32, #tpu.memory_space<vmem>>, vector<2x16x512xf32>
    %61 = vector.shape_cast %60 : vector<2x16x512xf32> to vector<32x512xf32>
    %62 = arith.addf %59, %61 : vector<32x512xf32>
    %cst_53 = arith.constant 0.000000e+00 : f32
    %63 = vector.broadcast %cst_53 : f32 to vector<32x512xf32>
    %64 = arith.maximumf %62, %63 : vector<32x512xf32>
    %65 = vector.shape_cast %64 : vector<32x512xf32> to vector<2x16x512xf32>
    %c0_54 = arith.constant 0 : index
    %c0_55 = arith.constant 0 : index
    %c0_56 = arith.constant 0 : index
    %66 = vector.load %arg6[%c0_54, %c0_55, %c0_56] : memref<2x16x512xf32, #tpu.memory_space<vmem>>, vector<2x16x512xf32>
    tpu.vector_store %arg6[%c0_54, %c0_55, %c0_56], %65 {strides = array<i32>} : memref<2x16x512xf32, #tpu.memory_space<vmem>>, vector<2x16x512xf32>,
    return
  }
  func.func @transform_0(%arg0: i32) -> (i32, i32, i32) {
    %c0_i32 = arith.constant 0 : i32
    %c0_i32_0 = arith.constant 0 : i32
    %c0_i32_1 = arith.constant 0 : i32
    return %arg0, %c0_i32, %c0_i32_0 : i32, i32, i32
  }
  func.func @transform_1(%arg0: i32) -> (i32, i32, i32) {
    %c0_i32 = arith.constant 0 : i32
    %c0_i32_0 = arith.constant 0 : i32
    %c0_i32_1 = arith.constant 0 : i32
    %c0_i32_2 = arith.constant 0 : i32
    return %c0_i32, %c0_i32_0, %c0_i32_1 : i32, i32, i32
  }
  func.func @transform_2(%arg0: i32) -> (i32, i32, i32) {
    %c0_i32 = arith.constant 0 : i32
    %c0_i32_0 = arith.constant 0 : i32
    %c0_i32_1 = arith.constant 0 : i32
    %c0_i32_2 = arith.constant 0 : i32
    return %c0_i32, %c0_i32_0, %c0_i32_1 : i32, i32, i32
  }
  func.func @transform_3(%arg0: i32) -> (i32, i32) {
    %c0_i32 = arith.constant 0 : i32
    %c0_i32_0 = arith.constant 0 : i32
    %c0_i32_1 = arith.constant 0 : i32
    return %c0_i32, %c0_i32_0 : i32, i32
  }
  func.func @transform_4(%arg0: i32) -> (i32, i32) {
    %c0_i32 = arith.constant 0 : i32
    %c0_i32_0 = arith.constant 0 : i32
    %c0_i32_1 = arith.constant 0 : i32
    return %c0_i32, %c0_i32_0 : i32, i32
  }
  func.func @transform_5(%arg0: i32) -> (i32, i32, i32) {
    %c0_i32 = arith.constant 0 : i32
    %c0_i32_0 = arith.constant 0 : i32
    %c0_i32_1 = arith.constant 0 : i32
    return %arg0, %c0_i32, %c0_i32_0 : i32, i32, i32
  }
}

</mosaic_0001>

<llo_original>
// kernel: tpu_custom_call.1
$region0: #{tpu_custom_call.1}
  #allocation0 [shape = 'u32[]', space=smem, size = 0x4, offset = 0x4, fixed_abs, tag = 'smem constant byte address 0x4 - core index']
  #allocation1 [shape = 'u32[144,128]{1,0:T(1,128)}', space=vmem, size = 0x12000, scoped, tag = 'internal scratch']
  #allocation2 [shape = 'bf16[2,18,512]{2,1,0:T(8,128)(2,1)}', space=vmem, size = 0xc000, scoped, tag = 'scratch operand']
  %s0 = inlined_call_operand.vmem [shape: f32[2,18,512], index: 0, kind: input, shape index: {}]
  %s1 = inlined_call_operand.hbm [shape: bf16[3,512,512], index: 1, kind: input, shape index: {}]
  %s2 = inlined_call_operand.hbm [shape: bf16[3,512,512], index: 2, kind: input, shape index: {}]
  %s3 = inlined_call_operand.hbm [shape: f32[1,512], index: 3, kind: input, shape index: {}]
  %s4 = inlined_call_operand.hbm [shape: f32[1,512], index: 4, kind: input, shape index: {}]
  %s5 = inlined_call_operand.hbm [shape: f32[2,16,512], index: 5, kind: output, shape index: {}]
  %s6 = sld [smem:[#allocation0]]
  $region46: #{tpu_custom_call.1} parent=0
    _
  %s8 = ssub.s32 1, %s6
  %s9 = scalar_select 0, %s8, %s6
  $region1: #{tpu_custom_call.1} parent=0
    #allocation3 [shape = 'u8[1572864]{0}', space=vmem, size = 0x180000, scoped, tag = 'input window, operand 1, single buffered']
    #allocation4 [shape = 's32[1]{0}', space=sflag, size = 0x4, scoped, tag = 'scoped memory for tpu_custom_call.1']
    #allocation5 [shape = 's32[1]{0}', space=sflag, size = 0x4, scoped, tag = 'scoped memory for tpu_custom_call.1']
    #allocation6 [shape = 'u8[1572864]{0}', space=vmem, size = 0x180000, scoped, tag = 'input window, operand 2, single buffered']
    #allocation7 [shape = 's32[1]{0}', space=sflag, size = 0x4, scoped, tag = 'scoped memory for tpu_custom_call.1']
    #allocation8 [shape = 'u8[2048]{0}', space=vmem, size = 0x800, scoped, tag = 'input window, operand 3, single buffered']
    #allocation9 [shape = 'u8[2048]{0}', space=vmem, size = 0x800, scoped, tag = 'input window, operand 4, single buffered']
    #allocation10 [shape = 's32[1]{0}', space=sflag, size = 0x4, scoped, tag = 'scoped memory for tpu_custom_call.1']
    #allocation11 [shape = 'u8[65536]{0}', space=vmem, size = 0x10000, scoped, tag = 'output window, operand 0, single buffered']
    %10 = vsyncpa [#allocation4], 0
    %11 = vsyncpa [#allocation7], 0
    %12 = vsyncpa [#allocation10], 0
    %13 = vsyncpa [#allocation5], 0
    // Predicated region
    $region2: #{tpu_custom_call.1} parent=1 // pred_check
      _
    $region3: #{tpu_custom_call.1} parent=1 // pred_check_branch
      %15 = sbr.rel (0) target = $region5
    $region4: #{tpu_custom_call.1} parent=1 // pred_region
      _
    $region5: #{tpu_custom_call.1} parent=1 // pred_fallthru
      _
    // Predicated region
    $region6: #{tpu_custom_call.1} parent=1 // pred_check
      _
    $region7: #{tpu_custom_call.1} parent=1 // pred_check_branch
      %17 = sbr.rel (0) target = $region9
    $region8: #{tpu_custom_call.1} parent=1 // pred_region
      %s19 = ssub.s32 49152, 49152
      %20 = vsyncadd [#allocation4], %s19
      %s21 = sshll.u32 [#allocation3], 4
      %s22 = int_to_ptr.vmem [resolvable:$true] %s21
      %27 = dma.hbm_to_vmem [thread:$0]  %s1, 49152, %s22, [#allocation4], 256, 256, 16
    $region9: #{tpu_custom_call.1} parent=1 // pred_fallthru
      _
    // Predicated region
    $region10: #{tpu_custom_call.1} parent=1 // pred_check
      _
    $region11: #{tpu_custom_call.1} parent=1 // pred_check_branch
      %29 = sbr.rel (0) target = $region13
    $region12: #{tpu_custom_call.1} parent=1 // pred_region
      %s31 = ssub.s32 49152, 49152
      %32 = vsyncadd [#allocation7], %s31
      %s33 = sshll.u32 [#allocation6], 4
      %s34 = int_to_ptr.vmem [resolvable:$true] %s33
      %39 = dma.hbm_to_vmem [thread:$0]  %s2, 49152, %s34, [#allocation7], 256, 256, 16
    $region13: #{tpu_custom_call.1} parent=1 // pred_fallthru
      _
    // Predicated region
    $region14: #{tpu_custom_call.1} parent=1 // pred_check
      _
    $region15: #{tpu_custom_call.1} parent=1 // pred_check_branch
      %41 = sbr.rel (0) target = $region17
    $region16: #{tpu_custom_call.1} parent=1 // pred_region
      %s43 = ssub.s32 64, 64
      %44 = vsyncadd [#allocation7], %s43
      %s46 = sshll.u32 [#allocation8], 4
      %s47 = int_to_ptr.vmem [resolvable:$true] %s46
      %49 = dma.hbm_to_vmem [thread:$0]  %s3, 64, %s47, [#allocation7]
    $region17: #{tpu_custom_call.1} parent=1 // pred_fallthru
      _
    // Predicated region
    $region18: #{tpu_custom_call.1} parent=1 // pred_check
      _
    $region19: #{tpu_custom_call.1} parent=1 // pred_check_branch
      %51 = sbr.rel (0) target = $region21
    $region20: #{tpu_custom_call.1} parent=1 // pred_region
      %s53 = ssub.s32 64, 64
      %54 = vsyncadd [#allocation10], %s53
      %s56 = sshll.u32 [#allocation9], 4
      %s57 = int_to_ptr.vmem [resolvable:$true] %s56
      %59 = dma.hbm_to_vmem [thread:$0]  %s4, 64, %s57, [#allocation10]
    $region21: #{tpu_custom_call.1} parent=1 // pred_fallthru
      _
    // Predicated region
    $region22: #{tpu_custom_call.1} parent=1 // pred_check
      _
    $region23: #{tpu_custom_call.1} parent=1 // pred_check_branch
      %61 = sbr.rel (0) target = $region25
    $region24: #{tpu_custom_call.1} parent=1 // pred_region
      %62 = dma.done [#allocation4], 49152
    $region25: #{tpu_custom_call.1} parent=1 // pred_fallthru
      _
    // Predicated region
    $region26: #{tpu_custom_call.1} parent=1 // pred_check
      _
    $region27: #{tpu_custom_call.1} parent=1 // pred_check_branch
      %64 = sbr.rel (0) target = $region29
    $region28: #{tpu_custom_call.1} parent=1 // pred_region
      %65 = dma.done [#allocation7], 49152
    $region29: #{tpu_custom_call.1} parent=1 // pred_fallthru
      _
    // Predicated region
    $region30: #{tpu_custom_call.1} parent=1 // pred_check
      _
    $region31: #{tpu_custom_call.1} parent=1 // pred_check_branch
      %67 = sbr.rel (0) target = $region33
    $region32: #{tpu_custom_call.1} parent=1 // pred_region
      %68 = dma.done [#allocation7], 64
    $region33: #{tpu_custom_call.1} parent=1 // pred_fallthru
      _
    // Predicated region
    $region34: #{tpu_custom_call.1} parent=1 // pred_check
      _
    $region35: #{tpu_custom_call.1} parent=1 // pred_check_branch
      %70 = sbr.rel (0) target = $region37
    $region36: #{tpu_custom_call.1} parent=1 // pred_region
      %71 = dma.done [#allocation10], 64
    $region37: #{tpu_custom_call.1} parent=1 // pred_fallthru
      _
    %v73 = vld [vmem:[#allocation8] sm:$0xf]
    %v74 = vld [vmem:[#allocation9] sm:$0xf]
    %v75 = vld [vmem:[%s0] sm:$0xff]
    %v76 = vld [vmem:[%s0 + $0x8] sm:$0xff]
    %v77 = vld [vmem:[%s0 + $0x10] sm:$0xff]
    %v78 = vld [vmem:[%s0 + $0x18] sm:$0xff]
    %v79 = vld [vmem:[%s0 + $0x20] sm:$0xff]
    %v80 = vld [vmem:[%s0 + $0x28] sm:$0xff]
    %v81 = vld [vmem:[%s0 + $0x30] sm:$0xff]
    %v82 = vld [vmem:[%s0 + $0x38] sm:$0xff]
    %v83 = vld [vmem:[%s0 + $0x60] sm:$0xff]
    %v84 = vld [vmem:[%s0 + $0x68] sm:$0xff]
    %v85 = vld [vmem:[%s0 + $0x70] sm:$0xff]
    %v86 = vld [vmem:[%s0 + $0x78] sm:$0xff]
    %v87 = vld [vmem:[%s0 + $0x80] sm:$0xff]
    %v88 = vld [vmem:[%s0 + $0x88] sm:$0xff]
    %v89 = vld [vmem:[%s0 + $0x90] sm:$0xff]
    %v90 = vld [vmem:[%s0 + $0x98] sm:$0xff]
    %v91 = vpack.c.bf16 %v79, %v75
    %v92 = vpack.c.bf16 %v80, %v76
    %v93 = vpack.c.bf16 %v81, %v77
    %v94 = vpack.c.bf16 %v82, %v78
    %v95 = vpack.c.bf16 %v87, %v83
    %v96 = vpack.c.bf16 %v88, %v84
    %v97 = vpack.c.bf16 %v89, %v85
    %v98 = vpack.c.bf16 %v90, %v86
    %v99 = vld [vmem:[#allocation3] sm:$0xff]
    %v100 = vld [vmem:[#allocation3 + $0x8] sm:$0xff]
    %v101 = vld [vmem:[#allocation3 + $0x10] sm:$0xff]
    %v102 = vld [vmem:[#allocation3 + $0x18] sm:$0xff]
    %v103 = vld [vmem:[#allocation3 + $0x20] sm:$0xff]
    %v104 = vld [vmem:[#allocation3 + $0x28] sm:$0xff]
    %v105 = vld [vmem:[#allocation3 + $0x30] sm:$0xff]
    %v106 = vld [vmem:[#allocation3 + $0x38] sm:$0xff]
    %v107 = vld [vmem:[#allocation3 + $0x40] sm:$0xff]
    %v108 = vld [vmem:[#allocation3 + $0x48] sm:$0xff]
    %v109 = vld [vmem:[#allocation3 + $0x50] sm:$0xff]
    %v110 = vld [vmem:[#allocation3 + $0x58] sm:$0xff]
    %v111 = vld [vmem:[#allocation3 + $0x60] sm:$0xff]
    %v112 = vld [vmem:[#allocation3 + $0x68] sm:$0xff]
    %v113 = vld [vmem:[#allocation3 + $0x70] sm:$0xff]
    %v114 = vld [vmem:[#allocation3 + $0x78] sm:$0xff]
    %v115 = vld [vmem:[#allocation3 + $0x80] sm:$0xff]
    %v116 = vld [vmem:[#allocation3 + $0x88] sm:$0xff]
    %v117 = vld [vmem:[#allocation3 + $0x90] sm:$0xff]
    %v118 = vld [vmem:[#allocation3 + $0x98] sm:$0xff]
    %v119 = vld [vmem:[#allocation3 + $0xa0] sm:$0xff]
    %v120 = vld [vmem:[#allocation3 + $0xa8] sm:$0xff]
    %v121 = vld [vmem:[#allocation3 + $0xb0] sm:$0xff]
    %v122 = vld [vmem:[#allocation3 + $0xb8] sm:$0xff]
    %v123 = vld [vmem:[#allocation3 + $0xc0] sm:$0xff]
    %v124 = vld [vmem:[#allocation3 + $0xc8] sm:$0xff]
    %v125 = vld [vmem:[#allocation3 + $0xd0] sm:$0xff]
    %v126 = vld [vmem:[#allocation3 + $0xd8] sm:$0xff]
    %v127 = vld [vmem:[#allocation3 + $0xe0] sm:$0xff]
    %v128 = vld [vmem:[#allocation3 + $0xe8] sm:$0xff]
    %v129 = vld [vmem:[#allocation3 + $0xf0] sm:$0xff]
    %v130 = vld [vmem:[#allocation3 + $0xf8] sm:$0xff]
    %v131 = vld [vmem:[#allocation3 + $0x100] sm:$0xff]
    %v132 = vld [vmem:[#allocation3 + $0x108] sm:$0xff]
    %v133 = vld [vmem:[#allocation3 + $0x110] sm:$0xff]
    %v134 = vld [vmem:[#allocation3 + $0x118] sm:$0xff]
    %v135 = vld [vmem:[#allocation3 + $0x120] sm:$0xff]
    %v136 = vld [vmem:[#allocation3 + $0x128] sm:$0xff]
    %v137 = vld [vmem:[#allocation3 + $0x130] sm:$0xff]
    %v138 = vld [vmem:[#allocation3 + $0x138] sm:$0xff]
    %v139 = vld [vmem:[#allocation3 + $0x140] sm:$0xff]
    %v140 = vld [vmem:[#allocation3 + $0x148] sm:$0xff]
    %v141 = vld [vmem:[#allocation3 + $0x150] sm:$0xff]
    %v142 = vld [vmem:[#allocation3 + $0x158] sm:$0xff]
    %v143 = vld [vmem:[#allocation3 + $0x160] sm:$0xff]
    %v144 = vld [vmem:[#allocation3 + $0x168] sm:$0xff]
    %v145 = vld [vmem:[#allocation3 + $0x170] sm:$0xff]
    %v146 = vld [vmem:[#allocation3 + $0x178] sm:$0xff]
    %v147 = vld [vmem:[#allocation3 + $0x180] sm:$0xff]
    %v148 = vld [vmem:[#allocation3 + $0x188] sm:$0xff]
    %v149 = vld [vmem:[#allocation3 + $0x190] sm:$0xff]
    %v150 = vld [vmem:[#allocation3 + $0x198] sm:$0xff]
    %v151 = vld [vmem:[#allocation3 + $0x1a0] sm:$0xff]
    %v152 = vld [vmem:[#allocation3 + $0x1a8] sm:$0xff]
    %v153 = vld [vmem:[#allocation3 + $0x1b0] sm:$0xff]
    %v154 = vld [vmem:[#allocation3 + $0x1b8] sm:$0xff]
    %v155 = vld [vmem:[#allocation3 + $0x1c0] sm:$0xff]
    %v156 = vld [vmem:[#allocation3 + $0x1c8] sm:$0xff]
    %v157 = vld [vmem:[#allocation3 + $0x1d0] sm:$0xff]
    %v158 = vld [vmem:[#allocation3 + $0x1d8] sm:$0xff]
    %v159 = vld [vmem:[#allocation3 + $0x1e0] sm:$0xff]
    %v160 = vld [vmem:[#allocation3 + $0x1e8] sm:$0xff]
    %v161 = vld [vmem:[#allocation3 + $0x1f0] sm:$0xff]
    %v162 = vld [vmem:[#allocation3 + $0x1f8] sm:$0xff]
    %v163 = vld [vmem:[#allocation3 + $0x200] sm:$0xff]
    %v164 = vld [vmem:[#allocation3 + $0x208] sm:$0xff]
    %v165 = vld [vmem:[#allocation3 + $0x210] sm:$0xff]
    %v166 = vld [vmem:[#allocation3 + $0x218] sm:$0xff]
    %v167 = vld [vmem:[#allocation3 + $0x220] sm:$0xff]
    %v168 = vld [vmem:[#allocation3 + $0x228] sm:$0xff]
    %v169 = vld [vmem:[#allocation3 + $0x230] sm:$0xff]
    %v170 = vld [vmem:[#allocation3 + $0x238] sm:$0xff]
    %v171 = vld [vmem:[#allocation3 + $0x240] sm:$0xff]
    %v172 = vld [vmem:[#allocation3 + $0x248] sm:$0xff]
    %v173 = vld [vmem:[#allocation3 + $0x250] sm:$0xff]
    %v174 = vld [vmem:[#allocation3 + $0x258] sm:$0xff]
    %v175 = vld [vmem:[#allocation3 + $0x260] sm:$0xff]
    %v176 = vld [vmem:[#allocation3 + $0x268] sm:$0xff]
    %v177 = vld [vmem:[#allocation3 + $0x270] sm:$0xff]
    %v178 = vld [vmem:[#allocation3 + $0x278] sm:$0xff]
    %v179 = vld [vmem:[#allocation3 + $0x280] sm:$0xff]
    %v180 = vld [vmem:[#allocation3 + $0x288] sm:$0xff]
    %v181 = vld [vmem:[#allocation3 + $0x290] sm:$0xff]
    %v182 = vld [vmem:[#allocation3 + $0x298] sm:$0xff]
    %v183 = vld [vmem:[#allocation3 + $0x2a0] sm:$0xff]
    %v184 = vld [vmem:[#allocation3 + $0x2a8] sm:$0xff]
    %v185 = vld [vmem:[#allocation3 + $0x2b0] sm:$0xff]
    %v186 = vld [vmem:[#allocation3 + $0x2b8] sm:$0xff]
    %v187 = vld [vmem:[#allocation3 + $0x2c0] sm:$0xff]
    %v188 = vld [vmem:[#allocation3 + $0x2c8] sm:$0xff]
    %v189 = vld [vmem:[#allocation3 + $0x2d0] sm:$0xff]
    %v190 = vld [vmem:[#allocation3 + $0x2d8] sm:$0xff]
    %v191 = vld [vmem:[#allocation3 + $0x2e0] sm:$0xff]
    %v192 = vld [vmem:[#allocation3 + $0x2e8] sm:$0xff]
    %v193 = vld [vmem:[#allocation3 + $0x2f0] sm:$0xff]
    %v194 = vld [vmem:[#allocation3 + $0x2f8] sm:$0xff]
    %v195 = vld [vmem:[#allocation3 + $0x300] sm:$0xff]
    %v196 = vld [vmem:[#allocation3 + $0x308] sm:$0xff]
    %v197 = vld [vmem:[#allocation3 + $0x310] sm:$0xff]
    %v198 = vld [vmem:[#allocation3 + $0x318] sm:$0xff]
    %v199 = vld [vmem:[#allocation3 + $0x320] sm:$0xff]
    %v200 = vld [vmem:[#allocation3 + $0x328] sm:$0xff]
    %v201 = vld [vmem:[#allocation3 + $0x330] sm:$0xff]
    %v202 = vld [vmem:[#allocation3 + $0x338] sm:$0xff]
    %v203 = vld [vmem:[#allocation3 + $0x340] sm:$0xff]
    %v204 = vld [vmem:[#allocation3 + $0x348] sm:$0xff]
    %v205 = vld [vmem:[#allocation3 + $0x350] sm:$0xff]
    %v206 = vld [vmem:[#allocation3 + $0x358] sm:$0xff]
    %v207 = vld [vmem:[#allocation3 + $0x360] sm:$0xff]
    %v208 = vld [vmem:[#allocation3 + $0x368] sm:$0xff]
    %v209 = vld [vmem:[#allocation3 + $0x370] sm:$0xff]
    %v210 = vld [vmem:[#allocation3 + $0x378] sm:$0xff]
    %v211 = vld [vmem:[#allocation3 + $0x380] sm:$0xff]
    %v212 = vld [vmem:[#allocation3 + $0x388] sm:$0xff]
    %v213 = vld [vmem:[#allocation3 + $0x390] sm:$0xff]
    %v214 = vld [vmem:[#allocation3 + $0x398] sm:$0xff]
    %v215 = vld [vmem:[#allocation3 + $0x3a0] sm:$0xff]
    %v216 = vld [vmem:[#allocation3 + $0x3a8] sm:$0xff]
    %v217 = vld [vmem:[#allocation3 + $0x3b0] sm:$0xff]
    %v218 = vld [vmem:[#allocation3 + $0x3b8] sm:$0xff]
    %v219 = vld [vmem:[#allocation3 + $0x3c0] sm:$0xff]
    %v220 = vld [vmem:[#allocation3 + $0x3c8] sm:$0xff]
    %v221 = vld [vmem:[#allocation3 + $0x3d0] sm:$0xff]
    %v222 = vld [vmem:[#allocation3 + $0x3d8] sm:$0xff]
    %v223 = vld [vmem:[#allocation3 + $0x3e0] sm:$0xff]
    %v224 = vld [vmem:[#allocation3 + $0x3e8] sm:$0xff]
    %v225 = vld [vmem:[#allocation3 + $0x3f0] sm:$0xff]
    %v226 = vld [vmem:[#allocation3 + $0x3f8] sm:$0xff]
    %v227 = vld [vmem:[%s0] sm:$0xfe]
    %v228 = vld [vmem:[%s0 + $0x8] sm:$0xfe]
    %v229 = vld [vmem:[%s0 + $0x10] sm:$0xfe]
    %v230 = vld [vmem:[%s0 + $0x18] sm:$0xfe]
    %v231 = vld [vmem:[%s0 + $0x40] sm:$0x1]
    %v232 = vld [vmem:[%s0 + $0x48] sm:$0x1]
    %v233 = vld [vmem:[%s0 + $0x50] sm:$0x1]
    %v234 = vld [vmem:[%s0 + $0x58] sm:$0x1]
    %v235 = vld [vmem:[%s0 + $0x60] sm:$0xfe]
    %v236 = vld [vmem:[%s0 + $0x68] sm:$0xfe]
    %v237 = vld [vmem:[%s0 + $0x70] sm:$0xfe]
    %v238 = vld [vmem:[%s0 + $0x78] sm:$0xfe]
    %v239 = vld [vmem:[%s0 + $0xa0] sm:$0x1]
    %v240 = vld [vmem:[%s0 + $0xa8] sm:$0x1]
    %v241 = vld [vmem:[%s0 + $0xb0] sm:$0x1]
    %v242 = vld [vmem:[%s0 + $0xb8] sm:$0x1]
    %v243 = vpack.c.bf16 %v79, %v227
    %v244 = vpack.c.bf16 %v80, %v228
    %v245 = vpack.c.bf16 %v81, %v229
    %v246 = vpack.c.bf16 %v82, %v230
    %v247 = vpack.c.bf16 %v231, %v231
    %v248 = vpack.c.bf16 %v232, %v232
    %v249 = vpack.c.bf16 %v233, %v233
    %v250 = vpack.c.bf16 %v234, %v234
    %v251 = vpack.c.bf16 %v87, %v235
    %v252 = vpack.c.bf16 %v88, %v236
    %v253 = vpack.c.bf16 %v89, %v237
    %v254 = vpack.c.bf16 %v90, %v238
    %v255 = vpack.c.bf16 %v239, %v239
    %v256 = vpack.c.bf16 %v240, %v240
    %v257 = vpack.c.bf16 %v241, %v241
    %v258 = vpack.c.bf16 %v242, %v242
    %vm259 = vsmask.f32 7424
    %v261 = vshrl.u32 %v243, 16
    %v263 = vshll.u32 %v243, 16
    %v265 = vrot.slane %v263, 1
    %v266 = vor.u32 %v261, %v265
    %v268 = vshll.u32 %v247, 16
    %v270 = vrot.slane %v268, 1
    %v271 = vsel %vm259, %v266, %v270
    %v273 = vshrl.u32 %v244, 16
    %v275 = vshll.u32 %v244, 16
    %v277 = vrot.slane %v275, 1
    %v278 = vor.u32 %v273, %v277
    %v280 = vshll.u32 %v248, 16
    %v282 = vrot.slane %v280, 1
    %v283 = vsel %vm259, %v278, %v282
    %v285 = vshrl.u32 %v245, 16
    %v287 = vshll.u32 %v245, 16
    %v289 = vrot.slane %v287, 1
    %v290 = vor.u32 %v285, %v289
    %v292 = vshll.u32 %v249, 16
    %v294 = vrot.slane %v292, 1
    %v295 = vsel %vm259, %v290, %v294
    %v297 = vshrl.u32 %v246, 16
    %v299 = vshll.u32 %v246, 16
    %v301 = vrot.slane %v299, 1
    %v302 = vor.u32 %v297, %v301
    %v304 = vshll.u32 %v250, 16
    %v306 = vrot.slane %v304, 1
    %v307 = vsel %vm259, %v302, %v306
    %v309 = vshrl.u32 %v251, 16
    %v311 = vshll.u32 %v251, 16
    %v313 = vrot.slane %v311, 1
    %v314 = vor.u32 %v309, %v313
    %v316 = vshll.u32 %v255, 16
    %v318 = vrot.slane %v316, 1
    %v319 = vsel %vm259, %v314, %v318
    %v321 = vshrl.u32 %v252, 16
    %v323 = vshll.u32 %v252, 16
    %v325 = vrot.slane %v323, 1
    %v326 = vor.u32 %v321, %v325
    %v328 = vshll.u32 %v256, 16
    %v330 = vrot.slane %v328, 1
    %v331 = vsel %vm259, %v326, %v330
    %v333 = vshrl.u32 %v253, 16
    %v335 = vshll.u32 %v253, 16
    %v337 = vrot.slane %v335, 1
    %v338 = vor.u32 %v333, %v337
    %v340 = vshll.u32 %v257, 16
    %v342 = vrot.slane %v340, 1
    %v343 = vsel %vm259, %v338, %v342
    %v345 = vshrl.u32 %v254, 16
    %v347 = vshll.u32 %v254, 16
    %v349 = vrot.slane %v347, 1
    %v350 = vor.u32 %v345, %v349
    %v352 = vshll.u32 %v258, 16
    %v354 = vrot.slane %v352, 1
    %v355 = vsel %vm259, %v350, %v354
    %s364 = scalar_lea.vmem [#allocation3], 1024
    %v365 = vld [vmem:[%s364] sm:$0xff]
    %v366 = vld [vmem:[%s364 + $0x8] sm:$0xff]
    %v367 = vld [vmem:[%s364 + $0x10] sm:$0xff]
    %v368 = vld [vmem:[%s364 + $0x18] sm:$0xff]
    %v369 = vld [vmem:[%s364 + $0x20] sm:$0xff]
    %v370 = vld [vmem:[%s364 + $0x28] sm:$0xff]
    %v371 = vld [vmem:[%s364 + $0x30] sm:$0xff]
    %v372 = vld [vmem:[%s364 + $0x38] sm:$0xff]
    %v373 = vld [vmem:[%s364 + $0x40] sm:$0xff]
    %v374 = vld [vmem:[%s364 + $0x48] sm:$0xff]
    %v375 = vld [vmem:[%s364 + $0x50] sm:$0xff]
    %v376 = vld [vmem:[%s364 + $0x58] sm:$0xff]
    %v377 = vld [vmem:[%s364 + $0x60] sm:$0xff]
    %v378 = vld [vmem:[%s364 + $0x68] sm:$0xff]
    %v379 = vld [vmem:[%s364 + $0x70] sm:$0xff]
    %v380 = vld [vmem:[%s364 + $0x78] sm:$0xff]
    %v381 = vld [vmem:[%s364 + $0x80] sm:$0xff]
    %v382 = vld [vmem:[%s364 + $0x88] sm:$0xff]
    %v383 = vld [vmem:[%s364 + $0x90] sm:$0xff]
    %v384 = vld [vmem:[%s364 + $0x98] sm:$0xff]
    %v385 = vld [vmem:[%s364 + $0xa0] sm:$0xff]
    %v386 = vld [vmem:[%s364 + $0xa8] sm:$0xff]
    %v387 = vld [vmem:[%s364 + $0xb0] sm:$0xff]
    %v388 = vld [vmem:[%s364 + $0xb8] sm:$0xff]
    %v389 = vld [vmem:[%s364 + $0xc0] sm:$0xff]
    %v390 = vld [vmem:[%s364 + $0xc8] sm:$0xff]
    %v391 = vld [vmem:[%s364 + $0xd0] sm:$0xff]
    %v392 = vld [vmem:[%s364 + $0xd8] sm:$0xff]
    %v393 = vld [vmem:[%s364 + $0xe0] sm:$0xff]
    %v394 = vld [vmem:[%s364 + $0xe8] sm:$0xff]
    %v395 = vld [vmem:[%s364 + $0xf0] sm:$0xff]
    %v396 = vld [vmem:[%s364 + $0xf8] sm:$0xff]
    %v397 = vld [vmem:[%s364 + $0x100] sm:$0xff]
    %v398 = vld [vmem:[%s364 + $0x108] sm:$0xff]
    %v399 = vld [vmem:[%s364 + $0x110] sm:$0xff]
    %v400 = vld [vmem:[%s364 + $0x118] sm:$0xff]
    %v401 = vld [vmem:[%s364 + $0x120] sm:$0xff]
    %v402 = vld [vmem:[%s364 + $0x128] sm:$0xff]
    %v403 = vld [vmem:[%s364 + $0x130] sm:$0xff]
    %v404 = vld [vmem:[%s364 + $0x138] sm:$0xff]
    %v405 = vld [vmem:[%s364 + $0x140] sm:$0xff]
    %v406 = vld [vmem:[%s364 + $0x148] sm:$0xff]
    %v407 = vld [vmem:[%s364 + $0x150] sm:$0xff]
    %v408 = vld [vmem:[%s364 + $0x158] sm:$0xff]
    %v409 = vld [vmem:[%s364 + $0x160] sm:$0xff]
    %v410 = vld [vmem:[%s364 + $0x168] sm:$0xff]
    %v411 = vld [vmem:[%s364 + $0x170] sm:$0xff]
    %v412 = vld [vmem:[%s364 + $0x178] sm:$0xff]
    %v413 = vld [vmem:[%s364 + $0x180] sm:$0xff]
    %v414 = vld [vmem:[%s364 + $0x188] sm:$0xff]
    %v415 = vld [vmem:[%s364 + $0x190] sm:$0xff]
    %v416 = vld [vmem:[%s364 + $0x198] sm:$0xff]
    %v417 = vld [vmem:[%s364 + $0x1a0] sm:$0xff]
    %v418 = vld [vmem:[%s364 + $0x1a8] sm:$0xff]
    %v419 = vld [vmem:[%s364 + $0x1b0] sm:$0xff]
    %v420 = vld [vmem:[%s364 + $0x1b8] sm:$0xff]
    %v421 = vld [vmem:[%s364 + $0x1c0] sm:$0xff]
    %v422 = vld [vmem:[%s364 + $0x1c8] sm:$0xff]
    %v423 = vld [vmem:[%s364 + $0x1d0] sm:$0xff]
    %v424 = vld [vmem:[%s364 + $0x1d8] sm:$0xff]
    %v425 = vld [vmem:[%s364 + $0x1e0] sm:$0xff]
    %v426 = vld [vmem:[%s364 + $0x1e8] sm:$0xff]
    %v427 = vld [vmem:[%s364 + $0x1f0] sm:$0xff]
    %v428 = vld [vmem:[%s364 + $0x1f8] sm:$0xff]
    %v429 = vld [vmem:[%s364 + $0x200] sm:$0xff]
    %v430 = vld [vmem:[%s364 + $0x208] sm:$0xff]
    %v431 = vld [vmem:[%s364 + $0x210] sm:$0xff]
    %v432 = vld [vmem:[%s364 + $0x218] sm:$0xff]
    %v433 = vld [vmem:[%s364 + $0x220] sm:$0xff]
    %v434 = vld [vmem:[%s364 + $0x228] sm:$0xff]
    %v435 = vld [vmem:[%s364 + $0x230] sm:$0xff]
    %v436 = vld [vmem:[%s364 + $0x238] sm:$0xff]
    %v437 = vld [vmem:[%s364 + $0x240] sm:$0xff]
    %v438 = vld [vmem:[%s364 + $0x248] sm:$0xff]
    %v439 = vld [vmem:[%s364 + $0x250] sm:$0xff]
    %v440 = vld [vmem:[%s364 + $0x258] sm:$0xff]
    %v441 = vld [vmem:[%s364 + $0x260] sm:$0xff]
    %v442 = vld [vmem:[%s364 + $0x268] sm:$0xff]
    %v443 = vld [vmem:[%s364 + $0x270] sm:$0xff]
    %v444 = vld [vmem:[%s364 + $0x278] sm:$0xff]
    %v445 = vld [vmem:[%s364 + $0x280] sm:$0xff]
    %v446 = vld [vmem:[%s364 + $0x288] sm:$0xff]
    %v447 = vld [vmem:[%s364 + $0x290] sm:$0xff]
    %v448 = vld [vmem:[%s364 + $0x298] sm:$0xff]
    %v449 = vld [vmem:[%s364 + $0x2a0] sm:$0xff]
    %v450 = vld [vmem:[%s364 + $0x2a8] sm:$0xff]
    %v451 = vld [vmem:[%s364 + $0x2b0] sm:$0xff]
    %v452 = vld [vmem:[%s364 + $0x2b8] sm:$0xff]
    %v453 = vld [vmem:[%s364 + $0x2c0] sm:$0xff]
    %v454 = vld [vmem:[%s364 + $0x2c8] sm:$0xff]
    %v455 = vld [vmem:[%s364 + $0x2d0] sm:$0xff]
    %v456 = vld [vmem:[%s364 + $0x2d8] sm:$0xff]
    %v457 = vld [vmem:[%s364 + $0x2e0] sm:$0xff]
    %v458 = vld [vmem:[%s364 + $0x2e8] sm:$0xff]
    %v459 = vld [vmem:[%s364 + $0x2f0] sm:$0xff]
    %v460 = vld [vmem:[%s364 + $0x2f8] sm:$0xff]
    %v461 = vld [vmem:[%s364 + $0x300] sm:$0xff]
    %v462 = vld [vmem:[%s364 + $0x308] sm:$0xff]
    %v463 = vld [vmem:[%s364 + $0x310] sm:$0xff]
    %v464 = vld [vmem:[%s364 + $0x318] sm:$0xff]
    %v465 = vld [vmem:[%s364 + $0x320] sm:$0xff]
    %v466 = vld [vmem:[%s364 + $0x328] sm:$0xff]
    %v467 = vld [vmem:[%s364 + $0x330] sm:$0xff]
    %v468 = vld [vmem:[%s364 + $0x338] sm:$0xff]
    %v469 = vld [vmem:[%s364 + $0x340] sm:$0xff]
    %v470 = vld [vmem:[%s364 + $0x348] sm:$0xff]
    %v471 = vld [vmem:[%s364 + $0x350] sm:$0xff]
    %v472 = vld [vmem:[%s364 + $0x358] sm:$0xff]
    %v473 = vld [vmem:[%s364 + $0x360] sm:$0xff]
    %v474 = vld [vmem:[%s364 + $0x368] sm:$0xff]
    %v475 = vld [vmem:[%s364 + $0x370] sm:$0xff]
    %v476 = vld [vmem:[%s364 + $0x378] sm:$0xff]
    %v477 = vld [vmem:[%s364 + $0x380] sm:$0xff]
    %v478 = vld [vmem:[%s364 + $0x388] sm:$0xff]
    %v479 = vld [vmem:[%s364 + $0x390] sm:$0xff]
    %v480 = vld [vmem:[%s364 + $0x398] sm:$0xff]
    %v481 = vld [vmem:[%s364 + $0x3a0] sm:$0xff]
    %v482 = vld [vmem:[%s364 + $0x3a8] sm:$0xff]
    %v483 = vld [vmem:[%s364 + $0x3b0] sm:$0xff]
    %v484 = vld [vmem:[%s364 + $0x3b8] sm:$0xff]
    %v485 = vld [vmem:[%s364 + $0x3c0] sm:$0xff]
    %v486 = vld [vmem:[%s364 + $0x3c8] sm:$0xff]
    %v487 = vld [vmem:[%s364 + $0x3d0] sm:$0xff]
    %v488 = vld [vmem:[%s364 + $0x3d8] sm:$0xff]
    %v489 = vld [vmem:[%s364 + $0x3e0] sm:$0xff]
    %v490 = vld [vmem:[%s364 + $0x3e8] sm:$0xff]
    %v491 = vld [vmem:[%s364 + $0x3f0] sm:$0xff]
    %v492 = vld [vmem:[%s364 + $0x3f8] sm:$0xff]
    %v621 = vunpack.c.l.b16 %v365
    %v622 = vunpack.c.h.b16 %v365
    %v623 = vunpack.c.l.b16 %v366
    %v624 = vunpack.c.h.b16 %v366
    %v625 = vunpack.c.l.b16 %v367
    %v626 = vunpack.c.h.b16 %v367
    %v627 = vunpack.c.l.b16 %v368
    %v628 = vunpack.c.h.b16 %v368
    %v629 = vunpack.c.l.b16 %v369
    %v630 = vunpack.c.h.b16 %v369
    %v631 = vunpack.c.l.b16 %v370
    %v632 = vunpack.c.h.b16 %v370
    %v633 = vunpack.c.l.b16 %v371
    %v634 = vunpack.c.h.b16 %v371
    %v635 = vunpack.c.l.b16 %v372
    %v636 = vunpack.c.h.b16 %v372
    %v637 = vunpack.c.l.b16 %v373
    %v638 = vunpack.c.h.b16 %v373
    %v639 = vunpack.c.l.b16 %v374
    %v640 = vunpack.c.h.b16 %v374
    %v641 = vunpack.c.l.b16 %v375
    %v642 = vunpack.c.h.b16 %v375
    %v643 = vunpack.c.l.b16 %v376
    %v644 = vunpack.c.h.b16 %v376
    %v645 = vunpack.c.l.b16 %v377
    %v646 = vunpack.c.h.b16 %v377
    %v647 = vunpack.c.l.b16 %v378
    %v648 = vunpack.c.h.b16 %v378
    %v649 = vunpack.c.l.b16 %v379
    %v650 = vunpack.c.h.b16 %v379
    %v651 = vunpack.c.l.b16 %v380
    %v652 = vunpack.c.h.b16 %v380
    %v653 = vunpack.c.l.b16 %v381
    %v654 = vunpack.c.h.b16 %v381
    %v655 = vunpack.c.l.b16 %v382
    %v656 = vunpack.c.h.b16 %v382
    %v657 = vunpack.c.l.b16 %v383
    %v658 = vunpack.c.h.b16 %v383
    %v659 = vunpack.c.l.b16 %v384
    %v660 = vunpack.c.h.b16 %v384
    %v661 = vunpack.c.l.b16 %v385
    %v662 = vunpack.c.h.b16 %v385
    %v663 = vunpack.c.l.b16 %v386
    %v664 = vunpack.c.h.b16 %v386
    %v665 = vunpack.c.l.b16 %v387
    %v666 = vunpack.c.h.b16 %v387
    %v667 = vunpack.c.l.b16 %v388
    %v668 = vunpack.c.h.b16 %v388
    %v669 = vunpack.c.l.b16 %v389
    %v670 = vunpack.c.h.b16 %v389
    %v671 = vunpack.c.l.b16 %v390
    %v672 = vunpack.c.h.b16 %v390
    %v673 = vunpack.c.l.b16 %v391
    %v674 = vunpack.c.h.b16 %v391
    %v675 = vunpack.c.l.b16 %v392
    %v676 = vunpack.c.h.b16 %v392
    %v677 = vunpack.c.l.b16 %v393
    %v678 = vunpack.c.h.b16 %v393
    %v679 = vunpack.c.l.b16 %v394
    %v680 = vunpack.c.h.b16 %v394
    %v681 = vunpack.c.l.b16 %v395
    %v682 = vunpack.c.h.b16 %v395
    %v683 = vunpack.c.l.b16 %v396
    %v684 = vunpack.c.h.b16 %v396
    %v685 = vunpack.c.l.b16 %v397
    %v686 = vunpack.c.h.b16 %v397
    %v687 = vunpack.c.l.b16 %v398
    %v688 = vunpack.c.h.b16 %v398
    %v689 = vunpack.c.l.b16 %v399
    %v690 = vunpack.c.h.b16 %v399
    %v691 = vunpack.c.l.b16 %v400
    %v692 = vunpack.c.h.b16 %v400
    %v693 = vunpack.c.l.b16 %v401
    %v694 = vunpack.c.h.b16 %v401
    %v695 = vunpack.c.l.b16 %v402
    %v696 = vunpack.c.h.b16 %v402
    %v697 = vunpack.c.l.b16 %v403
    %v698 = vunpack.c.h.b16 %v403
    %v699 = vunpack.c.l.b16 %v404
    %v700 = vunpack.c.h.b16 %v404
    %v701 = vunpack.c.l.b16 %v405
    %v702 = vunpack.c.h.b16 %v405
    %v703 = vunpack.c.l.b16 %v406
    %v704 = vunpack.c.h.b16 %v406
    %v705 = vunpack.c.l.b16 %v407
    %v706 = vunpack.c.h.b16 %v407
    %v707 = vunpack.c.l.b16 %v408
    %v708 = vunpack.c.h.b16 %v408
    %v709 = vunpack.c.l.b16 %v409
    %v710 = vunpack.c.h.b16 %v409
    %v711 = vunpack.c.l.b16 %v410
    %v712 = vunpack.c.h.b16 %v410
    %v713 = vunpack.c.l.b16 %v411
    %v714 = vunpack.c.h.b16 %v411
    %v715 = vunpack.c.l.b16 %v412
    %v716 = vunpack.c.h.b16 %v412
    %v717 = vunpack.c.l.b16 %v413
    %v718 = vunpack.c.h.b16 %v413
    %v719 = vunpack.c.l.b16 %v414
    %v720 = vunpack.c.h.b16 %v414
    %v721 = vunpack.c.l.b16 %v415
    %v722 = vunpack.c.h.b16 %v415
    %v723 = vunpack.c.l.b16 %v416
    %v724 = vunpack.c.h.b16 %v416
    %v725 = vunpack.c.l.b16 %v417
    %v726 = vunpack.c.h.b16 %v417
    %v727 = vunpack.c.l.b16 %v418
    %v728 = vunpack.c.h.b16 %v418
    %v729 = vunpack.c.l.b16 %v419
    %v730 = vunpack.c.h.b16 %v419
    %v731 = vunpack.c.l.b16 %v420
    %v732 = vunpack.c.h.b16 %v420
    %v733 = vunpack.c.l.b16 %v421
    %v734 = vunpack.c.h.b16 %v421
    %v735 = vunpack.c.l.b16 %v422
    %v736 = vunpack.c.h.b16 %v422
    %v737 = vunpack.c.l.b16 %v423
    %v738 = vunpack.c.h.b16 %v423
    %v739 = vunpack.c.l.b16 %v424
    %v740 = vunpack.c.h.b16 %v424
    %v741 = vunpack.c.l.b16 %v425
    %v742 = vunpack.c.h.b16 %v425
    %v743 = vunpack.c.l.b16 %v426
    %v744 = vunpack.c.h.b16 %v426
    %v745 = vunpack.c.l.b16 %v427
    %v746 = vunpack.c.h.b16 %v427
    %v747 = vunpack.c.l.b16 %v428
    %v748 = vunpack.c.h.b16 %v428
    %v749 = vunpack.c.l.b16 %v429
    %v750 = vunpack.c.h.b16 %v429
    %v751 = vunpack.c.l.b16 %v430
    %v752 = vunpack.c.h.b16 %v430
    %v753 = vunpack.c.l.b16 %v431
    %v754 = vunpack.c.h.b16 %v431
    %v755 = vunpack.c.l.b16 %v432
    %v756 = vunpack.c.h.b16 %v432
    %v757 = vunpack.c.l.b16 %v433
    %v758 = vunpack.c.h.b16 %v433
    %v759 = vunpack.c.l.b16 %v434
    %v760 = vunpack.c.h.b16 %v434
    %v761 = vunpack.c.l.b16 %v435
    %v762 = vunpack.c.h.b16 %v435
    %v763 = vunpack.c.l.b16 %v436
    %v764 = vunpack.c.h.b16 %v436
    %v765 = vunpack.c.l.b16 %v437
    %v766 = vunpack.c.h.b16 %v437
    %v767 = vunpack.c.l.b16 %v438
    %v768 = vunpack.c.h.b16 %v438
    %v769 = vunpack.c.l.b16 %v439
    %v770 = vunpack.c.h.b16 %v439
    %v771 = vunpack.c.l.b16 %v440
    %v772 = vunpack.c.h.b16 %v440
    %v773 = vunpack.c.l.b16 %v441
    %v774 = vunpack.c.h.b16 %v441
    %v775 = vunpack.c.l.b16 %v442
    %v776 = vunpack.c.h.b16 %v442
    %v777 = vunpack.c.l.b16 %v443
    %v778 = vunpack.c.h.b16 %v443
    %v779 = vunpack.c.l.b16 %v444
    %v780 = vunpack.c.h.b16 %v444
    %v781 = vunpack.c.l.b16 %v445
    %v782 = vunpack.c.h.b16 %v445
    %v783 = vunpack.c.l.b16 %v446
    %v784 = vunpack.c.h.b16 %v446
    %v785 = vunpack.c.l.b16 %v447
    %v786 = vunpack.c.h.b16 %v447
    %v787 = vunpack.c.l.b16 %v448
    %v788 = vunpack.c.h.b16 %v448
    %v789 = vunpack.c.l.b16 %v449
    %v790 = vunpack.c.h.b16 %v449
    %v791 = vunpack.c.l.b16 %v450
    %v792 = vunpack.c.h.b16 %v450
    %v793 = vunpack.c.l.b16 %v451
    %v794 = vunpack.c.h.b16 %v451
    %v795 = vunpack.c.l.b16 %v452
    %v796 = vunpack.c.h.b16 %v452
    %v797 = vunpack.c.l.b16 %v453
    %v798 = vunpack.c.h.b16 %v453
    %v799 = vunpack.c.l.b16 %v454
    %v800 = vunpack.c.h.b16 %v454
    %v801 = vunpack.c.l.b16 %v455
    %v802 = vunpack.c.h.b16 %v455
    %v803 = vunpack.c.l.b16 %v456
    %v804 = vunpack.c.h.b16 %v456
    %v805 = vunpack.c.l.b16 %v457
    %v806 = vunpack.c.h.b16 %v457
    %v807 = vunpack.c.l.b16 %v458
    %v808 = vunpack.c.h.b16 %v458
    %v809 = vunpack.c.l.b16 %v459
    %v810 = vunpack.c.h.b16 %v459
    %v811 = vunpack.c.l.b16 %v460
    %v812 = vunpack.c.h.b16 %v460
    %v813 = vunpack.c.l.b16 %v461
    %v814 = vunpack.c.h.b16 %v461
    %v815 = vunpack.c.l.b16 %v462
    %v816 = vunpack.c.h.b16 %v462
    %v817 = vunpack.c.l.b16 %v463
    %v818 = vunpack.c.h.b16 %v463
    %v819 = vunpack.c.l.b16 %v464
    %v820 = vunpack.c.h.b16 %v464
    %v821 = vunpack.c.l.b16 %v465
    %v822 = vunpack.c.h.b16 %v465
    %v823 = vunpack.c.l.b16 %v466
    %v824 = vunpack.c.h.b16 %v466
    %v825 = vunpack.c.l.b16 %v467
    %v826 = vunpack.c.h.b16 %v467
    %v827 = vunpack.c.l.b16 %v468
    %v828 = vunpack.c.h.b16 %v468
    %v829 = vunpack.c.l.b16 %v469
    %v830 = vunpack.c.h.b16 %v469
    %v831 = vunpack.c.l.b16 %v470
    %v832 = vunpack.c.h.b16 %v470
    %v833 = vunpack.c.l.b16 %v471
    %v834 = vunpack.c.h.b16 %v471
    %v835 = vunpack.c.l.b16 %v472
    %v836 = vunpack.c.h.b16 %v472
    %v837 = vunpack.c.l.b16 %v473
    %v838 = vunpack.c.h.b16 %v473
    %v839 = vunpack.c.l.b16 %v474
    %v840 = vunpack.c.h.b16 %v474
    %v841 = vunpack.c.l.b16 %v475
    %v842 = vunpack.c.h.b16 %v475
    %v843 = vunpack.c.l.b16 %v476
    %v844 = vunpack.c.h.b16 %v476
    %v845 = vunpack.c.l.b16 %v477
    %v846 = vunpack.c.h.b16 %v477
    %v847 = vunpack.c.l.b16 %v478
    %v848 = vunpack.c.h.b16 %v478
    %v849 = vunpack.c.l.b16 %v479
    %v850 = vunpack.c.h.b16 %v479
    %v851 = vunpack.c.l.b16 %v480
    %v852 = vunpack.c.h.b16 %v480
    %v853 = vunpack.c.l.b16 %v481
    %v854 = vunpack.c.h.b16 %v481
    %v855 = vunpack.c.l.b16 %v482
    %v856 = vunpack.c.h.b16 %v482
    %v857 = vunpack.c.l.b16 %v483
    %v858 = vunpack.c.h.b16 %v483
    %v859 = vunpack.c.l.b16 %v484
    %v860 = vunpack.c.h.b16 %v484
    %v861 = vunpack.c.l.b16 %v485
    %v862 = vunpack.c.h.b16 %v485
    %v863 = vunpack.c.l.b16 %v486
    %v864 = vunpack.c.h.b16 %v486
    %v865 = vunpack.c.l.b16 %v487
    %v866 = vunpack.c.h.b16 %v487
    %v867 = vunpack.c.l.b16 %v488
    %v868 = vunpack.c.h.b16 %v488
    %v869 = vunpack.c.l.b16 %v489
    %v870 = vunpack.c.h.b16 %v489
    %v871 = vunpack.c.l.b16 %v490
    %v872 = vunpack.c.h.b16 %v490
    %v873 = vunpack.c.l.b16 %v491
    %v874 = vunpack.c.h.b16 %v491
    %v875 = vunpack.c.l.b16 %v492
    %v876 = vunpack.c.h.b16 %v492
    %v877 = vpack.c.b16 %v625, %v621
    %v878 = vpack.c.b16 %v626, %v622
    %v879 = vpack.c.b16 %v627, %v623
    %v880 = vpack.c.b16 %v628, %v624
    %v881 = vpack.c.b16 %v633, %v629
    %v882 = vpack.c.b16 %v634, %v630
    %v883 = vpack.c.b16 %v635, %v631
    %v884 = vpack.c.b16 %v636, %v632
    %v885 = vpack.c.b16 %v641, %v637
    %v886 = vpack.c.b16 %v642, %v638
    %v887 = vpack.c.b16 %v643, %v639
    %v888 = vpack.c.b16 %v644, %v640
    %v889 = vpack.c.b16 %v649, %v645
    %v890 = vpack.c.b16 %v650, %v646
    %v891 = vpack.c.b16 %v651, %v647
    %v892 = vpack.c.b16 %v652, %v648
    %v893 = vpack.c.b16 %v657, %v653
    %v894 = vpack.c.b16 %v658, %v654
    %v895 = vpack.c.b16 %v659, %v655
    %v896 = vpack.c.b16 %v660, %v656
    %v897 = vpack.c.b16 %v665, %v661
    %v898 = vpack.c.b16 %v666, %v662
    %v899 = vpack.c.b16 %v667, %v663
    %v900 = vpack.c.b16 %v668, %v664
    %v901 = vpack.c.b16 %v673, %v669
    %v902 = vpack.c.b16 %v674, %v670
    %v903 = vpack.c.b16 %v675, %v671
    %v904 = vpack.c.b16 %v676, %v672
    %v905 = vpack.c.b16 %v681, %v677
    %v906 = vpack.c.b16 %v682, %v678
    %v907 = vpack.c.b16 %v683, %v679
    %v908 = vpack.c.b16 %v684, %v680
    %v909 = vpack.c.b16 %v689, %v685
    %v910 = vpack.c.b16 %v690, %v686
    %v911 = vpack.c.b16 %v691, %v687
    %v912 = vpack.c.b16 %v692, %v688
    %v913 = vpack.c.b16 %v697, %v693
    %v914 = vpack.c.b16 %v698, %v694
    %v915 = vpack.c.b16 %v699, %v695
    %v916 = vpack.c.b16 %v700, %v696
    %v917 = vpack.c.b16 %v705, %v701
    %v918 = vpack.c.b16 %v706, %v702
    %v919 = vpack.c.b16 %v707, %v703
    %v920 = vpack.c.b16 %v708, %v704
    %v921 = vpack.c.b16 %v713, %v709
    %v922 = vpack.c.b16 %v714, %v710
    %v923 = vpack.c.b16 %v715, %v711
    %v924 = vpack.c.b16 %v716, %v712
    %v925 = vpack.c.b16 %v721, %v717
    %v926 = vpack.c.b16 %v722, %v718
    %v927 = vpack.c.b16 %v723, %v719
    %v928 = vpack.c.b16 %v724, %v720
    %v929 = vpack.c.b16 %v729, %v725
    %v930 = vpack.c.b16 %v730, %v726
    %v931 = vpack.c.b16 %v731, %v727
    %v932 = vpack.c.b16 %v732, %v728
    %v933 = vpack.c.b16 %v737, %v733
    %v934 = vpack.c.b16 %v738, %v734
    %v935 = vpack.c.b16 %v739, %v735
    %v936 = vpack.c.b16 %v740, %v736
    %v937 = vpack.c.b16 %v745, %v741
    %v938 = vpack.c.b16 %v746, %v742
    %v939 = vpack.c.b16 %v747, %v743
    %v940 = vpack.c.b16 %v748, %v744
    %v941 = vpack.c.b16 %v753, %v749
    %v942 = vpack.c.b16 %v754, %v750
    %v943 = vpack.c.b16 %v755, %v751
    %v944 = vpack.c.b16 %v756, %v752
    %v945 = vpack.c.b16 %v761, %v757
    %v946 = vpack.c.b16 %v762, %v758
    %v947 = vpack.c.b16 %v763, %v759
    %v948 = vpack.c.b16 %v764, %v760
    %v949 = vpack.c.b16 %v769, %v765
    %v950 = vpack.c.b16 %v770, %v766
    %v951 = vpack.c.b16 %v771, %v767
    %v952 = vpack.c.b16 %v772, %v768
    %v953 = vpack.c.b16 %v777, %v773
    %v954 = vpack.c.b16 %v778, %v774
    %v955 = vpack.c.b16 %v779, %v775
    %v956 = vpack.c.b16 %v780, %v776
    %v957 = vpack.c.b16 %v785, %v781
    %v958 = vpack.c.b16 %v786, %v782
    %v959 = vpack.c.b16 %v787, %v783
    %v960 = vpack.c.b16 %v788, %v784
    %v961 = vpack.c.b16 %v793, %v789
    %v962 = vpack.c.b16 %v794, %v790
    %v963 = vpack.c.b16 %v795, %v791
    %v964 = vpack.c.b16 %v796, %v792
    %v965 = vpack.c.b16 %v801, %v797
    %v966 = vpack.c.b16 %v802, %v798
    %v967 = vpack.c.b16 %v803, %v799
    %v968 = vpack.c.b16 %v804, %v800
    %v969 = vpack.c.b16 %v809, %v805
    %v970 = vpack.c.b16 %v810, %v806
    %v971 = vpack.c.b16 %v811, %v807
    %v972 = vpack.c.b16 %v812, %v808
    %v973 = vpack.c.b16 %v817, %v813
    %v974 = vpack.c.b16 %v818, %v814
    %v975 = vpack.c.b16 %v819, %v815
    %v976 = vpack.c.b16 %v820, %v816
    %v977 = vpack.c.b16 %v825, %v821
    %v978 = vpack.c.b16 %v826, %v822
    %v979 = vpack.c.b16 %v827, %v823
    %v980 = vpack.c.b16 %v828, %v824
    %v981 = vpack.c.b16 %v833, %v829
    %v982 = vpack.c.b16 %v834, %v830
    %v983 = vpack.c.b16 %v835, %v831
    %v984 = vpack.c.b16 %v836, %v832
    %v985 = vpack.c.b16 %v841, %v837
    %v986 = vpack.c.b16 %v842, %v838
    %v987 = vpack.c.b16 %v843, %v839
    %v988 = vpack.c.b16 %v844, %v840
    %v989 = vpack.c.b16 %v849, %v845
    %v990 = vpack.c.b16 %v850, %v846
    %v991 = vpack.c.b16 %v851, %v847
    %v992 = vpack.c.b16 %v852, %v848
    %v993 = vpack.c.b16 %v857, %v853
    %v994 = vpack.c.b16 %v858, %v854
    %v995 = vpack.c.b16 %v859, %v855
    %v996 = vpack.c.b16 %v860, %v856
    %v997 = vpack.c.b16 %v865, %v861
    %v998 = vpack.c.b16 %v866, %v862
    %v999 = vpack.c.b16 %v867, %v863
    %v1000 = vpack.c.b16 %v868, %v864
    %v1001 = vpack.c.b16 %v873, %v869
    %v1002 = vpack.c.b16 %v874, %v870
    %v1003 = vpack.c.b16 %v875, %v871
    %v1004 = vpack.c.b16 %v876, %v872
    %1133 = vmatprep.subr.bf16.mxu0 %v878
    %1134 = vmatpush1.bf16.msra.mxu0 %v877
    %1135 = vmatprep.subr.bf16.mxu0 %v882
    %1136 = vmatpush1.bf16.msra.mxu0 %v881
    %1137 = vmatprep.subr.bf16.mxu0 %v886
    %1138 = vmatpush1.bf16.msra.mxu0 %v885
    %1139 = vmatprep.subr.bf16.mxu0 %v890
    %1140 = vmatpush1.bf16.msra.mxu0 %v889
    %1141 = vmatprep.subr.bf16.mxu0 %v894
    %1142 = vmatpush1.bf16.msra.mxu0 %v893
    %1143 = vmatprep.subr.bf16.mxu0 %v898
    %1144 = vmatpush1.bf16.msra.mxu0 %v897
    %1145 = vmatprep.subr.bf16.mxu0 %v902
    %1146 = vmatpush1.bf16.msra.mxu0 %v901
    %1147 = vmatprep.subr.bf16.mxu0 %v906
    %1148 = vmatpush1.bf16.msra.mxu0 %v905
    %1149 = vmatprep.subr.bf16.mxu0 %v910
    %1150 = vmatpush1.bf16.msra.mxu0 %v909
    %1151 = vmatprep.subr.bf16.mxu0 %v914
    %1152 = vmatpush1.bf16.msra.mxu0 %v913
    %1153 = vmatprep.subr.bf16.mxu0 %v918
    %1154 = vmatpush1.bf16.msra.mxu0 %v917
    %1155 = vmatprep.subr.bf16.mxu0 %v922
    %1156 = vmatpush1.bf16.msra.mxu0 %v921
    %1157 = vmatprep.subr.bf16.mxu0 %v926
    %1158 = vmatpush1.bf16.msra.mxu0 %v925
    %1159 = vmatprep.subr.bf16.mxu0 %v930
    %1160 = vmatpush1.bf16.msra.mxu0 %v929
    %1161 = vmatprep.subr.bf16.mxu0 %v934
    %1162 = vmatpush1.bf16.msra.mxu0 %v933
    %1163 = vmatprep.subr.bf16.mxu0 %v938
    %1164 = vmatpush1.bf16.msra.mxu0 %v937
    %1165 = vmatprep.mubr.bf16.mxu0 %v283
    %1166 = vmatmul.mubr.bf16.gmra.mrb[0].mxu0 %v271
    %v1167 = vpop.f32.mrb[0].mxu0
    %v1168 = vadd.f32 0.0, %v1167
    %v1169 = vpop.f32.mrb[0].mxu0
    %v1170 = vadd.f32 0.0, %v1169
    %v1171 = vpop.f32.mrb[0].mxu0
    %v1172 = vadd.f32 0.0, %v1171
    %v1173 = vpop.f32.mrb[0].mxu0
    %v1174 = vadd.f32 0.0, %v1173
    %1175 = vmatprep.mubr.bf16.mxu0 %v331
    %1176 = vmatmul.mubr.bf16.gmra.mrb[0].mxu0 %v319
    %v1177 = vpop.f32.mrb[0].mxu0
    %v1178 = vadd.f32 0.0, %v1177
    %v1179 = vpop.f32.mrb[0].mxu0
    %v1180 = vadd.f32 0.0, %v1179
    %v1181 = vpop.f32.mrb[0].mxu0
    %v1182 = vadd.f32 0.0, %v1181
    %v1183 = vpop.f32.mrb[0].mxu0
    %v1184 = vadd.f32 0.0, %v1183
    %1185 = vdwg.mxu0
    %1186 = vmatprep.subr.bf16.mxu0 %v942
    %1187 = vmatpush1.bf16.msra.mxu0 %v941
    %1188 = vmatprep.subr.bf16.mxu0 %v946
    %1189 = vmatpush1.bf16.msra.mxu0 %v945
    %1190 = vmatprep.subr.bf16.mxu0 %v950
    %1191 = vmatpush1.bf16.msra.mxu0 %v949
    %1192 = vmatprep.subr.bf16.mxu0 %v954
    %1193 = vmatpush1.bf16.msra.mxu0 %v953
    %1194 = vmatprep.subr.bf16.mxu0 %v958
    %1195 = vmatpush1.bf16.msra.mxu0 %v957
    %1196 = vmatprep.subr.bf16.mxu0 %v962
    %1197 = vmatpush1.bf16.msra.mxu0 %v961
    %1198 = vmatprep.subr.bf16.mxu0 %v966
    %1199 = vmatpush1.bf16.msra.mxu0 %v965
    %1200 = vmatprep.subr.bf16.mxu0 %v970
    %1201 = vmatpush1.bf16.msra.mxu0 %v969
    %1202 = vmatprep.subr.bf16.mxu0 %v974
    %1203 = vmatpush1.bf16.msra.mxu0 %v973
    %1204 = vmatprep.subr.bf16.mxu0 %v978
    %1205 = vmatpush1.bf16.msra.mxu0 %v977
    %1206 = vmatprep.subr.bf16.mxu0 %v982
    %1207 = vmatpush1.bf16.msra.mxu0 %v981
    %1208 = vmatprep.subr.bf16.mxu0 %v986
    %1209 = vmatpush1.bf16.msra.mxu0 %v985
    %1210 = vmatprep.subr.bf16.mxu0 %v990
    %1211 = vmatpush1.bf16.msra.mxu0 %v989
    %1212 = vmatprep.subr.bf16.mxu0 %v994
    %1213 = vmatpush1.bf16.msra.mxu0 %v993
    %1214 = vmatprep.subr.bf16.mxu0 %v998
    %1215 = vmatpush1.bf16.msra.mxu0 %v997
    %1216 = vmatprep.subr.bf16.mxu0 %v1002
    %1217 = vmatpush1.bf16.msra.mxu0 %v1001
    %1218 = vmatprep.mubr.bf16.mxu0 %v307
    %1219 = vmatmul.mubr.bf16.gmra.mrb[0].mxu0 %v295
    %v1220 = vpop.f32.mrb[0].mxu0
    %v1221 = vadd.f32 %v1168, %v1220
    %v1222 = vpop.f32.mrb[0].mxu0
    %v1223 = vadd.f32 %v1170, %v1222
    %v1224 = vpop.f32.mrb[0].mxu0
    %v1225 = vadd.f32 %v1172, %v1224
    %v1226 = vpop.f32.mrb[0].mxu0
    %v1227 = vadd.f32 %v1174, %v1226
    %1228 = vmatprep.mubr.bf16.mxu0 %v355
    %1229 = vmatmul.mubr.bf16.gmra.mrb[0].mxu0 %v343
    %v1230 = vpop.f32.mrb[0].mxu0
    %v1231 = vadd.f32 %v1178, %v1230
    %v1232 = vpop.f32.mrb[0].mxu0
    %v1233 = vadd.f32 %v1180, %v1232
    %v1234 = vpop.f32.mrb[0].mxu0
    %v1235 = vadd.f32 %v1182, %v1234
    %v1236 = vpop.f32.mrb[0].mxu0
    %v1237 = vadd.f32 %v1184, %v1236
    %1238 = vdwg.mxu0
    %1239 = vmatprep.subr.bf16.mxu0 %v880
    %1240 = vmatpush1.bf16.msra.mxu0 %v879
    %1241 = vmatprep.subr.bf16.mxu0 %v884
    %1242 = vmatpush1.bf16.msra.mxu0 %v883
    %1243 = vmatprep.subr.bf16.mxu0 %v888
    %1244 = vmatpush1.bf16.msra.mxu0 %v887
    %1245 = vmatprep.subr.bf16.mxu0 %v892
    %1246 = vmatpush1.bf16.msra.mxu0 %v891
    %1247 = vmatprep.subr.bf16.mxu0 %v896
    %1248 = vmatpush1.bf16.msra.mxu0 %v895
    %1249 = vmatprep.subr.bf16.mxu0 %v900
    %1250 = vmatpush1.bf16.msra.mxu0 %v899
    %1251 = vmatprep.subr.bf16.mxu0 %v904
    %1252 = vmatpush1.bf16.msra.mxu0 %v903
    %1253 = vmatprep.subr.bf16.mxu0 %v908
    %1254 = vmatpush1.bf16.msra.mxu0 %v907
    %1255 = vmatprep.subr.bf16.mxu0 %v912
    %1256 = vmatpush1.bf16.msra.mxu0 %v911
    %1257 = vmatprep.subr.bf16.mxu0 %v916
    %1258 = vmatpush1.bf16.msra.mxu0 %v915
    %1259 = vmatprep.subr.bf16.mxu0 %v920
    %1260 = vmatpush1.bf16.msra.mxu0 %v919
    %1261 = vmatprep.subr.bf16.mxu0 %v924
    %1262 = vmatpush1.bf16.msra.mxu0 %v923
    %1263 = vmatprep.subr.bf16.mxu0 %v928
    %1264 = vmatpush1.bf16.msra.mxu0 %v927
    %1265 = vmatprep.subr.bf16.mxu0 %v932
    %1266 = vmatpush1.bf16.msra.mxu0 %v931
    %1267 = vmatprep.subr.bf16.mxu0 %v936
    %1268 = vmatpush1.bf16.msra.mxu0 %v935
    %1269 = vmatprep.subr.bf16.mxu0 %v940
    %1270 = vmatpush1.bf16.msra.mxu0 %v939
    %1271 = vmatprep.mubr.bf16.mxu0 %v283
    %1272 = vmatmul.mubr.bf16.gmra.mrb[0].mxu0 %v271
    %v1273 = vpop.f32.mrb[0].mxu0
    %v1274 = vadd.f32 0.0, %v1273
    %v1275 = vpop.f32.mrb[0].mxu0
    %v1276 = vadd.f32 0.0, %v1275
    %v1277 = vpop.f32.mrb[0].mxu0
    %v1278 = vadd.f32 0.0, %v1277
    %v1279 = vpop.f32.mrb[0].mxu0
    %v1280 = vadd.f32 0.0, %v1279
    %1281 = vmatprep.mubr.bf16.mxu0 %v331
    %1282 = vmatmul.mubr.bf16.gmra.mrb[0].mxu0 %v319
    %v1283 = vpop.f32.mrb[0].mxu0
    %v1284 = vadd.f32 0.0, %v1283
    %v1285 = vpop.f32.mrb[0].mxu0
    %v1286 = vadd.f32 0.0, %v1285
    %v1287 = vpop.f32.mrb[0].mxu0
    %v1288 = vadd.f32 0.0, %v1287
    %v1289 = vpop.f32.mrb[0].mxu0
    %v1290 = vadd.f32 0.0, %v1289
    %1291 = vdwg.mxu0
    %1292 = vmatprep.subr.bf16.mxu0 %v944
    %1293 = vmatpush1.bf16.msra.mxu0 %v943
    %1294 = vmatprep.subr.bf16.mxu0 %v948
    %1295 = vmatpush1.bf16.msra.mxu0 %v947
    %1296 = vmatprep.subr.bf16.mxu0 %v952
    %1297 = vmatpush1.bf16.msra.mxu0 %v951
    %1298 = vmatprep.subr.bf16.mxu0 %v956
    %1299 = vmatpush1.bf16.msra.mxu0 %v955
    %1300 = vmatprep.subr.bf16.mxu0 %v960
    %1301 = vmatpush1.bf16.msra.mxu0 %v959
    %1302 = vmatprep.subr.bf16.mxu0 %v964
    %1303 = vmatpush1.bf16.msra.mxu0 %v963
    %1304 = vmatprep.subr.bf16.mxu0 %v968
    %1305 = vmatpush1.bf16.msra.mxu0 %v967
    %1306 = vmatprep.subr.bf16.mxu0 %v972
    %1307 = vmatpush1.bf16.msra.mxu0 %v971
    %1308 = vmatprep.subr.bf16.mxu0 %v976
    %1309 = vmatpush1.bf16.msra.mxu0 %v975
    %1310 = vmatprep.subr.bf16.mxu0 %v980
    %1311 = vmatpush1.bf16.msra.mxu0 %v979
    %1312 = vmatprep.subr.bf16.mxu0 %v984
    %1313 = vmatpush1.bf16.msra.mxu0 %v983
    %1314 = vmatprep.subr.bf16.mxu0 %v988
    %1315 = vmatpush1.bf16.msra.mxu0 %v987
    %1316 = vmatprep.subr.bf16.mxu0 %v992
    %1317 = vmatpush1.bf16.msra.mxu0 %v991
    %1318 = vmatprep.subr.bf16.mxu0 %v996
    %1319 = vmatpush1.bf16.msra.mxu0 %v995
    %1320 = vmatprep.subr.bf16.mxu0 %v1000
    %1321 = vmatpush1.bf16.msra.mxu0 %v999
    %1322 = vmatprep.subr.bf16.mxu0 %v1004
    %1323 = vmatpush1.bf16.msra.mxu0 %v1003
    %1324 = vmatprep.mubr.bf16.mxu0 %v307
    %1325 = vmatmul.mubr.bf16.gmra.mrb[0].mxu0 %v295
    %v1326 = vpop.f32.mrb[0].mxu0
    %v1327 = vadd.f32 %v1274, %v1326
    %v1328 = vpop.f32.mrb[0].mxu0
    %v1329 = vadd.f32 %v1276, %v1328
    %v1330 = vpop.f32.mrb[0].mxu0
    %v1331 = vadd.f32 %v1278, %v1330
    %v1332 = vpop.f32.mrb[0].mxu0
    %v1333 = vadd.f32 %v1280, %v1332
    %1334 = vmatprep.mubr.bf16.mxu0 %v355
    %1335 = vmatmul.mubr.bf16.gmra.mrb[0].mxu0 %v343
    %v1336 = vpop.f32.mrb[0].mxu0
    %v1337 = vadd.f32 %v1284, %v1336
    %v1338 = vpop.f32.mrb[0].mxu0
    %v1339 = vadd.f32 %v1286, %v1338
    %v1340 = vpop.f32.mrb[0].mxu0
    %v1341 = vadd.f32 %v1288, %v1340
    %v1342 = vpop.f32.mrb[0].mxu0
    %v1343 = vadd.f32 %v1290, %v1342
    %1344 = vdwg.mxu0
    %v1473 = vunpack.c.l.b16 %v99
    %v1474 = vunpack.c.h.b16 %v99
    %v1475 = vunpack.c.l.b16 %v100
    %v1476 = vunpack.c.h.b16 %v100
    %v1477 = vunpack.c.l.b16 %v101
    %v1478 = vunpack.c.h.b16 %v101
    %v1479 = vunpack.c.l.b16 %v102
    %v1480 = vunpack.c.h.b16 %v102
    %v1481 = vunpack.c.l.b16 %v103
    %v1482 = vunpack.c.h.b16 %v103
    %v1483 = vunpack.c.l.b16 %v104
    %v1484 = vunpack.c.h.b16 %v104
    %v1485 = vunpack.c.l.b16 %v105
    %v1486 = vunpack.c.h.b16 %v105
    %v1487 = vunpack.c.l.b16 %v106
    %v1488 = vunpack.c.h.b16 %v106
    %v1489 = vunpack.c.l.b16 %v107
    %v1490 = vunpack.c.h.b16 %v107
    %v1491 = vunpack.c.l.b16 %v108
    %v1492 = vunpack.c.h.b16 %v108
    %v1493 = vunpack.c.l.b16 %v109
    %v1494 = vunpack.c.h.b16 %v109
    %v1495 = vunpack.c.l.b16 %v110
    %v1496 = vunpack.c.h.b16 %v110
    %v1497 = vunpack.c.l.b16 %v111
    %v1498 = vunpack.c.h.b16 %v111
    %v1499 = vunpack.c.l.b16 %v112
    %v1500 = vunpack.c.h.b16 %v112
    %v1501 = vunpack.c.l.b16 %v113
    %v1502 = vunpack.c.h.b16 %v113
    %v1503 = vunpack.c.l.b16 %v114
    %v1504 = vunpack.c.h.b16 %v114
    %v1505 = vunpack.c.l.b16 %v115
    %v1506 = vunpack.c.h.b16 %v115
    %v1507 = vunpack.c.l.b16 %v116
    %v1508 = vunpack.c.h.b16 %v116
    %v1509 = vunpack.c.l.b16 %v117
    %v1510 = vunpack.c.h.b16 %v117
    %v1511 = vunpack.c.l.b16 %v118
    %v1512 = vunpack.c.h.b16 %v118
    %v1513 = vunpack.c.l.b16 %v119
    %v1514 = vunpack.c.h.b16 %v119
    %v1515 = vunpack.c.l.b16 %v120
    %v1516 = vunpack.c.h.b16 %v120
    %v1517 = vunpack.c.l.b16 %v121
    %v1518 = vunpack.c.h.b16 %v121
    %v1519 = vunpack.c.l.b16 %v122
    %v1520 = vunpack.c.h.b16 %v122
    %v1521 = vunpack.c.l.b16 %v123
    %v1522 = vunpack.c.h.b16 %v123
    %v1523 = vunpack.c.l.b16 %v124
    %v1524 = vunpack.c.h.b16 %v124
    %v1525 = vunpack.c.l.b16 %v125
    %v1526 = vunpack.c.h.b16 %v125
    %v1527 = vunpack.c.l.b16 %v126
    %v1528 = vunpack.c.h.b16 %v126
    %v1529 = vunpack.c.l.b16 %v127
    %v1530 = vunpack.c.h.b16 %v127
    %v1531 = vunpack.c.l.b16 %v128
    %v1532 = vunpack.c.h.b16 %v128
    %v1533 = vunpack.c.l.b16 %v129
    %v1534 = vunpack.c.h.b16 %v129
    %v1535 = vunpack.c.l.b16 %v130
    %v1536 = vunpack.c.h.b16 %v130
    %v1537 = vunpack.c.l.b16 %v131
    %v1538 = vunpack.c.h.b16 %v131
    %v1539 = vunpack.c.l.b16 %v132
    %v1540 = vunpack.c.h.b16 %v132
    %v1541 = vunpack.c.l.b16 %v133
    %v1542 = vunpack.c.h.b16 %v133
    %v1543 = vunpack.c.l.b16 %v134
    %v1544 = vunpack.c.h.b16 %v134
    %v1545 = vunpack.c.l.b16 %v135
    %v1546 = vunpack.c.h.b16 %v135
    %v1547 = vunpack.c.l.b16 %v136
    %v1548 = vunpack.c.h.b16 %v136
    %v1549 = vunpack.c.l.b16 %v137
    %v1550 = vunpack.c.h.b16 %v137
    %v1551 = vunpack.c.l.b16 %v138
    %v1552 = vunpack.c.h.b16 %v138
    %v1553 = vunpack.c.l.b16 %v139
    %v1554 = vunpack.c.h.b16 %v139
    %v1555 = vunpack.c.l.b16 %v140
    %v1556 = vunpack.c.h.b16 %v140
    %v1557 = vunpack.c.l.b16 %v141
    %v1558 = vunpack.c.h.b16 %v141
    %v1559 = vunpack.c.l.b16 %v142
    %v1560 = vunpack.c.h.b16 %v142
    %v1561 = vunpack.c.l.b16 %v143
    %v1562 = vunpack.c.h.b16 %v143
    %v1563 = vunpack.c.l.b16 %v144
    %v1564 = vunpack.c.h.b16 %v144
    %v1565 = vunpack.c.l.b16 %v145
    %v1566 = vunpack.c.h.b16 %v145
    %v1567 = vunpack.c.l.b16 %v146
    %v1568 = vunpack.c.h.b16 %v146
    %v1569 = vunpack.c.l.b16 %v147
    %v1570 = vunpack.c.h.b16 %v147
    %v1571 = vunpack.c.l.b16 %v148
    %v1572 = vunpack.c.h.b16 %v148
    %v1573 = vunpack.c.l.b16 %v149
    %v1574 = vunpack.c.h.b16 %v149
    %v1575 = vunpack.c.l.b16 %v150
    %v1576 = vunpack.c.h.b16 %v150
    %v1577 = vunpack.c.l.b16 %v151
    %v1578 = vunpack.c.h.b16 %v151
    %v1579 = vunpack.c.l.b16 %v152
    %v1580 = vunpack.c.h.b16 %v152
    %v1581 = vunpack.c.l.b16 %v153
    %v1582 = vunpack.c.h.b16 %v153
    %v1583 = vunpack.c.l.b16 %v154
    %v1584 = vunpack.c.h.b16 %v154
    %v1585 = vunpack.c.l.b16 %v155
    %v1586 = vunpack.c.h.b16 %v155
    %v1587 = vunpack.c.l.b16 %v156
    %v1588 = vunpack.c.h.b16 %v156
    %v1589 = vunpack.c.l.b16 %v157
    %v1590 = vunpack.c.h.b16 %v157
    %v1591 = vunpack.c.l.b16 %v158
    %v1592 = vunpack.c.h.b16 %v158
    %v1593 = vunpack.c.l.b16 %v159
    %v1594 = vunpack.c.h.b16 %v159
    %v1595 = vunpack.c.l.b16 %v160
    %v1596 = vunpack.c.h.b16 %v160
    %v1597 = vunpack.c.l.b16 %v161
    %v1598 = vunpack.c.h.b16 %v161
    %v1599 = vunpack.c.l.b16 %v162
    %v1600 = vunpack.c.h.b16 %v162
    %v1601 = vunpack.c.l.b16 %v163
    %v1602 = vunpack.c.h.b16 %v163
    %v1603 = vunpack.c.l.b16 %v164
    %v1604 = vunpack.c.h.b16 %v164
    %v1605 = vunpack.c.l.b16 %v165
    %v1606 = vunpack.c.h.b16 %v165
    %v1607 = vunpack.c.l.b16 %v166
    %v1608 = vunpack.c.h.b16 %v166
    %v1609 = vunpack.c.l.b16 %v167
    %v1610 = vunpack.c.h.b16 %v167
    %v1611 = vunpack.c.l.b16 %v168
    %v1612 = vunpack.c.h.b16 %v168
    %v1613 = vunpack.c.l.b16 %v169
    %v1614 = vunpack.c.h.b16 %v169
    %v1615 = vunpack.c.l.b16 %v170
    %v1616 = vunpack.c.h.b16 %v170
    %v1617 = vunpack.c.l.b16 %v171
    %v1618 = vunpack.c.h.b16 %v171
    %v1619 = vunpack.c.l.b16 %v172
    %v1620 = vunpack.c.h.b16 %v172
    %v1621 = vunpack.c.l.b16 %v173
    %v1622 = vunpack.c.h.b16 %v173
    %v1623 = vunpack.c.l.b16 %v174
    %v1624 = vunpack.c.h.b16 %v174
    %v1625 = vunpack.c.l.b16 %v175
    %v1626 = vunpack.c.h.b16 %v175
    %v1627 = vunpack.c.l.b16 %v176
    %v1628 = vunpack.c.h.b16 %v176
    %v1629 = vunpack.c.l.b16 %v177
    %v1630 = vunpack.c.h.b16 %v177
    %v1631 = vunpack.c.l.b16 %v178
    %v1632 = vunpack.c.h.b16 %v178
    %v1633 = vunpack.c.l.b16 %v179
    %v1634 = vunpack.c.h.b16 %v179
    %v1635 = vunpack.c.l.b16 %v180
    %v1636 = vunpack.c.h.b16 %v180
    %v1637 = vunpack.c.l.b16 %v181
    %v1638 = vunpack.c.h.b16 %v181
    %v1639 = vunpack.c.l.b16 %v182
    %v1640 = vunpack.c.h.b16 %v182
    %v1641 = vunpack.c.l.b16 %v183
    %v1642 = vunpack.c.h.b16 %v183
    %v1643 = vunpack.c.l.b16 %v184
    %v1644 = vunpack.c.h.b16 %v184
    %v1645 = vunpack.c.l.b16 %v185
    %v1646 = vunpack.c.h.b16 %v185
    %v1647 = vunpack.c.l.b16 %v186
    %v1648 = vunpack.c.h.b16 %v186
    %v1649 = vunpack.c.l.b16 %v187
    %v1650 = vunpack.c.h.b16 %v187
    %v1651 = vunpack.c.l.b16 %v188
    %v1652 = vunpack.c.h.b16 %v188
    %v1653 = vunpack.c.l.b16 %v189
    %v1654 = vunpack.c.h.b16 %v189
    %v1655 = vunpack.c.l.b16 %v190
    %v1656 = vunpack.c.h.b16 %v190
    %v1657 = vunpack.c.l.b16 %v191
    %v1658 = vunpack.c.h.b16 %v191
    %v1659 = vunpack.c.l.b16 %v192
    %v1660 = vunpack.c.h.b16 %v192
    %v1661 = vunpack.c.l.b16 %v193
    %v1662 = vunpack.c.h.b16 %v193
    %v1663 = vunpack.c.l.b16 %v194
    %v1664 = vunpack.c.h.b16 %v194
    %v1665 = vunpack.c.l.b16 %v195
    %v1666 = vunpack.c.h.b16 %v195
    %v1667 = vunpack.c.l.b16 %v196
    %v1668 = vunpack.c.h.b16 %v196
    %v1669 = vunpack.c.l.b16 %v197
    %v1670 = vunpack.c.h.b16 %v197
    %v1671 = vunpack.c.l.b16 %v198
    %v1672 = vunpack.c.h.b16 %v198
    %v1673 = vunpack.c.l.b16 %v199
    %v1674 = vunpack.c.h.b16 %v199
    %v1675 = vunpack.c.l.b16 %v200
    %v1676 = vunpack.c.h.b16 %v200
    %v1677 = vunpack.c.l.b16 %v201
    %v1678 = vunpack.c.h.b16 %v201
    %v1679 = vunpack.c.l.b16 %v202
    %v1680 = vunpack.c.h.b16 %v202
    %v1681 = vunpack.c.l.b16 %v203
    %v1682 = vunpack.c.h.b16 %v203
    %v1683 = vunpack.c.l.b16 %v204
    %v1684 = vunpack.c.h.b16 %v204
    %v1685 = vunpack.c.l.b16 %v205
    %v1686 = vunpack.c.h.b16 %v205
    %v1687 = vunpack.c.l.b16 %v206
    %v1688 = vunpack.c.h.b16 %v206
    %v1689 = vunpack.c.l.b16 %v207
    %v1690 = vunpack.c.h.b16 %v207
    %v1691 = vunpack.c.l.b16 %v208
    %v1692 = vunpack.c.h.b16 %v208
    %v1693 = vunpack.c.l.b16 %v209
    %v1694 = vunpack.c.h.b16 %v209
    %v1695 = vunpack.c.l.b16 %v210
    %v1696 = vunpack.c.h.b16 %v210
    %v1697 = vunpack.c.l.b16 %v211
    %v1698 = vunpack.c.h.b16 %v211
    %v1699 = vunpack.c.l.b16 %v212
    %v1700 = vunpack.c.h.b16 %v212
    %v1701 = vunpack.c.l.b16 %v213
    %v1702 = vunpack.c.h.b16 %v213
    %v1703 = vunpack.c.l.b16 %v214
    %v1704 = vunpack.c.h.b16 %v214
    %v1705 = vunpack.c.l.b16 %v215
    %v1706 = vunpack.c.h.b16 %v215
    %v1707 = vunpack.c.l.b16 %v216
    %v1708 = vunpack.c.h.b16 %v216
    %v1709 = vunpack.c.l.b16 %v217
    %v1710 = vunpack.c.h.b16 %v217
    %v1711 = vunpack.c.l.b16 %v218
    %v1712 = vunpack.c.h.b16 %v218
    %v1713 = vunpack.c.l.b16 %v219
    %v1714 = vunpack.c.h.b16 %v219
    %v1715 = vunpack.c.l.b16 %v220
    %v1716 = vunpack.c.h.b16 %v220
    %v1717 = vunpack.c.l.b16 %v221
    %v1718 = vunpack.c.h.b16 %v221
    %v1719 = vunpack.c.l.b16 %v222
    %v1720 = vunpack.c.h.b16 %v222
    %v1721 = vunpack.c.l.b16 %v223
    %v1722 = vunpack.c.h.b16 %v223
    %v1723 = vunpack.c.l.b16 %v224
    %v1724 = vunpack.c.h.b16 %v224
    %v1725 = vunpack.c.l.b16 %v225
    %v1726 = vunpack.c.h.b16 %v225
    %v1727 = vunpack.c.l.b16 %v226
    %v1728 = vunpack.c.h.b16 %v226
    %v1729 = vpack.c.b16 %v1477, %v1473
    %v1730 = vpack.c.b16 %v1478, %v1474
    %v1731 = vpack.c.b16 %v1479, %v1475
    %v1732 = vpack.c.b16 %v1480, %v1476
    %v1733 = vpack.c.b16 %v1485, %v1481
    %v1734 = vpack.c.b16 %v1486, %v1482
    %v1735 = vpack.c.b16 %v1487, %v1483
    %v1736 = vpack.c.b16 %v1488, %v1484
    %v1737 = vpack.c.b16 %v1493, %v1489
    %v1738 = vpack.c.b16 %v1494, %v1490
    %v1739 = vpack.c.b16 %v1495, %v1491
    %v1740 = vpack.c.b16 %v1496, %v1492
    %v1741 = vpack.c.b16 %v1501, %v1497
    %v1742 = vpack.c.b16 %v1502, %v1498
    %v1743 = vpack.c.b16 %v1503, %v1499
    %v1744 = vpack.c.b16 %v1504, %v1500
    %v1745 = vpack.c.b16 %v1509, %v1505
    %v1746 = vpack.c.b16 %v1510, %v1506
    %v1747 = vpack.c.b16 %v1511, %v1507
    %v1748 = vpack.c.b16 %v1512, %v1508
    %v1749 = vpack.c.b16 %v1517, %v1513
    %v1750 = vpack.c.b16 %v1518, %v1514
    %v1751 = vpack.c.b16 %v1519, %v1515
    %v1752 = vpack.c.b16 %v1520, %v1516
    %v1753 = vpack.c.b16 %v1525, %v1521
    %v1754 = vpack.c.b16 %v1526, %v1522
    %v1755 = vpack.c.b16 %v1527, %v1523
    %v1756 = vpack.c.b16 %v1528, %v1524
    %v1757 = vpack.c.b16 %v1533, %v1529
    %v1758 = vpack.c.b16 %v1534, %v1530
    %v1759 = vpack.c.b16 %v1535, %v1531
    %v1760 = vpack.c.b16 %v1536, %v1532
    %v1761 = vpack.c.b16 %v1541, %v1537
    %v1762 = vpack.c.b16 %v1542, %v1538
    %v1763 = vpack.c.b16 %v1543, %v1539
    %v1764 = vpack.c.b16 %v1544, %v1540
    %v1765 = vpack.c.b16 %v1549, %v1545
    %v1766 = vpack.c.b16 %v1550, %v1546
    %v1767 = vpack.c.b16 %v1551, %v1547
    %v1768 = vpack.c.b16 %v1552, %v1548
    %v1769 = vpack.c.b16 %v1557, %v1553
    %v1770 = vpack.c.b16 %v1558, %v1554
    %v1771 = vpack.c.b16 %v1559, %v1555
    %v1772 = vpack.c.b16 %v1560, %v1556
    %v1773 = vpack.c.b16 %v1565, %v1561
    %v1774 = vpack.c.b16 %v1566, %v1562
    %v1775 = vpack.c.b16 %v1567, %v1563
    %v1776 = vpack.c.b16 %v1568, %v1564
    %v1777 = vpack.c.b16 %v1573, %v1569
    %v1778 = vpack.c.b16 %v1574, %v1570
    %v1779 = vpack.c.b16 %v1575, %v1571
    %v1780 = vpack.c.b16 %v1576, %v1572
    %v1781 = vpack.c.b16 %v1581, %v1577
    %v1782 = vpack.c.b16 %v1582, %v1578
    %v1783 = vpack.c.b16 %v1583, %v1579
    %v1784 = vpack.c.b16 %v1584, %v1580
    %v1785 = vpack.c.b16 %v1589, %v1585
    %v1786 = vpack.c.b16 %v1590, %v1586
    %v1787 = vpack.c.b16 %v1591, %v1587
    %v1788 = vpack.c.b16 %v1592, %v1588
    %v1789 = vpack.c.b16 %v1597, %v1593
    %v1790 = vpack.c.b16 %v1598, %v1594
    %v1791 = vpack.c.b16 %v1599, %v1595
    %v1792 = vpack.c.b16 %v1600, %v1596
    %v1793 = vpack.c.b16 %v1605, %v1601
    %v1794 = vpack.c.b16 %v1606, %v1602
    %v1795 = vpack.c.b16 %v1607, %v1603
    %v1796 = vpack.c.b16 %v1608, %v1604
    %v1797 = vpack.c.b16 %v1613, %v1609
    %v1798 = vpack.c.b16 %v1614, %v1610
    %v1799 = vpack.c.b16 %v1615, %v1611
    %v1800 = vpack.c.b16 %v1616, %v1612
    %v1801 = vpack.c.b16 %v1621, %v1617
    %v1802 = vpack.c.b16 %v1622, %v1618
    %v1803 = vpack.c.b16 %v1623, %v1619
    %v1804 = vpack.c.b16 %v1624, %v1620
    %v1805 = vpack.c.b16 %v1629, %v1625
    %v1806 = vpack.c.b16 %v1630, %v1626
    %v1807 = vpack.c.b16 %v1631, %v1627
    %v1808 = vpack.c.b16 %v1632, %v1628
    %v1809 = vpack.c.b16 %v1637, %v1633
    %v1810 = vpack.c.b16 %v1638, %v1634
    %v1811 = vpack.c.b16 %v1639, %v1635
    %v1812 = vpack.c.b16 %v1640, %v1636
    %v1813 = vpack.c.b16 %v1645, %v1641
    %v1814 = vpack.c.b16 %v1646, %v1642
    %v1815 = vpack.c.b16 %v1647, %v1643
    %v1816 = vpack.c.b16 %v1648, %v1644
    %v1817 = vpack.c.b16 %v1653, %v1649
    %v1818 = vpack.c.b16 %v1654, %v1650
    %v1819 = vpack.c.b16 %v1655, %v1651
    %v1820 = vpack.c.b16 %v1656, %v1652
    %v1821 = vpack.c.b16 %v1661, %v1657
    %v1822 = vpack.c.b16 %v1662, %v1658
    %v1823 = vpack.c.b16 %v1663, %v1659
    %v1824 = vpack.c.b16 %v1664, %v1660
    %v1825 = vpack.c.b16 %v1669, %v1665
    %v1826 = vpack.c.b16 %v1670, %v1666
    %v1827 = vpack.c.b16 %v1671, %v1667
    %v1828 = vpack.c.b16 %v1672, %v1668
    %v1829 = vpack.c.b16 %v1677, %v1673
    %v1830 = vpack.c.b16 %v1678, %v1674
    %v1831 = vpack.c.b16 %v1679, %v1675
    %v1832 = vpack.c.b16 %v1680, %v1676
    %v1833 = vpack.c.b16 %v1685, %v1681
    %v1834 = vpack.c.b16 %v1686, %v1682
    %v1835 = vpack.c.b16 %v1687, %v1683
    %v1836 = vpack.c.b16 %v1688, %v1684
    %v1837 = vpack.c.b16 %v1693, %v1689
    %v1838 = vpack.c.b16 %v1694, %v1690
    %v1839 = vpack.c.b16 %v1695, %v1691
    %v1840 = vpack.c.b16 %v1696, %v1692
    %v1841 = vpack.c.b16 %v1701, %v1697
    %v1842 = vpack.c.b16 %v1702, %v1698
    %v1843 = vpack.c.b16 %v1703, %v1699
    %v1844 = vpack.c.b16 %v1704, %v1700
    %v1845 = vpack.c.b16 %v1709, %v1705
    %v1846 = vpack.c.b16 %v1710, %v1706
    %v1847 = vpack.c.b16 %v1711, %v1707
    %v1848 = vpack.c.b16 %v1712, %v1708
    %v1849 = vpack.c.b16 %v1717, %v1713
    %v1850 = vpack.c.b16 %v1718, %v1714
    %v1851 = vpack.c.b16 %v1719, %v1715
    %v1852 = vpack.c.b16 %v1720, %v1716
    %v1853 = vpack.c.b16 %v1725, %v1721
    %v1854 = vpack.c.b16 %v1726, %v1722
    %v1855 = vpack.c.b16 %v1727, %v1723
    %v1856 = vpack.c.b16 %v1728, %v1724
    %1985 = vmatprep.subr.bf16.mxu0 %v1730
    %1986 = vmatpush1.bf16.msra.mxu0 %v1729
    %1987 = vmatprep.subr.bf16.mxu0 %v1734
    %1988 = vmatpush1.bf16.msra.mxu0 %v1733
    %1989 = vmatprep.subr.bf16.mxu0 %v1738
    %1990 = vmatpush1.bf16.msra.mxu0 %v1737
    %1991 = vmatprep.subr.bf16.mxu0 %v1742
    %1992 = vmatpush1.bf16.msra.mxu0 %v1741
    %1993 = vmatprep.subr.bf16.mxu0 %v1746
    %1994 = vmatpush1.bf16.msra.mxu0 %v1745
    %1995 = vmatprep.subr.bf16.mxu0 %v1750
    %1996 = vmatpush1.bf16.msra.mxu0 %v1749
    %1997 = vmatprep.subr.bf16.mxu0 %v1754
    %1998 = vmatpush1.bf16.msra.mxu0 %v1753
    %1999 = vmatprep.subr.bf16.mxu0 %v1758
    %2000 = vmatpush1.bf16.msra.mxu0 %v1757
    %2001 = vmatprep.subr.bf16.mxu0 %v1762
    %2002 = vmatpush1.bf16.msra.mxu0 %v1761
    %2003 = vmatprep.subr.bf16.mxu0 %v1766
    %2004 = vmatpush1.bf16.msra.mxu0 %v1765
    %2005 = vmatprep.subr.bf16.mxu0 %v1770
    %2006 = vmatpush1.bf16.msra.mxu0 %v1769
    %2007 = vmatprep.subr.bf16.mxu0 %v1774
    %2008 = vmatpush1.bf16.msra.mxu0 %v1773
    %2009 = vmatprep.subr.bf16.mxu0 %v1778
    %2010 = vmatpush1.bf16.msra.mxu0 %v1777
    %2011 = vmatprep.subr.bf16.mxu0 %v1782
    %2012 = vmatpush1.bf16.msra.mxu0 %v1781
    %2013 = vmatprep.subr.bf16.mxu0 %v1786
    %2014 = vmatpush1.bf16.msra.mxu0 %v1785
    %2015 = vmatprep.subr.bf16.mxu0 %v1790
    %2016 = vmatpush1.bf16.msra.mxu0 %v1789
    %2017 = vmatprep.mubr.bf16.mxu0 %v92
    %2018 = vmatmul.mubr.bf16.gmra.mrb[0].mxu0 %v91
    %v2019 = vpop.f32.mrb[0].mxu0
    %v2020 = vadd.f32 %v1221, %v2019
    %v2021 = vpop.f32.mrb[0].mxu0
    %v2022 = vadd.f32 %v1223, %v2021
    %v2023 = vpop.f32.mrb[0].mxu0
    %v2024 = vadd.f32 %v1225, %v2023
    %v2025 = vpop.f32.mrb[0].mxu0
    %v2026 = vadd.f32 %v1227, %v2025
    %2027 = vmatprep.mubr.bf16.mxu0 %v96
    %2028 = vmatmul.mubr.bf16.gmra.mrb[0].mxu0 %v95
    %v2029 = vpop.f32.mrb[0].mxu0
    %v2030 = vadd.f32 %v1231, %v2029
    %v2031 = vpop.f32.mrb[0].mxu0
    %v2032 = vadd.f32 %v1233, %v2031
    %v2033 = vpop.f32.mrb[0].mxu0
    %v2034 = vadd.f32 %v1235, %v2033
    %v2035 = vpop.f32.mrb[0].mxu0
    %v2036 = vadd.f32 %v1237, %v2035
    %2037 = vdwg.mxu0
    %2038 = vmatprep.subr.bf16.mxu0 %v1794
    %2039 = vmatpush1.bf16.msra.mxu0 %v1793
    %2040 = vmatprep.subr.bf16.mxu0 %v1798
    %2041 = vmatpush1.bf16.msra.mxu0 %v1797
    %2042 = vmatprep.subr.bf16.mxu0 %v1802
    %2043 = vmatpush1.bf16.msra.mxu0 %v1801
    %2044 = vmatprep.subr.bf16.mxu0 %v1806
    %2045 = vmatpush1.bf16.msra.mxu0 %v1805
    %2046 = vmatprep.subr.bf16.mxu0 %v1810
    %2047 = vmatpush1.bf16.msra.mxu0 %v1809
    %2048 = vmatprep.subr.bf16.mxu0 %v1814
    %2049 = vmatpush1.bf16.msra.mxu0 %v1813
    %2050 = vmatprep.subr.bf16.mxu0 %v1818
    %2051 = vmatpush1.bf16.msra.mxu0 %v1817
    %2052 = vmatprep.subr.bf16.mxu0 %v1822
    %2053 = vmatpush1.bf16.msra.mxu0 %v1821
    %2054 = vmatprep.subr.bf16.mxu0 %v1826
    %2055 = vmatpush1.bf16.msra.mxu0 %v1825
    %2056 = vmatprep.subr.bf16.mxu0 %v1830
    %2057 = vmatpush1.bf16.msra.mxu0 %v1829
    %2058 = vmatprep.subr.bf16.mxu0 %v1834
    %2059 = vmatpush1.bf16.msra.mxu0 %v1833
    %2060 = vmatprep.subr.bf16.mxu0 %v1838
    %2061 = vmatpush1.bf16.msra.mxu0 %v1837
    %2062 = vmatprep.subr.bf16.mxu0 %v1842
    %2063 = vmatpush1.bf16.msra.mxu0 %v1841
    %2064 = vmatprep.subr.bf16.mxu0 %v1846
    %2065 = vmatpush1.bf16.msra.mxu0 %v1845
    %2066 = vmatprep.subr.bf16.mxu0 %v1850
    %2067 = vmatpush1.bf16.msra.mxu0 %v1849
    %2068 = vmatprep.subr.bf16.mxu0 %v1854
    %2069 = vmatpush1.bf16.msra.mxu0 %v1853
    %2070 = vmatprep.mubr.bf16.mxu0 %v94
    %2071 = vmatmul.mubr.bf16.gmra.mrb[0].mxu0 %v93
    %v2072 = vpop.f32.mrb[0].mxu0
    %v2073 = vadd.f32 %v2020, %v2072
    %v2074 = vpop.f32.mrb[0].mxu0
    %v2075 = vadd.f32 %v2022, %v2074
    %v2076 = vpop.f32.mrb[0].mxu0
    %v2077 = vadd.f32 %v2024, %v2076
    %v2078 = vpop.f32.mrb[0].mxu0
    %v2079 = vadd.f32 %v2026, %v2078
    %2080 = vmatprep.mubr.bf16.mxu0 %v98
    %2081 = vmatmul.mubr.bf16.gmra.mrb[0].mxu0 %v97
    %v2082 = vpop.f32.mrb[0].mxu0
    %v2083 = vadd.f32 %v2030, %v2082
    %v2084 = vpop.f32.mrb[0].mxu0
    %v2085 = vadd.f32 %v2032, %v2084
    %v2086 = vpop.f32.mrb[0].mxu0
    %v2087 = vadd.f32 %v2034, %v2086
    %v2088 = vpop.f32.mrb[0].mxu0
    %v2089 = vadd.f32 %v2036, %v2088
    %2090 = vdwg.mxu0
    %2091 = vmatprep.subr.bf16.mxu0 %v1732
    %2092 = vmatpush1.bf16.msra.mxu0 %v1731
    %2093 = vmatprep.subr.bf16.mxu0 %v1736
    %2094 = vmatpush1.bf16.msra.mxu0 %v1735
    %2095 = vmatprep.subr.bf16.mxu0 %v1740
    %2096 = vmatpush1.bf16.msra.mxu0 %v1739
    %2097 = vmatprep.subr.bf16.mxu0 %v1744
    %2098 = vmatpush1.bf16.msra.mxu0 %v1743
    %2099 = vmatprep.subr.bf16.mxu0 %v1748
    %2100 = vmatpush1.bf16.msra.mxu0 %v1747
    %2101 = vmatprep.subr.bf16.mxu0 %v1752
    %2102 = vmatpush1.bf16.msra.mxu0 %v1751
    %2103 = vmatprep.subr.bf16.mxu0 %v1756
    %2104 = vmatpush1.bf16.msra.mxu0 %v1755
    %2105 = vmatprep.subr.bf16.mxu0 %v1760
    %2106 = vmatpush1.bf16.msra.mxu0 %v1759
    %2107 = vmatprep.subr.bf16.mxu0 %v1764
    %2108 = vmatpush1.bf16.msra.mxu0 %v1763
    %2109 = vmatprep.subr.bf16.mxu0 %v1768
    %2110 = vmatpush1.bf16.msra.mxu0 %v1767
    %2111 = vmatprep.subr.bf16.mxu0 %v1772
    %2112 = vmatpush1.bf16.msra.mxu0 %v1771
    %2113 = vmatprep.subr.bf16.mxu0 %v1776
    %2114 = vmatpush1.bf16.msra.mxu0 %v1775
    %2115 = vmatprep.subr.bf16.mxu0 %v1780
    %2116 = vmatpush1.bf16.msra.mxu0 %v1779
    %2117 = vmatprep.subr.bf16.mxu0 %v1784
    %2118 = vmatpush1.bf16.msra.mxu0 %v1783
    %2119 = vmatprep.subr.bf16.mxu0 %v1788
    %2120 = vmatpush1.bf16.msra.mxu0 %v1787
    %2121 = vmatprep.subr.bf16.mxu0 %v1792
    %2122 = vmatpush1.bf16.msra.mxu0 %v1791
    %2123 = vmatprep.mubr.bf16.mxu0 %v92
    %2124 = vmatmul.mubr.bf16.gmra.mrb[0].mxu0 %v91
    %v2125 = vpop.f32.mrb[0].mxu0
    %v2126 = vadd.f32 %v1327, %v2125
    %v2127 = vpop.f32.mrb[0].mxu0
    %v2128 = vadd.f32 %v1329, %v2127
    %v2129 = vpop.f32.mrb[0].mxu0
    %v2130 = vadd.f32 %v1331, %v2129
    %v2131 = vpop.f32.mrb[0].mxu0
    %v2132 = vadd.f32 %v1333, %v2131
    %2133 = vmatprep.mubr.bf16.mxu0 %v96
    %2134 = vmatmul.mubr.bf16.gmra.mrb[0].mxu0 %v95
    %v2135 = vpop.f32.mrb[0].mxu0
    %v2136 = vadd.f32 %v1337, %v2135
    %v2137 = vpop.f32.mrb[0].mxu0
    %v2138 = vadd.f32 %v1339, %v2137
    %v2139 = vpop.f32.mrb[0].mxu0
    %v2140 = vadd.f32 %v1341, %v2139
    %v2141 = vpop.f32.mrb[0].mxu0
    %v2142 = vadd.f32 %v1343, %v2141
    %2143 = vdwg.mxu0
    %2144 = vmatprep.subr.bf16.mxu0 %v1796
    %2145 = vmatpush1.bf16.msra.mxu0 %v1795
    %2146 = vmatprep.subr.bf16.mxu0 %v1800
    %2147 = vmatpush1.bf16.msra.mxu0 %v1799
    %2148 = vmatprep.subr.bf16.mxu0 %v1804
    %2149 = vmatpush1.bf16.msra.mxu0 %v1803
    %2150 = vmatprep.subr.bf16.mxu0 %v1808
    %2151 = vmatpush1.bf16.msra.mxu0 %v1807
    %2152 = vmatprep.subr.bf16.mxu0 %v1812
    %2153 = vmatpush1.bf16.msra.mxu0 %v1811
    %2154 = vmatprep.subr.bf16.mxu0 %v1816
    %2155 = vmatpush1.bf16.msra.mxu0 %v1815
    %2156 = vmatprep.subr.bf16.mxu0 %v1820
    %2157 = vmatpush1.bf16.msra.mxu0 %v1819
    %2158 = vmatprep.subr.bf16.mxu0 %v1824
    %2159 = vmatpush1.bf16.msra.mxu0 %v1823
    %2160 = vmatprep.subr.bf16.mxu0 %v1828
    %2161 = vmatpush1.bf16.msra.mxu0 %v1827
    %2162 = vmatprep.subr.bf16.mxu0 %v1832
    %2163 = vmatpush1.bf16.msra.mxu0 %v1831
    %2164 = vmatprep.subr.bf16.mxu0 %v1836
    %2165 = vmatpush1.bf16.msra.mxu0 %v1835
    %2166 = vmatprep.subr.bf16.mxu0 %v1840
    %2167 = vmatpush1.bf16.msra.mxu0 %v1839
    %2168 = vmatprep.subr.bf16.mxu0 %v1844
    %2169 = vmatpush1.bf16.msra.mxu0 %v1843
    %2170 = vmatprep.subr.bf16.mxu0 %v1848
    %2171 = vmatpush1.bf16.msra.mxu0 %v1847
    %2172 = vmatprep.subr.bf16.mxu0 %v1852
    %2173 = vmatpush1.bf16.msra.mxu0 %v1851
    %2174 = vmatprep.subr.bf16.mxu0 %v1856
    %2175 = vmatpush1.bf16.msra.mxu0 %v1855
    %2176 = vmatprep.mubr.bf16.mxu0 %v94
    %2177 = vmatmul.mubr.bf16.gmra.mrb[0].mxu0 %v93
    %v2178 = vpop.f32.mrb[0].mxu0
    %v2179 = vadd.f32 %v2126, %v2178
    %v2180 = vpop.f32.mrb[0].mxu0
    %v2181 = vadd.f32 %v2128, %v2180
    %v2182 = vpop.f32.mrb[0].mxu0
    %v2183 = vadd.f32 %v2130, %v2182
    %v2184 = vpop.f32.mrb[0].mxu0
    %v2185 = vadd.f32 %v2132, %v2184
    %2186 = vmatprep.mubr.bf16.mxu0 %v98
    %2187 = vmatmul.mubr.bf16.gmra.mrb[0].mxu0 %v97
    %v2188 = vpop.f32.mrb[0].mxu0
    %v2189 = vadd.f32 %v2136, %v2188
    %v2190 = vpop.f32.mrb[0].mxu0
    %v2191 = vadd.f32 %v2138, %v2190
    %v2192 = vpop.f32.mrb[0].mxu0
    %v2193 = vadd.f32 %v2140, %v2192
    %v2194 = vpop.f32.mrb[0].mxu0
    %v2195 = vadd.f32 %v2142, %v2194
    %2196 = vdwg.mxu0
    %v2197 = vld [vmem:[%s0] sm:$0xfc]
    %v2198 = vld [vmem:[%s0 + $0x8] sm:$0xfc]
    %v2199 = vld [vmem:[%s0 + $0x10] sm:$0xfc]
    %v2200 = vld [vmem:[%s0 + $0x18] sm:$0xfc]
    %v2201 = vld [vmem:[%s0 + $0x40] sm:$0x3]
    %v2202 = vld [vmem:[%s0 + $0x48] sm:$0x3]
    %v2203 = vld [vmem:[%s0 + $0x50] sm:$0x3]
    %v2204 = vld [vmem:[%s0 + $0x58] sm:$0x3]
    %v2205 = vld [vmem:[%s0 + $0x60] sm:$0xfc]
    %v2206 = vld [vmem:[%s0 + $0x68] sm:$0xfc]
    %v2207 = vld [vmem:[%s0 + $0x70] sm:$0xfc]
    %v2208 = vld [vmem:[%s0 + $0x78] sm:$0xfc]
    %v2209 = vld [vmem:[%s0 + $0xa0] sm:$0x3]
    %v2210 = vld [vmem:[%s0 + $0xa8] sm:$0x3]
    %v2211 = vld [vmem:[%s0 + $0xb0] sm:$0x3]
    %v2212 = vld [vmem:[%s0 + $0xb8] sm:$0x3]
    %v2213 = vpack.c.bf16 %v79, %v2197
    %v2214 = vpack.c.bf16 %v80, %v2198
    %v2215 = vpack.c.bf16 %v81, %v2199
    %v2216 = vpack.c.bf16 %v82, %v2200
    %v2217 = vpack.c.bf16 %v2201, %v2201
    %v2218 = vpack.c.bf16 %v2202, %v2202
    %v2219 = vpack.c.bf16 %v2203, %v2203
    %v2220 = vpack.c.bf16 %v2204, %v2204
    %v2221 = vpack.c.bf16 %v87, %v2205
    %v2222 = vpack.c.bf16 %v88, %v2206
    %v2223 = vpack.c.bf16 %v89, %v2207
    %v2224 = vpack.c.bf16 %v90, %v2208
    %v2225 = vpack.c.bf16 %v2209, %v2209
    %v2226 = vpack.c.bf16 %v2210, %v2210
    %v2227 = vpack.c.bf16 %v2211, %v2211
    %v2228 = vpack.c.bf16 %v2212, %v2212
    %vm2245 = vcmask 1046528
    %v2246 = vrot.slane %v2213, 1
    %v2247 = vrot.slane %v2217, 1
    %v2248 = vsel %vm2245, %v2246, %v2247
    %v2249 = vrot.slane %v2214, 1
    %v2250 = vrot.slane %v2218, 1
    %v2251 = vsel %vm2245, %v2249, %v2250
    %v2252 = vrot.slane %v2215, 1
    %v2253 = vrot.slane %v2219, 1
    %v2254 = vsel %vm2245, %v2252, %v2253
    %v2255 = vrot.slane %v2216, 1
    %v2256 = vrot.slane %v2220, 1
    %v2257 = vsel %vm2245, %v2255, %v2256
    %v2258 = vrot.slane %v2221, 1
    %v2259 = vrot.slane %v2225, 1
    %v2260 = vsel %vm2245, %v2258, %v2259
    %v2261 = vrot.slane %v2222, 1
    %v2262 = vrot.slane %v2226, 1
    %v2263 = vsel %vm2245, %v2261, %v2262
    %v2264 = vrot.slane %v2223, 1
    %v2265 = vrot.slane %v2227, 1
    %v2266 = vsel %vm2245, %v2264, %v2265
    %v2267 = vrot.slane %v2224, 1
    %v2268 = vrot.slane %v2228, 1
    %v2269 = vsel %vm2245, %v2267, %v2268
    %s2278 = scalar_lea.vmem [#allocation3], 2048
    %v2279 = vld [vmem:[%s2278] sm:$0xff]
    %v2280 = vld [vmem:[%s2278 + $0x8] sm:$0xff]
    %v2281 = vld [vmem:[%s2278 + $0x10] sm:$0xff]
    %v2282 = vld [vmem:[%s2278 + $0x18] sm:$0xff]
    %v2283 = vld [vmem:[%s2278 + $0x20] sm:$0xff]
    %v2284 = vld [vmem:[%s2278 + $0x28] sm:$0xff]
    %v2285 = vld [vmem:[%s2278 + $0x30] sm:$0xff]
    %v2286 = vld [vmem:[%s2278 + $0x38] sm:$0xff]
    %v2287 = vld [vmem:[%s2278 + $0x40] sm:$0xff]
    %v2288 = vld [vmem:[%s2278 + $0x48] sm:$0xff]
    %v2289 = vld [vmem:[%s2278 + $0x50] sm:$0xff]
    %v2290 = vld [vmem:[%s2278 + $0x58] sm:$0xff]
    %v2291 = vld [vmem:[%s2278 + $0x60] sm:$0xff]
    %v2292 = vld [vmem:[%s2278 + $0x68] sm:$0xff]
    %v2293 = vld [vmem:[%s2278 + $0x70] sm:$0xff]
    %v2294 = vld [vmem:[%s2278 + $0x78] sm:$0xff]
    %v2295 = vld [vmem:[%s2278 + $0x80] sm:$0xff]
    %v2296 = vld [vmem:[%s2278 + $0x88] sm:$0xff]
    %v2297 = vld [vmem:[%s2278 + $0x90] sm:$0xff]
    %v2298 = vld [vmem:[%s2278 + $0x98] sm:$0xff]
    %v2299 = vld [vmem:[%s2278 + $0xa0] sm:$0xff]
    %v2300 = vld [vmem:[%s2278 + $0xa8] sm:$0xff]
    %v2301 = vld [vmem:[%s2278 + $0xb0] sm:$0xff]
    %v2302 = vld [vmem:[%s2278 + $0xb8] sm:$0xff]
    %v2303 = vld [vmem:[%s2278 + $0xc0] sm:$0xff]
    %v2304 = vld [vmem:[%s2278 + $0xc8] sm:$0xff]
    %v2305 = vld [vmem:[%s2278 + $0xd0] sm:$0xff]
    %v2306 = vld [vmem:[%s2278 + $0xd8] sm:$0xff]
    %v2307 = vld [vmem:[%s2278 + $0xe0] sm:$0xff]
    %v2308 = vld [vmem:[%s2278 + $0xe8] sm:$0xff]
    %v2309 = vld [vmem:[%s2278 + $0xf0] sm:$0xff]
    %v2310 = vld [vmem:[%s2278 + $0xf8] sm:$0xff]
    %v2311 = vld [vmem:[%s2278 + $0x100] sm:$0xff]
    %v2312 = vld [vmem:[%s2278 + $0x108] sm:$0xff]
    %v2313 = vld [vmem:[%s2278 + $0x110] sm:$0xff]
    %v2314 = vld [vmem:[%s2278 + $0x118] sm:$0xff]
    %v2315 = vld [vmem:[%s2278 + $0x120] sm:$0xff]
    %v2316 = vld [vmem:[%s2278 + $0x128] sm:$0xff]
    %v2317 = vld [vmem:[%s2278 + $0x130] sm:$0xff]
    %v2318 = vld [vmem:[%s2278 + $0x138] sm:$0xff]
    %v2319 = vld [vmem:[%s2278 + $0x140] sm:$0xff]
    %v2320 = vld [vmem:[%s2278 + $0x148] sm:$0xff]
    %v2321 = vld [vmem:[%s2278 + $0x150] sm:$0xff]
    %v2322 = vld [vmem:[%s2278 + $0x158] sm:$0xff]
    %v2323 = vld [vmem:[%s2278 + $0x160] sm:$0xff]
    %v2324 = vld [vmem:[%s2278 + $0x168] sm:$0xff]
    %v2325 = vld [vmem:[%s2278 + $0x170] sm:$0xff]
    %v2326 = vld [vmem:[%s2278 + $0x178] sm:$0xff]
    %v2327 = vld [vmem:[%s2278 + $0x180] sm:$0xff]
    %v2328 = vld [vmem:[%s2278 + $0x188] sm:$0xff]
    %v2329 = vld [vmem:[%s2278 + $0x190] sm:$0xff]
    %v2330 = vld [vmem:[%s2278 + $0x198] sm:$0xff]
    %v2331 = vld [vmem:[%s2278 + $0x1a0] sm:$0xff]
    %v2332 = vld [vmem:[%s2278 + $0x1a8] sm:$0xff]
    %v2333 = vld [vmem:[%s2278 + $0x1b0] sm:$0xff]
    %v2334 = vld [vmem:[%s2278 + $0x1b8] sm:$0xff]
    %v2335 = vld [vmem:[%s2278 + $0x1c0] sm:$0xff]
    %v2336 = vld [vmem:[%s2278 + $0x1c8] sm:$0xff]
    %v2337 = vld [vmem:[%s2278 + $0x1d0] sm:$0xff]
    %v2338 = vld [vmem:[%s2278 + $0x1d8] sm:$0xff]
    %v2339 = vld [vmem:[%s2278 + $0x1e0] sm:$0xff]
    %v2340 = vld [vmem:[%s2278 + $0x1e8] sm:$0xff]
    %v2341 = vld [vmem:[%s2278 + $0x1f0] sm:$0xff]
    %v2342 = vld [vmem:[%s2278 + $0x1f8] sm:$0xff]
    %v2343 = vld [vmem:[%s2278 + $0x200] sm:$0xff]
    %v2344 = vld [vmem:[%s2278 + $0x208] sm:$0xff]
    %v2345 = vld [vmem:[%s2278 + $0x210] sm:$0xff]
    %v2346 = vld [vmem:[%s2278 + $0x218] sm:$0xff]
    %v2347 = vld [vmem:[%s2278 + $0x220] sm:$0xff]
    %v2348 = vld [vmem:[%s2278 + $0x228] sm:$0xff]
    %v2349 = vld [vmem:[%s2278 + $0x230] sm:$0xff]
    %v2350 = vld [vmem:[%s2278 + $0x238] sm:$0xff]
    %v2351 = vld [vmem:[%s2278 + $0x240] sm:$0xff]
    %v2352 = vld [vmem:[%s2278 + $0x248] sm:$0xff]
    %v2353 = vld [vmem:[%s2278 + $0x250] sm:$0xff]
    %v2354 = vld [vmem:[%s2278 + $0x258] sm:$0xff]
    %v2355 = vld [vmem:[%s2278 + $0x260] sm:$0xff]
    %v2356 = vld [vmem:[%s2278 + $0x268] sm:$0xff]
    %v2357 = vld [vmem:[%s2278 + $0x270] sm:$0xff]
    %v2358 = vld [vmem:[%s2278 + $0x278] sm:$0xff]
    %v2359 = vld [vmem:[%s2278 + $0x280] sm:$0xff]
    %v2360 = vld [vmem:[%s2278 + $0x288] sm:$0xff]
    %v2361 = vld [vmem:[%s2278 + $0x290] sm:$0xff]
    %v2362 = vld [vmem:[%s2278 + $0x298] sm:$0xff]
    %v2363 = vld [vmem:[%s2278 + $0x2a0] sm:$0xff]
    %v2364 = vld [vmem:[%s2278 + $0x2a8] sm:$0xff]
    %v2365 = vld [vmem:[%s2278 + $0x2b0] sm:$0xff]
    %v2366 = vld [vmem:[%s2278 + $0x2b8] sm:$0xff]
    %v2367 = vld [vmem:[%s2278 + $0x2c0] sm:$0xff]
    %v2368 = vld [vmem:[%s2278 + $0x2c8] sm:$0xff]
    %v2369 = vld [vmem:[%s2278 + $0x2d0] sm:$0xff]
    %v2370 = vld [vmem:[%s2278 + $0x2d8] sm:$0xff]
    %v2371 = vld [vmem:[%s2278 + $0x2e0] sm:$0xff]
    %v2372 = vld [vmem:[%s2278 + $0x2e8] sm:$0xff]
    %v2373 = vld [vmem:[%s2278 + $0x2f0] sm:$0xff]
    %v2374 = vld [vmem:[%s2278 + $0x2f8] sm:$0xff]
    %v2375 = vld [vmem:[%s2278 + $0x300] sm:$0xff]
    %v2376 = vld [vmem:[%s2278 + $0x308] sm:$0xff]
    %v2377 = vld [vmem:[%s2278 + $0x310] sm:$0xff]
    %v2378 = vld [vmem:[%s2278 + $0x318] sm:$0xff]
    %v2379 = vld [vmem:[%s2278 + $0x320] sm:$0xff]
    %v2380 = vld [vmem:[%s2278 + $0x328] sm:$0xff]
    %v2381 = vld [vmem:[%s2278 + $0x330] sm:$0xff]
    %v2382 = vld [vmem:[%s2278 + $0x338] sm:$0xff]
    %v2383 = vld [vmem:[%s2278 + $0x340] sm:$0xff]
    %v2384 = vld [vmem:[%s2278 + $0x348] sm:$0xff]
    %v2385 = vld [vmem:[%s2278 + $0x350] sm:$0xff]
    %v2386 = vld [vmem:[%s2278 + $0x358] sm:$0xff]
    %v2387 = vld [vmem:[%s2278 + $0x360] sm:$0xff]
    %v2388 = vld [vmem:[%s2278 + $0x368] sm:$0xff]
    %v2389 = vld [vmem:[%s2278 + $0x370] sm:$0xff]
    %v2390 = vld [vmem:[%s2278 + $0x378] sm:$0xff]
    %v2391 = vld [vmem:[%s2278 + $0x380] sm:$0xff]
    %v2392 = vld [vmem:[%s2278 + $0x388] sm:$0xff]
    %v2393 = vld [vmem:[%s2278 + $0x390] sm:$0xff]
    %v2394 = vld [vmem:[%s2278 + $0x398] sm:$0xff]
    %v2395 = vld [vmem:[%s2278 + $0x3a0] sm:$0xff]
    %v2396 = vld [vmem:[%s2278 + $0x3a8] sm:$0xff]
    %v2397 = vld [vmem:[%s2278 + $0x3b0] sm:$0xff]
    %v2398 = vld [vmem:[%s2278 + $0x3b8] sm:$0xff]
    %v2399 = vld [vmem:[%s2278 + $0x3c0] sm:$0xff]
    %v2400 = vld [vmem:[%s2278 + $0x3c8] sm:$0xff]
    %v2401 = vld [vmem:[%s2278 + $0x3d0] sm:$0xff]
    %v2402 = vld [vmem:[%s2278 + $0x3d8] sm:$0xff]
    %v2403 = vld [vmem:[%s2278 + $0x3e0] sm:$0xff]
    %v2404 = vld [vmem:[%s2278 + $0x3e8] sm:$0xff]
    %v2405 = vld [vmem:[%s2278 + $0x3f0] sm:$0xff]
    %v2406 = vld [vmem:[%s2278 + $0x3f8] sm:$0xff]
    %v2535 = vunpack.c.l.b16 %v2279
    %v2536 = vunpack.c.h.b16 %v2279
    %v2537 = vunpack.c.l.b16 %v2280
    %v2538 = vunpack.c.h.b16 %v2280
    %v2539 = vunpack.c.l.b16 %v2281
    %v2540 = vunpack.c.h.b16 %v2281
    %v2541 = vunpack.c.l.b16 %v2282
    %v2542 = vunpack.c.h.b16 %v2282
    %v2543 = vunpack.c.l.b16 %v2283
    %v2544 = vunpack.c.h.b16 %v2283
    %v2545 = vunpack.c.l.b16 %v2284
    %v2546 = vunpack.c.h.b16 %v2284
    %v2547 = vunpack.c.l.b16 %v2285
    %v2548 = vunpack.c.h.b16 %v2285
    %v2549 = vunpack.c.l.b16 %v2286
    %v2550 = vunpack.c.h.b16 %v2286
    %v2551 = vunpack.c.l.b16 %v2287
    %v2552 = vunpack.c.h.b16 %v2287
    %v2553 = vunpack.c.l.b16 %v2288
    %v2554 = vunpack.c.h.b16 %v2288
    %v2555 = vunpack.c.l.b16 %v2289
    %v2556 = vunpack.c.h.b16 %v2289
    %v2557 = vunpack.c.l.b16 %v2290
    %v2558 = vunpack.c.h.b16 %v2290
    %v2559 = vunpack.c.l.b16 %v2291
    %v2560 = vunpack.c.h.b16 %v2291
    %v2561 = vunpack.c.l.b16 %v2292
    %v2562 = vunpack.c.h.b16 %v2292
    %v2563 = vunpack.c.l.b16 %v2293
    %v2564 = vunpack.c.h.b16 %v2293
    %v2565 = vunpack.c.l.b16 %v2294
    %v2566 = vunpack.c.h.b16 %v2294
    %v2567 = vunpack.c.l.b16 %v2295
    %v2568 = vunpack.c.h.b16 %v2295
    %v2569 = vunpack.c.l.b16 %v2296
    %v2570 = vunpack.c.h.b16 %v2296
    %v2571 = vunpack.c.l.b16 %v2297
    %v2572 = vunpack.c.h.b16 %v2297
    %v2573 = vunpack.c.l.b16 %v2298
    %v2574 = vunpack.c.h.b16 %v2298
    %v2575 = vunpack.c.l.b16 %v2299
    %v2576 = vunpack.c.h.b16 %v2299
    %v2577 = vunpack.c.l.b16 %v2300
    %v2578 = vunpack.c.h.b16 %v2300
    %v2579 = vunpack.c.l.b16 %v2301
    %v2580 = vunpack.c.h.b16 %v2301
    %v2581 = vunpack.c.l.b16 %v2302
    %v2582 = vunpack.c.h.b16 %v2302
    %v2583 = vunpack.c.l.b16 %v2303
    %v2584 = vunpack.c.h.b16 %v2303
    %v2585 = vunpack.c.l.b16 %v2304
    %v2586 = vunpack.c.h.b16 %v2304
    %v2587 = vunpack.c.l.b16 %v2305
    %v2588 = vunpack.c.h.b16 %v2305
    %v2589 = vunpack.c.l.b16 %v2306
    %v2590 = vunpack.c.h.b16 %v2306
    %v2591 = vunpack.c.l.b16 %v2307
    %v2592 = vunpack.c.h.b16 %v2307
    %v2593 = vunpack.c.l.b16 %v2308
    %v2594 = vunpack.c.h.b16 %v2308
    %v2595 = vunpack.c.l.b16 %v2309
    %v2596 = vunpack.c.h.b16 %v2309
    %v2597 = vunpack.c.l.b16 %v2310
    %v2598 = vunpack.c.h.b16 %v2310
    %v2599 = vunpack.c.l.b16 %v2311
    %v2600 = vunpack.c.h.b16 %v2311
    %v2601 = vunpack.c.l.b16 %v2312
    %v2602 = vunpack.c.h.b16 %v2312
    %v2603 = vunpack.c.l.b16 %v2313
    %v2604 = vunpack.c.h.b16 %v2313
    %v2605 = vunpack.c.l.b16 %v2314
    %v2606 = vunpack.c.h.b16 %v2314
    %v2607 = vunpack.c.l.b16 %v2315
    %v2608 = vunpack.c.h.b16 %v2315
    %v2609 = vunpack.c.l.b16 %v2316
    %v2610 = vunpack.c.h.b16 %v2316
    %v2611 = vunpack.c.l.b16 %v2317
    %v2612 = vunpack.c.h.b16 %v2317
    %v2613 = vunpack.c.l.b16 %v2318
    %v2614 = vunpack.c.h.b16 %v2318
    %v2615 = vunpack.c.l.b16 %v2319
    %v2616 = vunpack.c.h.b16 %v2319
    %v2617 = vunpack.c.l.b16 %v2320
    %v2618 = vunpack.c.h.b16 %v2320
    %v2619 = vunpack.c.l.b16 %v2321
    %v2620 = vunpack.c.h.b16 %v2321
    %v2621 = vunpack.c.l.b16 %v2322
    %v2622 = vunpack.c.h.b16 %v2322
    %v2623 = vunpack.c.l.b16 %v2323
    %v2624 = vunpack.c.h.b16 %v2323
    %v2625 = vunpack.c.l.b16 %v2324
    %v2626 = vunpack.c.h.b16 %v2324
    %v2627 = vunpack.c.l.b16 %v2325
    %v2628 = vunpack.c.h.b16 %v2325
    %v2629 = vunpack.c.l.b16 %v2326
    %v2630 = vunpack.c.h.b16 %v2326
    %v2631 = vunpack.c.l.b16 %v2327
    %v2632 = vunpack.c.h.b16 %v2327
    %v2633 = vunpack.c.l.b16 %v2328
    %v2634 = vunpack.c.h.b16 %v2328
    %v2635 = vunpack.c.l.b16 %v2329
    %v2636 = vunpack.c.h.b16 %v2329
    %v2637 = vunpack.c.l.b16 %v2330
    %v2638 = vunpack.c.h.b16 %v2330
    %v2639 = vunpack.c.l.b16 %v2331
    %v2640 = vunpack.c.h.b16 %v2331
    %v2641 = vunpack.c.l.b16 %v2332
    %v2642 = vunpack.c.h.b16 %v2332
    %v2643 = vunpack.c.l.b16 %v2333
    %v2644 = vunpack.c.h.b16 %v2333
    %v2645 = vunpack.c.l.b16 %v2334
    %v2646 = vunpack.c.h.b16 %v2334
    %v2647 = vunpack.c.l.b16 %v2335
    %v2648 = vunpack.c.h.b16 %v2335
    %v2649 = vunpack.c.l.b16 %v2336
    %v2650 = vunpack.c.h.b16 %v2336
    %v2651 = vunpack.c.l.b16 %v2337
    %v2652 = vunpack.c.h.b16 %v2337
    %v2653 = vunpack.c.l.b16 %v2338
    %v2654 = vunpack.c.h.b16 %v2338
    %v2655 = vunpack.c.l.b16 %v2339
    %v2656 = vunpack.c.h.b16 %v2339
    %v2657 = vunpack.c.l.b16 %v2340
    %v2658 = vunpack.c.h.b16 %v2340
    %v2659 = vunpack.c.l.b16 %v2341
    %v2660 = vunpack.c.h.b16 %v2341
    %v2661 = vunpack.c.l.b16 %v2342
    %v2662 = vunpack.c.h.b16 %v2342
    %v2663 = vunpack.c.l.b16 %v2343
    %v2664 = vunpack.c.h.b16 %v2343
    %v2665 = vunpack.c.l.b16 %v2344
    %v2666 = vunpack.c.h.b16 %v2344
    %v2667 = vunpack.c.l.b16 %v2345
    %v2668 = vunpack.c.h.b16 %v2345
    %v2669 = vunpack.c.l.b16 %v2346
    %v2670 = vunpack.c.h.b16 %v2346
    %v2671 = vunpack.c.l.b16 %v2347
    %v2672 = vunpack.c.h.b16 %v2347
    %v2673 = vunpack.c.l.b16 %v2348
    %v2674 = vunpack.c.h.b16 %v2348
    %v2675 = vunpack.c.l.b16 %v2349
    %v2676 = vunpack.c.h.b16 %v2349
    %v2677 = vunpack.c.l.b16 %v2350
    %v2678 = vunpack.c.h.b16 %v2350
    %v2679 = vunpack.c.l.b16 %v2351
    %v2680 = vunpack.c.h.b16 %v2351
    %v2681 = vunpack.c.l.b16 %v2352
    %v2682 = vunpack.c.h.b16 %v2352
    %v2683 = vunpack.c.l.b16 %v2353
    %v2684 = vunpack.c.h.b16 %v2353
    %v2685 = vunpack.c.l.b16 %v2354
    %v2686 = vunpack.c.h.b16 %v2354
    %v2687 = vunpack.c.l.b16 %v2355
    %v2688 = vunpack.c.h.b16 %v2355
    %v2689 = vunpack.c.l.b16 %v2356
    %v2690 = vunpack.c.h.b16 %v2356
    %v2691 = vunpack.c.l.b16 %v2357
    %v2692 = vunpack.c.h.b16 %v2357
    %v2693 = vunpack.c.l.b16 %v2358
    %v2694 = vunpack.c.h.b16 %v2358
    %v2695 = vunpack.c.l.b16 %v2359
    %v2696 = vunpack.c.h.b16 %v2359
    %v2697 = vunpack.c.l.b16 %v2360
    %v2698 = vunpack.c.h.b16 %v2360
    %v2699 = vunpack.c.l.b16 %v2361
    %v2700 = vunpack.c.h.b16 %v2361
    %v2701 = vunpack.c.l.b16 %v2362
    %v2702 = vunpack.c.h.b16 %v2362
    %v2703 = vunpack.c.l.b16 %v2363
    %v2704 = vunpack.c.h.b16 %v2363
    %v2705 = vunpack.c.l.b16 %v2364
    %v2706 = vunpack.c.h.b16 %v2364
    %v2707 = vunpack.c.l.b16 %v2365
    %v2708 = vunpack.c.h.b16 %v2365
    %v2709 = vunpack.c.l.b16 %v2366
    %v2710 = vunpack.c.h.b16 %v2366
    %v2711 = vunpack.c.l.b16 %v2367
    %v2712 = vunpack.c.h.b16 %v2367
    %v2713 = vunpack.c.l.b16 %v2368
    %v2714 = vunpack.c.h.b16 %v2368
    %v2715 = vunpack.c.l.b16 %v2369
    %v2716 = vunpack.c.h.b16 %v2369
    %v2717 = vunpack.c.l.b16 %v2370
    %v2718 = vunpack.c.h.b16 %v2370
    %v2719 = vunpack.c.l.b16 %v2371
    %v2720 = vunpack.c.h.b16 %v2371
    %v2721 = vunpack.c.l.b16 %v2372
    %v2722 = vunpack.c.h.b16 %v2372
    %v2723 = vunpack.c.l.b16 %v2373
    %v2724 = vunpack.c.h.b16 %v2373
    %v2725 = vunpack.c.l.b16 %v2374
    %v2726 = vunpack.c.h.b16 %v2374
    %v2727 = vunpack.c.l.b16 %v2375
    %v2728 = vunpack.c.h.b16 %v2375
    %v2729 = vunpack.c.l.b16 %v2376
    %v2730 = vunpack.c.h.b16 %v2376
    %v2731 = vunpack.c.l.b16 %v2377
    %v2732 = vunpack.c.h.b16 %v2377
    %v2733 = vunpack.c.l.b16 %v2378
    %v2734 = vunpack.c.h.b16 %v2378
    %v2735 = vunpack.c.l.b16 %v2379
    %v2736 = vunpack.c.h.b16 %v2379
    %v2737 = vunpack.c.l.b16 %v2380
    %v2738 = vunpack.c.h.b16 %v2380
    %v2739 = vunpack.c.l.b16 %v2381
    %v2740 = vunpack.c.h.b16 %v2381
    %v2741 = vunpack.c.l.b16 %v2382
    %v2742 = vunpack.c.h.b16 %v2382
    %v2743 = vunpack.c.l.b16 %v2383
    %v2744 = vunpack.c.h.b16 %v2383
    %v2745 = vunpack.c.l.b16 %v2384
    %v2746 = vunpack.c.h.b16 %v2384
    %v2747 = vunpack.c.l.b16 %v2385
    %v2748 = vunpack.c.h.b16 %v2385
    %v2749 = vunpack.c.l.b16 %v2386
    %v2750 = vunpack.c.h.b16 %v2386
    %v2751 = vunpack.c.l.b16 %v2387
    %v2752 = vunpack.c.h.b16 %v2387
    %v2753 = vunpack.c.l.b16 %v2388
    %v2754 = vunpack.c.h.b16 %v2388
    %v2755 = vunpack.c.l.b16 %v2389
    %v2756 = vunpack.c.h.b16 %v2389
    %v2757 = vunpack.c.l.b16 %v2390
    %v2758 = vunpack.c.h.b16 %v2390
    %v2759 = vunpack.c.l.b16 %v2391
    %v2760 = vunpack.c.h.b16 %v2391
    %v2761 = vunpack.c.l.b16 %v2392
    %v2762 = vunpack.c.h.b16 %v2392
    %v2763 = vunpack.c.l.b16 %v2393
    %v2764 = vunpack.c.h.b16 %v2393
    %v2765 = vunpack.c.l.b16 %v2394
    %v2766 = vunpack.c.h.b16 %v2394
    %v2767 = vunpack.c.l.b16 %v2395
    %v2768 = vunpack.c.h.b16 %v2395
    %v2769 = vunpack.c.l.b16 %v2396
    %v2770 = vunpack.c.h.b16 %v2396
    %v2771 = vunpack.c.l.b16 %v2397
    %v2772 = vunpack.c.h.b16 %v2397
    %v2773 = vunpack.c.l.b16 %v2398
    %v2774 = vunpack.c.h.b16 %v2398
    %v2775 = vunpack.c.l.b16 %v2399
    %v2776 = vunpack.c.h.b16 %v2399
    %v2777 = vunpack.c.l.b16 %v2400
    %v2778 = vunpack.c.h.b16 %v2400
    %v2779 = vunpack.c.l.b16 %v2401
    %v2780 = vunpack.c.h.b16 %v2401
    %v2781 = vunpack.c.l.b16 %v2402
    %v2782 = vunpack.c.h.b16 %v2402
    %v2783 = vunpack.c.l.b16 %v2403
    %v2784 = vunpack.c.h.b16 %v2403
    %v2785 = vunpack.c.l.b16 %v2404
    %v2786 = vunpack.c.h.b16 %v2404
    %v2787 = vunpack.c.l.b16 %v2405
    %v2788 = vunpack.c.h.b16 %v2405
    %v2789 = vunpack.c.l.b16 %v2406
    %v2790 = vunpack.c.h.b16 %v2406
    %v2791 = vpack.c.b16 %v2539, %v2535
    %v2792 = vpack.c.b16 %v2540, %v2536
    %v2793 = vpack.c.b16 %v2541, %v2537
    %v2794 = vpack.c.b16 %v2542, %v2538
    %v2795 = vpack.c.b16 %v2547, %v2543
    %v2796 = vpack.c.b16 %v2548, %v2544
    %v2797 = vpack.c.b16 %v2549, %v2545
    %v2798 = vpack.c.b16 %v2550, %v2546
    %v2799 = vpack.c.b16 %v2555, %v2551
    %v2800 = vpack.c.b16 %v2556, %v2552
    %v2801 = vpack.c.b16 %v2557, %v2553
    %v2802 = vpack.c.b16 %v2558, %v2554
    %v2803 = vpack.c.b16 %v2563, %v2559
    %v2804 = vpack.c.b16 %v2564, %v2560
    %v2805 = vpack.c.b16 %v2565, %v2561
    %v2806 = vpack.c.b16 %v2566, %v2562
    %v2807 = vpack.c.b16 %v2571, %v2567
    %v2808 = vpack.c.b16 %v2572, %v2568
    %v2809 = vpack.c.b16 %v2573, %v2569
    %v2810 = vpack.c.b16 %v2574, %v2570
    %v2811 = vpack.c.b16 %v2579, %v2575
    %v2812 = vpack.c.b16 %v2580, %v2576
    %v2813 = vpack.c.b16 %v2581, %v2577
    %v2814 = vpack.c.b16 %v2582, %v2578
    %v2815 = vpack.c.b16 %v2587, %v2583
    %v2816 = vpack.c.b16 %v2588, %v2584
    %v2817 = vpack.c.b16 %v2589, %v2585
    %v2818 = vpack.c.b16 %v2590, %v2586
    %v2819 = vpack.c.b16 %v2595, %v2591
    %v2820 = vpack.c.b16 %v2596, %v2592
    %v2821 = vpack.c.b16 %v2597, %v2593
    %v2822 = vpack.c.b16 %v2598, %v2594
    %v2823 = vpack.c.b16 %v2603, %v2599
    %v2824 = vpack.c.b16 %v2604, %v2600
    %v2825 = vpack.c.b16 %v2605, %v2601
    %v2826 = vpack.c.b16 %v2606, %v2602
    %v2827 = vpack.c.b16 %v2611, %v2607
    %v2828 = vpack.c.b16 %v2612, %v2608
    %v2829 = vpack.c.b16 %v2613, %v2609
    %v2830 = vpack.c.b16 %v2614, %v2610
    %v2831 = vpack.c.b16 %v2619, %v2615
    %v2832 = vpack.c.b16 %v2620, %v2616
    %v2833 = vpack.c.b16 %v2621, %v2617
    %v2834 = vpack.c.b16 %v2622, %v2618
    %v2835 = vpack.c.b16 %v2627, %v2623
    %v2836 = vpack.c.b16 %v2628, %v2624
    %v2837 = vpack.c.b16 %v2629, %v2625
    %v2838 = vpack.c.b16 %v2630, %v2626
    %v2839 = vpack.c.b16 %v2635, %v2631
    %v2840 = vpack.c.b16 %v2636, %v2632
    %v2841 = vpack.c.b16 %v2637, %v2633
    %v2842 = vpack.c.b16 %v2638, %v2634
    %v2843 = vpack.c.b16 %v2643, %v2639
    %v2844 = vpack.c.b16 %v2644, %v2640
    %v2845 = vpack.c.b16 %v2645, %v2641
    %v2846 = vpack.c.b16 %v2646, %v2642
    %v2847 = vpack.c.b16 %v2651, %v2647
    %v2848 = vpack.c.b16 %v2652, %v2648
    %v2849 = vpack.c.b16 %v2653, %v2649
    %v2850 = vpack.c.b16 %v2654, %v2650
    %v2851 = vpack.c.b16 %v2659, %v2655
    %v2852 = vpack.c.b16 %v2660, %v2656
    %v2853 = vpack.c.b16 %v2661, %v2657
    %v2854 = vpack.c.b16 %v2662, %v2658
    %v2855 = vpack.c.b16 %v2667, %v2663
    %v2856 = vpack.c.b16 %v2668, %v2664
    %v2857 = vpack.c.b16 %v2669, %v2665
    %v2858 = vpack.c.b16 %v2670, %v2666
    %v2859 = vpack.c.b16 %v2675, %v2671
    %v2860 = vpack.c.b16 %v2676, %v2672
    %v2861 = vpack.c.b16 %v2677, %v2673
    %v2862 = vpack.c.b16 %v2678, %v2674
    %v2863 = vpack.c.b16 %v2683, %v2679
    %v2864 = vpack.c.b16 %v2684, %v2680
    %v2865 = vpack.c.b16 %v2685, %v2681
    %v2866 = vpack.c.b16 %v2686, %v2682
    %v2867 = vpack.c.b16 %v2691, %v2687
    %v2868 = vpack.c.b16 %v2692, %v2688
    %v2869 = vpack.c.b16 %v2693, %v2689
    %v2870 = vpack.c.b16 %v2694, %v2690
    %v2871 = vpack.c.b16 %v2699, %v2695
    %v2872 = vpack.c.b16 %v2700, %v2696
    %v2873 = vpack.c.b16 %v2701, %v2697
    %v2874 = vpack.c.b16 %v2702, %v2698
    %v2875 = vpack.c.b16 %v2707, %v2703
    %v2876 = vpack.c.b16 %v2708, %v2704
    %v2877 = vpack.c.b16 %v2709, %v2705
    %v2878 = vpack.c.b16 %v2710, %v2706
    %v2879 = vpack.c.b16 %v2715, %v2711
    %v2880 = vpack.c.b16 %v2716, %v2712
    %v2881 = vpack.c.b16 %v2717, %v2713
    %v2882 = vpack.c.b16 %v2718, %v2714
    %v2883 = vpack.c.b16 %v2723, %v2719
    %v2884 = vpack.c.b16 %v2724, %v2720
    %v2885 = vpack.c.b16 %v2725, %v2721
    %v2886 = vpack.c.b16 %v2726, %v2722
    %v2887 = vpack.c.b16 %v2731, %v2727
    %v2888 = vpack.c.b16 %v2732, %v2728
    %v2889 = vpack.c.b16 %v2733, %v2729
    %v2890 = vpack.c.b16 %v2734, %v2730
    %v2891 = vpack.c.b16 %v2739, %v2735
    %v2892 = vpack.c.b16 %v2740, %v2736
    %v2893 = vpack.c.b16 %v2741, %v2737
    %v2894 = vpack.c.b16 %v2742, %v2738
    %v2895 = vpack.c.b16 %v2747, %v2743
    %v2896 = vpack.c.b16 %v2748, %v2744
    %v2897 = vpack.c.b16 %v2749, %v2745
    %v2898 = vpack.c.b16 %v2750, %v2746
    %v2899 = vpack.c.b16 %v2755, %v2751
    %v2900 = vpack.c.b16 %v2756, %v2752
    %v2901 = vpack.c.b16 %v2757, %v2753
    %v2902 = vpack.c.b16 %v2758, %v2754
    %v2903 = vpack.c.b16 %v2763, %v2759
    %v2904 = vpack.c.b16 %v2764, %v2760
    %v2905 = vpack.c.b16 %v2765, %v2761
    %v2906 = vpack.c.b16 %v2766, %v2762
    %v2907 = vpack.c.b16 %v2771, %v2767
    %v2908 = vpack.c.b16 %v2772, %v2768
    %v2909 = vpack.c.b16 %v2773, %v2769
    %v2910 = vpack.c.b16 %v2774, %v2770
    %v2911 = vpack.c.b16 %v2779, %v2775
    %v2912 = vpack.c.b16 %v2780, %v2776
    %v2913 = vpack.c.b16 %v2781, %v2777
    %v2914 = vpack.c.b16 %v2782, %v2778
    %v2915 = vpack.c.b16 %v2787, %v2783
    %v2916 = vpack.c.b16 %v2788, %v2784
    %v2917 = vpack.c.b16 %v2789, %v2785
    %v2918 = vpack.c.b16 %v2790, %v2786
    %3047 = vmatprep.subr.bf16.mxu0 %v2792
    %3048 = vmatpush1.bf16.msra.mxu0 %v2791
    %3049 = vmatprep.subr.bf16.mxu0 %v2796
    %3050 = vmatpush1.bf16.msra.mxu0 %v2795
    %3051 = vmatprep.subr.bf16.mxu0 %v2800
    %3052 = vmatpush1.bf16.msra.mxu0 %v2799
    %3053 = vmatprep.subr.bf16.mxu0 %v2804
    %3054 = vmatpush1.bf16.msra.mxu0 %v2803
    %3055 = vmatprep.subr.bf16.mxu0 %v2808
    %3056 = vmatpush1.bf16.msra.mxu0 %v2807
    %3057 = vmatprep.subr.bf16.mxu0 %v2812
    %3058 = vmatpush1.bf16.msra.mxu0 %v2811
    %3059 = vmatprep.subr.bf16.mxu0 %v2816
    %3060 = vmatpush1.bf16.msra.mxu0 %v2815
    %3061 = vmatprep.subr.bf16.mxu0 %v2820
    %3062 = vmatpush1.bf16.msra.mxu0 %v2819
    %3063 = vmatprep.subr.bf16.mxu0 %v2824
    %3064 = vmatpush1.bf16.msra.mxu0 %v2823
    %3065 = vmatprep.subr.bf16.mxu0 %v2828
    %3066 = vmatpush1.bf16.msra.mxu0 %v2827
    %3067 = vmatprep.subr.bf16.mxu0 %v2832
    %3068 = vmatpush1.bf16.msra.mxu0 %v2831
    %3069 = vmatprep.subr.bf16.mxu0 %v2836
    %3070 = vmatpush1.bf16.msra.mxu0 %v2835
    %3071 = vmatprep.subr.bf16.mxu0 %v2840
    %3072 = vmatpush1.bf16.msra.mxu0 %v2839
    %3073 = vmatprep.subr.bf16.mxu0 %v2844
    %3074 = vmatpush1.bf16.msra.mxu0 %v2843
    %3075 = vmatprep.subr.bf16.mxu0 %v2848
    %3076 = vmatpush1.bf16.msra.mxu0 %v2847
    %3077 = vmatprep.subr.bf16.mxu0 %v2852
    %3078 = vmatpush1.bf16.msra.mxu0 %v2851
    %3079 = vmatprep.mubr.bf16.mxu0 %v2251
    %3080 = vmatmul.mubr.bf16.gmra.mrb[0].mxu0 %v2248
    %v3081 = vpop.f32.mrb[0].mxu0
    %v3082 = vadd.f32 0.0, %v3081
    %v3083 = vpop.f32.mrb[0].mxu0
    %v3084 = vadd.f32 0.0, %v3083
    %v3085 = vpop.f32.mrb[0].mxu0
    %v3086 = vadd.f32 0.0, %v3085
    %v3087 = vpop.f32.mrb[0].mxu0
    %v3088 = vadd.f32 0.0, %v3087
    %3089 = vmatprep.mubr.bf16.mxu0 %v2263
    %3090 = vmatmul.mubr.bf16.gmra.mrb[0].mxu0 %v2260
    %v3091 = vpop.f32.mrb[0].mxu0
    %v3092 = vadd.f32 0.0, %v3091
    %v3093 = vpop.f32.mrb[0].mxu0
    %v3094 = vadd.f32 0.0, %v3093
    %v3095 = vpop.f32.mrb[0].mxu0
    %v3096 = vadd.f32 0.0, %v3095
    %v3097 = vpop.f32.mrb[0].mxu0
    %v3098 = vadd.f32 0.0, %v3097
    %3099 = vdwg.mxu0
    %3100 = vmatprep.subr.bf16.mxu0 %v2856
    %3101 = vmatpush1.bf16.msra.mxu0 %v2855
    %3102 = vmatprep.subr.bf16.mxu0 %v2860
    %3103 = vmatpush1.bf16.msra.mxu0 %v2859
    %3104 = vmatprep.subr.bf16.mxu0 %v2864
    %3105 = vmatpush1.bf16.msra.mxu0 %v2863
    %3106 = vmatprep.subr.bf16.mxu0 %v2868
    %3107 = vmatpush1.bf16.msra.mxu0 %v2867
    %3108 = vmatprep.subr.bf16.mxu0 %v2872
    %3109 = vmatpush1.bf16.msra.mxu0 %v2871
    %3110 = vmatprep.subr.bf16.mxu0 %v2876
    %3111 = vmatpush1.bf16.msra.mxu0 %v2875
    %3112 = vmatprep.subr.bf16.mxu0 %v2880
    %3113 = vmatpush1.bf16.msra.mxu0 %v2879
    %3114 = vmatprep.subr.bf16.mxu0 %v2884
    %3115 = vmatpush1.bf16.msra.mxu0 %v2883
    %3116 = vmatprep.subr.bf16.mxu0 %v2888
    %3117 = vmatpush1.bf16.msra.mxu0 %v2887
    %3118 = vmatprep.subr.bf16.mxu0 %v2892
    %3119 = vmatpush1.bf16.msra.mxu0 %v2891
    %3120 = vmatprep.subr.bf16.mxu0 %v2896
    %3121 = vmatpush1.bf16.msra.mxu0 %v2895
    %3122 = vmatprep.subr.bf16.mxu0 %v2900
    %3123 = vmatpush1.bf16.msra.mxu0 %v2899
    %3124 = vmatprep.subr.bf16.mxu0 %v2904
    %3125 = vmatpush1.bf16.msra.mxu0 %v2903
    %3126 = vmatprep.subr.bf16.mxu0 %v2908
    %3127 = vmatpush1.bf16.msra.mxu0 %v2907
    %3128 = vmatprep.subr.bf16.mxu0 %v2912
    %3129 = vmatpush1.bf16.msra.mxu0 %v2911
    %3130 = vmatprep.subr.bf16.mxu0 %v2916
    %3131 = vmatpush1.bf16.msra.mxu0 %v2915
    %3132 = vmatprep.mubr.bf16.mxu0 %v2257
    %3133 = vmatmul.mubr.bf16.gmra.mrb[0].mxu0 %v2254
    %v3134 = vpop.f32.mrb[0].mxu0
    %v3135 = vadd.f32 %v3082, %v3134
    %v3136 = vpop.f32.mrb[0].mxu0
    %v3137 = vadd.f32 %v3084, %v3136
    %v3138 = vpop.f32.mrb[0].mxu0
    %v3139 = vadd.f32 %v3086, %v3138
    %v3140 = vpop.f32.mrb[0].mxu0
    %v3141 = vadd.f32 %v3088, %v3140
    %3142 = vmatprep.mubr.bf16.mxu0 %v2269
    %3143 = vmatmul.mubr.bf16.gmra.mrb[0].mxu0 %v2266
    %v3144 = vpop.f32.mrb[0].mxu0
    %v3145 = vadd.f32 %v3092, %v3144
    %v3146 = vpop.f32.mrb[0].mxu0
    %v3147 = vadd.f32 %v3094, %v3146
    %v3148 = vpop.f32.mrb[0].mxu0
    %v3149 = vadd.f32 %v3096, %v3148
    %v3150 = vpop.f32.mrb[0].mxu0
    %v3151 = vadd.f32 %v3098, %v3150
    %3152 = vdwg.mxu0
    %3153 = vmatprep.subr.bf16.mxu0 %v2794
    %3154 = vmatpush1.bf16.msra.mxu0 %v2793
    %3155 = vmatprep.subr.bf16.mxu0 %v2798
    %3156 = vmatpush1.bf16.msra.mxu0 %v2797
    %3157 = vmatprep.subr.bf16.mxu0 %v2802
    %3158 = vmatpush1.bf16.msra.mxu0 %v2801
    %3159 = vmatprep.subr.bf16.mxu0 %v2806
    %3160 = vmatpush1.bf16.msra.mxu0 %v2805
    %3161 = vmatprep.subr.bf16.mxu0 %v2810
    %3162 = vmatpush1.bf16.msra.mxu0 %v2809
    %3163 = vmatprep.subr.bf16.mxu0 %v2814
    %3164 = vmatpush1.bf16.msra.mxu0 %v2813
    %3165 = vmatprep.subr.bf16.mxu0 %v2818
    %3166 = vmatpush1.bf16.msra.mxu0 %v2817
    %3167 = vmatprep.subr.bf16.mxu0 %v2822
    %3168 = vmatpush1.bf16.msra.mxu0 %v2821
    %3169 = vmatprep.subr.bf16.mxu0 %v2826
    %3170 = vmatpush1.bf16.msra.mxu0 %v2825
    %3171 = vmatprep.subr.bf16.mxu0 %v2830
    %3172 = vmatpush1.bf16.msra.mxu0 %v2829
    %3173 = vmatprep.subr.bf16.mxu0 %v2834
    %3174 = vmatpush1.bf16.msra.mxu0 %v2833
    %3175 = vmatprep.subr.bf16.mxu0 %v2838
    %3176 = vmatpush1.bf16.msra.mxu0 %v2837
    %3177 = vmatprep.subr.bf16.mxu0 %v2842
    %3178 = vmatpush1.bf16.msra.mxu0 %v2841
    %3179 = vmatprep.subr.bf16.mxu0 %v2846
    %3180 = vmatpush1.bf16.msra.mxu0 %v2845
    %3181 = vmatprep.subr.bf16.mxu0 %v2850
    %3182 = vmatpush1.bf16.msra.mxu0 %v2849
    %3183 = vmatprep.subr.bf16.mxu0 %v2854
    %3184 = vmatpush1.bf16.msra.mxu0 %v2853
    %3185 = vmatprep.mubr.bf16.mxu0 %v2251
    %3186 = vmatmul.mubr.bf16.gmra.mrb[0].mxu0 %v2248
    %v3187 = vpop.f32.mrb[0].mxu0
    %v3188 = vadd.f32 0.0, %v3187
    %v3189 = vpop.f32.mrb[0].mxu0
    %v3190 = vadd.f32 0.0, %v3189
    %v3191 = vpop.f32.mrb[0].mxu0
    %v3192 = vadd.f32 0.0, %v3191
    %v3193 = vpop.f32.mrb[0].mxu0
    %v3194 = vadd.f32 0.0, %v3193
    %3195 = vmatprep.mubr.bf16.mxu0 %v2263
    %3196 = vmatmul.mubr.bf16.gmra.mrb[0].mxu0 %v2260
    %v3197 = vpop.f32.mrb[0].mxu0
    %v3198 = vadd.f32 0.0, %v3197
    %v3199 = vpop.f32.mrb[0].mxu0
    %v3200 = vadd.f32 0.0, %v3199
    %v3201 = vpop.f32.mrb[0].mxu0
    %v3202 = vadd.f32 0.0, %v3201
    %v3203 = vpop.f32.mrb[0].mxu0
    %v3204 = vadd.f32 0.0, %v3203
    %3205 = vdwg.mxu0
    %3206 = vmatprep.subr.bf16.mxu0 %v2858
    %3207 = vmatpush1.bf16.msra.mxu0 %v2857
    %3208 = vmatprep.subr.bf16.mxu0 %v2862
    %3209 = vmatpush1.bf16.msra.mxu0 %v2861
    %3210 = vmatprep.subr.bf16.mxu0 %v2866
    %3211 = vmatpush1.bf16.msra.mxu0 %v2865
    %3212 = vmatprep.subr.bf16.mxu0 %v2870
    %3213 = vmatpush1.bf16.msra.mxu0 %v2869
    %3214 = vmatprep.subr.bf16.mxu0 %v2874
    %3215 = vmatpush1.bf16.msra.mxu0 %v2873
    %3216 = vmatprep.subr.bf16.mxu0 %v2878
    %3217 = vmatpush1.bf16.msra.mxu0 %v2877
    %3218 = vmatprep.subr.bf16.mxu0 %v2882
    %3219 = vmatpush1.bf16.msra.mxu0 %v2881
    %3220 = vmatprep.subr.bf16.mxu0 %v2886
    %3221 = vmatpush1.bf16.msra.mxu0 %v2885
    %3222 = vmatprep.subr.bf16.mxu0 %v2890
    %3223 = vmatpush1.bf16.msra.mxu0 %v2889
    %3224 = vmatprep.subr.bf16.mxu0 %v2894
    %3225 = vmatpush1.bf16.msra.mxu0 %v2893
    %3226 = vmatprep.subr.bf16.mxu0 %v2898
    %3227 = vmatpush1.bf16.msra.mxu0 %v2897
    %3228 = vmatprep.subr.bf16.mxu0 %v2902
    %3229 = vmatpush1.bf16.msra.mxu0 %v2901
    %3230 = vmatprep.subr.bf16.mxu0 %v2906
    %3231 = vmatpush1.bf16.msra.mxu0 %v2905
    %3232 = vmatprep.subr.bf16.mxu0 %v2910
    %3233 = vmatpush1.bf16.msra.mxu0 %v2909
    %3234 = vmatprep.subr.bf16.mxu0 %v2914
    %3235 = vmatpush1.bf16.msra.mxu0 %v2913
    %3236 = vmatprep.subr.bf16.mxu0 %v2918
    %3237 = vmatpush1.bf16.msra.mxu0 %v2917
    %3238 = vmatprep.mubr.bf16.mxu0 %v2257
    %3239 = vmatmul.mubr.bf16.gmra.mrb[0].mxu0 %v2254
    %v3240 = vpop.f32.mrb[0].mxu0
    %v3241 = vadd.f32 %v3188, %v3240
    %v3242 = vpop.f32.mrb[0].mxu0
    %v3243 = vadd.f32 %v3190, %v3242
    %v3244 = vpop.f32.mrb[0].mxu0
    %v3245 = vadd.f32 %v3192, %v3244
    %v3246 = vpop.f32.mrb[0].mxu0
    %v3247 = vadd.f32 %v3194, %v3246
    %3248 = vmatprep.mubr.bf16.mxu0 %v2269
    %3249 = vmatmul.mubr.bf16.gmra.mrb[0].mxu0 %v2266
    %v3250 = vpop.f32.mrb[0].mxu0
    %v3251 = vadd.f32 %v3198, %v3250
    %v3252 = vpop.f32.mrb[0].mxu0
    %v3253 = vadd.f32 %v3200, %v3252
    %v3254 = vpop.f32.mrb[0].mxu0
    %v3255 = vadd.f32 %v3202, %v3254
    %v3256 = vpop.f32.mrb[0].mxu0
    %v3257 = vadd.f32 %v3204, %v3256
    %3258 = vdwg.mxu0
    %v3259 = vadd.f32 %v2073, %v3135
    %v3260 = vadd.f32 %v2075, %v3137
    %v3261 = vadd.f32 %v2179, %v3241
    %v3262 = vadd.f32 %v2181, %v3243
    %v3263 = vadd.f32 %v2077, %v3139
    %v3264 = vadd.f32 %v2079, %v3141
    %v3265 = vadd.f32 %v2183, %v3245
    %v3266 = vadd.f32 %v2185, %v3247
    %v3267 = vadd.f32 %v2083, %v3145
    %v3268 = vadd.f32 %v2085, %v3147
    %v3269 = vadd.f32 %v2189, %v3251
    %v3270 = vadd.f32 %v2191, %v3253
    %v3271 = vadd.f32 %v2087, %v3149
    %v3272 = vadd.f32 %v2089, %v3151
    %v3273 = vadd.f32 %v2193, %v3255
    %v3274 = vadd.f32 %v2195, %v3257
    %v3276 = vlaneseq
    %v3277 = vshrl.u32 %v3276, 7
    %v3278 = vsub.s32 0, %v3277
    %v3279 = vrot.slane %v73, %v3278
    %v3280 = vlaneseq
    %v3281 = vshrl.u32 %v3280, 7
    %v3282 = vsub.s32 1, %v3281
    %v3283 = vrot.slane %v73, %v3282
    %v3284 = vlaneseq
    %v3285 = vshrl.u32 %v3284, 7
    %v3286 = vsub.s32 2, %v3285
    %v3287 = vrot.slane %v73, %v3286
    %v3288 = vlaneseq
    %v3289 = vshrl.u32 %v3288, 7
    %v3290 = vsub.s32 3, %v3289
    %v3291 = vrot.slane %v73, %v3290
    %v3296 = vmul.f32 %v3259, %v3279
    %v3297 = vmul.f32 %v3260, %v3283
    %v3298 = vmul.f32 %v3261, %v3287
    %v3299 = vmul.f32 %v3262, %v3291
    %v3300 = vmul.f32 %v3263, %v3279
    %v3301 = vmul.f32 %v3264, %v3283
    %v3302 = vmul.f32 %v3265, %v3287
    %v3303 = vmul.f32 %v3266, %v3291
    %v3304 = vmul.f32 %v3267, %v3279
    %v3305 = vmul.f32 %v3268, %v3283
    %v3306 = vmul.f32 %v3269, %v3287
    %v3307 = vmul.f32 %v3270, %v3291
    %v3308 = vmul.f32 %v3271, %v3279
    %v3309 = vmul.f32 %v3272, %v3283
    %v3310 = vmul.f32 %v3273, %v3287
    %v3311 = vmul.f32 %v3274, %v3291
    %v3313 = vlaneseq
    %v3314 = vshrl.u32 %v3313, 7
    %v3315 = vsub.s32 0, %v3314
    %v3316 = vrot.slane %v74, %v3315
    %v3317 = vlaneseq
    %v3318 = vshrl.u32 %v3317, 7
    %v3319 = vsub.s32 1, %v3318
    %v3320 = vrot.slane %v74, %v3319
    %v3321 = vlaneseq
    %v3322 = vshrl.u32 %v3321, 7
    %v3323 = vsub.s32 2, %v3322
    %v3324 = vrot.slane %v74, %v3323
    %v3325 = vlaneseq
    %v3326 = vshrl.u32 %v3325, 7
    %v3327 = vsub.s32 3, %v3326
    %v3328 = vrot.slane %v74, %v3327
    %v3333 = vadd.f32 %v3296, %v3316
    %v3334 = vadd.f32 %v3297, %v3320
    %v3335 = vadd.f32 %v3298, %v3324
    %v3336 = vadd.f32 %v3299, %v3328
    %v3337 = vadd.f32 %v3300, %v3316
    %v3338 = vadd.f32 %v3301, %v3320
    %v3339 = vadd.f32 %v3302, %v3324
    %v3340 = vadd.f32 %v3303, %v3328
    %v3341 = vadd.f32 %v3304, %v3316
    %v3342 = vadd.f32 %v3305, %v3320
    %v3343 = vadd.f32 %v3306, %v3324
    %v3344 = vadd.f32 %v3307, %v3328
    %v3345 = vadd.f32 %v3308, %v3316
    %v3346 = vadd.f32 %v3309, %v3320
    %v3347 = vadd.f32 %v3310, %v3324
    %v3348 = vadd.f32 %v3311, %v3328
    %v3349 = vmax.f32 %v3333, 0.0
    %v3350 = vmax.f32 %v3334, 0.0
    %v3351 = vmax.f32 %v3335, 0.0
    %v3352 = vmax.f32 %v3336, 0.0
    %v3353 = vmax.f32 %v3337, 0.0
    %v3354 = vmax.f32 %v3338, 0.0
    %v3355 = vmax.f32 %v3339, 0.0
    %v3356 = vmax.f32 %v3340, 0.0
    %v3357 = vmax.f32 %v3341, 0.0
    %v3358 = vmax.f32 %v3342, 0.0
    %v3359 = vmax.f32 %v3343, 0.0
    %v3360 = vmax.f32 %v3344, 0.0
    %v3361 = vmax.f32 %v3345, 0.0
    %v3362 = vmax.f32 %v3346, 0.0
    %v3363 = vmax.f32 %v3347, 0.0
    %v3364 = vmax.f32 %v3348, 0.0
    %3365 = vst [vmem:[#allocation2] sm:$0xff] 0
    %3366 = vst [vmem:[#allocation2 + $0x8] sm:$0xff] 0
    %3367 = vst [vmem:[#allocation2 + $0x10] sm:$0xff] 0
    %3368 = vst [vmem:[#allocation2 + $0x18] sm:$0xff] 0
    %3369 = vst [vmem:[#allocation2 + $0x20] sm:$0x11] 0
    %3370 = vst [vmem:[#allocation2 + $0x28] sm:$0x11] 0
    %3371 = vst [vmem:[#allocation2 + $0x30] sm:$0xff] 0
    %3372 = vst [vmem:[#allocation2 + $0x38] sm:$0xff] 0
    %3373 = vst [vmem:[#allocation2 + $0x40] sm:$0xff] 0
    %3374 = vst [vmem:[#allocation2 + $0x48] sm:$0xff] 0
    %3375 = vst [vmem:[#allocation2 + $0x50] sm:$0x11] 0
    %3376 = vst [vmem:[#allocation2 + $0x58] sm:$0x11] 0
    %v3377 = vpack.c.bf16 %v3353, %v3349
    %v3378 = vpack.c.bf16 %v3354, %v3350
    %v3379 = vpack.c.bf16 %v3355, %v3351
    %v3380 = vpack.c.bf16 %v3356, %v3352
    %v3381 = vpack.c.bf16 %v3361, %v3357
    %v3382 = vpack.c.bf16 %v3362, %v3358
    %v3383 = vpack.c.bf16 %v3363, %v3359
    %v3384 = vpack.c.bf16 %v3364, %v3360
    %v3393 = vunpack.c.l.b16 %v3377
    %v3394 = vunpack.c.l.b16 %v3378
    %v3395 = vunpack.c.l.b16 %v3379
    %v3396 = vunpack.c.l.b16 %v3380
    %v3397 = vunpack.c.h.b16 %v3377
    %v3398 = vunpack.c.h.b16 %v3378
    %v3399 = vunpack.c.h.b16 %v3379
    %v3400 = vunpack.c.h.b16 %v3380
    %v3401 = vunpack.c.l.b16 %v3381
    %v3402 = vunpack.c.l.b16 %v3382
    %v3403 = vunpack.c.l.b16 %v3383
    %v3404 = vunpack.c.l.b16 %v3384
    %v3405 = vunpack.c.h.b16 %v3381
    %v3406 = vunpack.c.h.b16 %v3382
    %v3407 = vunpack.c.h.b16 %v3383
    %v3408 = vunpack.c.h.b16 %v3384
    %v3409 = vpack.c.b16 %v3394, %v3393
    %v3410 = vpack.c.b16 %v3396, %v3395
    %v3411 = vpack.c.b16 %v3398, %v3397
    %v3412 = vpack.c.b16 %v3400, %v3399
    %v3413 = vpack.c.b16 %v3402, %v3401
    %v3414 = vpack.c.b16 %v3404, %v3403
    %v3415 = vpack.c.b16 %v3406, %v3405
    %v3416 = vpack.c.b16 %v3408, %v3407
    %vm3417 = vsmask.f32 256
    %vm3418 = vsmask.f32 4368
    %vm3419 = vmor %vm3417, %vm3418
    %v3421 = vshrl.u32 %v3409, 16
    %v3423 = vrot.slane %v3421, 7
    %v3424 = vshll.u32 %v3409, 16
    %v3426 = vor.u32 %v3423, %v3424
    %v3428 = vshrl.u32 %v3410, 16
    %v3430 = vrot.slane %v3428, 7
    %v3431 = vshll.u32 %v3410, 16
    %v3433 = vor.u32 %v3430, %v3431
    %v3434 = vrot.slane %v3423, 4
    %v3436 = vshrl.u32 %v3411, 16
    %v3438 = vrot.slane %v3436, 7
    %v3439 = vshll.u32 %v3411, 16
    %v3441 = vor.u32 %v3438, %v3439
    %v3442 = vsel %vm3419, %v3434, %v3441
    %v3443 = vrot.slane %v3430, 4
    %v3445 = vshrl.u32 %v3412, 16
    %v3447 = vrot.slane %v3445, 7
    %v3448 = vshll.u32 %v3412, 16
    %v3450 = vor.u32 %v3447, %v3448
    %v3451 = vsel %vm3419, %v3443, %v3450
    %v3452 = vrot.slane %v3438, 4
    %v3453 = vrot.slane %v3447, 4
    %v3455 = vshrl.u32 %v3413, 16
    %v3457 = vrot.slane %v3455, 7
    %v3458 = vshll.u32 %v3413, 16
    %v3460 = vor.u32 %v3457, %v3458
    %v3462 = vshrl.u32 %v3414, 16
    %v3464 = vrot.slane %v3462, 7
    %v3465 = vshll.u32 %v3414, 16
    %v3467 = vor.u32 %v3464, %v3465
    %v3468 = vrot.slane %v3457, 4
    %v3470 = vshrl.u32 %v3415, 16
    %v3472 = vrot.slane %v3470, 7
    %v3473 = vshll.u32 %v3415, 16
    %v3475 = vor.u32 %v3472, %v3473
    %v3476 = vsel %vm3419, %v3468, %v3475
    %v3477 = vrot.slane %v3464, 4
    %v3479 = vshrl.u32 %v3416, 16
    %v3481 = vrot.slane %v3479, 7
    %v3482 = vshll.u32 %v3416, 16
    %v3484 = vor.u32 %v3481, %v3482
    %v3485 = vsel %vm3419, %v3477, %v3484
    %v3486 = vrot.slane %v3472, 4
    %v3487 = vrot.slane %v3481, 4
    %vm3500 = vcmask 1043456
    %vm3501 = vsmask.f32 7938
    %vm3502 = vmand %vm3500, %vm3501
    %vm3503 = vcmask 1047556
    %vm3504 = vsmask.f32 7954
    %vm3505 = vmand %vm3503, %vm3504
    %vm3506 = vmor %vm3505, %vm3502
    %v3507 = vld [vmem:[#allocation2] sm:$0xff]
    %v3508 = vsel %vm3506, %v3426, %v3507
    %3509 = vst [vmem:[#allocation2] sm:$0xff] %v3508
    %v3510 = vld [vmem:[#allocation2 + $0x8] sm:$0xff]
    %v3511 = vsel %vm3506, %v3433, %v3510
    %3512 = vst [vmem:[#allocation2 + $0x8] sm:$0xff] %v3511
    %3513 = vst [vmem:[#allocation2 + $0x10] sm:$0xff] %v3442
    %3514 = vst [vmem:[#allocation2 + $0x18] sm:$0xff] %v3451
    %vm3515 = vcmask 1040384
    %vm3516 = vmand %vm3515, %vm3417
    %vm3517 = vcmask 1044484
    %vm3518 = vsmask.f32 4352
    %vm3519 = vmand %vm3517, %vm3518
    %vm3520 = vmor %vm3519, %vm3516
    %v3521 = vld [vmem:[#allocation2 + $0x20] sm:$0x11]
    %v3522 = vsel %vm3520, %v3452, %v3521
    %3523 = vst [vmem:[#allocation2 + $0x20] sm:$0x11] %v3522
    %v3524 = vld [vmem:[#allocation2 + $0x28] sm:$0x11]
    %v3525 = vsel %vm3520, %v3453, %v3524
    %3526 = vst [vmem:[#allocation2 + $0x28] sm:$0x11] %v3525
    %v3527 = vld [vmem:[#allocation2 + $0x30] sm:$0xff]
    %v3528 = vsel %vm3506, %v3460, %v3527
    %3529 = vst [vmem:[#allocation2 + $0x30] sm:$0xff] %v3528
    %v3530 = vld [vmem:[#allocation2 + $0x38] sm:$0xff]
    %v3531 = vsel %vm3506, %v3467, %v3530
    %3532 = vst [vmem:[#allocation2 + $0x38] sm:$0xff] %v3531
    %3533 = vst [vmem:[#allocation2 + $0x40] sm:$0xff] %v3476
    %3534 = vst [vmem:[#allocation2 + $0x48] sm:$0xff] %v3485
    %v3535 = vld [vmem:[#allocation2 + $0x50] sm:$0x11]
    %v3536 = vsel %vm3520, %v3486, %v3535
    %3537 = vst [vmem:[#allocation2 + $0x50] sm:$0x11] %v3536
    %v3538 = vld [vmem:[#allocation2 + $0x58] sm:$0x11]
    %v3539 = vsel %vm3520, %v3487, %v3538
    %3540 = vst [vmem:[#allocation2 + $0x58] sm:$0x11] %v3539
    %v3541 = vld [vmem:[#allocation2] sm:$0xff]
    %v3542 = vld [vmem:[#allocation2 + $0x8] sm:$0xff]
    %v3543 = vld [vmem:[#allocation2 + $0x10] sm:$0xff]
    %v3544 = vld [vmem:[#allocation2 + $0x18] sm:$0xff]
    %v3545 = vld [vmem:[#allocation2 + $0x30] sm:$0xff]
    %v3546 = vld [vmem:[#allocation2 + $0x38] sm:$0xff]
    %v3547 = vld [vmem:[#allocation2 + $0x40] sm:$0xff]
    %v3548 = vld [vmem:[#allocation2 + $0x48] sm:$0xff]
    %v3549 = vld [vmem:[#allocation6] sm:$0xff]
    %v3550 = vld [vmem:[#allocation6 + $0x8] sm:$0xff]
    %v3551 = vld [vmem:[#allocation6 + $0x10] sm:$0xff]
    %v3552 = vld [vmem:[#allocation6 + $0x18] sm:$0xff]
    %v3553 = vld [vmem:[#allocation6 + $0x20] sm:$0xff]
    %v3554 = vld [vmem:[#allocation6 + $0x28] sm:$0xff]
    %v3555 = vld [vmem:[#allocation6 + $0x30] sm:$0xff]
    %v3556 = vld [vmem:[#allocation6 + $0x38] sm:$0xff]
    %v3557 = vld [vmem:[#allocation6 + $0x40] sm:$0xff]
    %v3558 = vld [vmem:[#allocation6 + $0x48] sm:$0xff]
    %v3559 = vld [vmem:[#allocation6 + $0x50] sm:$0xff]
    %v3560 = vld [vmem:[#allocation6 + $0x58] sm:$0xff]
    %v3561 = vld [vmem:[#allocation6 + $0x60] sm:$0xff]
    %v3562 = vld [vmem:[#allocation6 + $0x68] sm:$0xff]
    %v3563 = vld [vmem:[#allocation6 + $0x70] sm:$0xff]
    %v3564 = vld [vmem:[#allocation6 + $0x78] sm:$0xff]
    %v3565 = vld [vmem:[#allocation6 + $0x80] sm:$0xff]
    %v3566 = vld [vmem:[#allocation6 + $0x88] sm:$0xff]
    %v3567 = vld [vmem:[#allocation6 + $0x90] sm:$0xff]
    %v3568 = vld [vmem:[#allocation6 + $0x98] sm:$0xff]
    %v3569 = vld [vmem:[#allocation6 + $0xa0] sm:$0xff]
    %v3570 = vld [vmem:[#allocation6 + $0xa8] sm:$0xff]
    %v3571 = vld [vmem:[#allocation6 + $0xb0] sm:$0xff]
    %v3572 = vld [vmem:[#allocation6 + $0xb8] sm:$0xff]
    %v3573 = vld [vmem:[#allocation6 + $0xc0] sm:$0xff]
    %v3574 = vld [vmem:[#allocation6 + $0xc8] sm:$0xff]
    %v3575 = vld [vmem:[#allocation6 + $0xd0] sm:$0xff]
    %v3576 = vld [vmem:[#allocation6 + $0xd8] sm:$0xff]
    %v3577 = vld [vmem:[#allocation6 + $0xe0] sm:$0xff]
    %v3578 = vld [vmem:[#allocation6 + $0xe8] sm:$0xff]
    %v3579 = vld [vmem:[#allocation6 + $0xf0] sm:$0xff]
    %v3580 = vld [vmem:[#allocation6 + $0xf8] sm:$0xff]
    %v3581 = vld [vmem:[#allocation6 + $0x100] sm:$0xff]
    %v3582 = vld [vmem:[#allocation6 + $0x108] sm:$0xff]
    %v3583 = vld [vmem:[#allocation6 + $0x110] sm:$0xff]
    %v3584 = vld [vmem:[#allocation6 + $0x118] sm:$0xff]
    %v3585 = vld [vmem:[#allocation6 + $0x120] sm:$0xff]
    %v3586 = vld [vmem:[#allocation6 + $0x128] sm:$0xff]
    %v3587 = vld [vmem:[#allocation6 + $0x130] sm:$0xff]
    %v3588 = vld [vmem:[#allocation6 + $0x138] sm:$0xff]
    %v3589 = vld [vmem:[#allocation6 + $0x140] sm:$0xff]
    %v3590 = vld [vmem:[#allocation6 + $0x148] sm:$0xff]
    %v3591 = vld [vmem:[#allocation6 + $0x150] sm:$0xff]
    %v3592 = vld [vmem:[#allocation6 + $0x158] sm:$0xff]
    %v3593 = vld [vmem:[#allocation6 + $0x160] sm:$0xff]
    %v3594 = vld [vmem:[#allocation6 + $0x168] sm:$0xff]
    %v3595 = vld [vmem:[#allocation6 + $0x170] sm:$0xff]
    %v3596 = vld [vmem:[#allocation6 + $0x178] sm:$0xff]
    %v3597 = vld [vmem:[#allocation6 + $0x180] sm:$0xff]
    %v3598 = vld [vmem:[#allocation6 + $0x188] sm:$0xff]
    %v3599 = vld [vmem:[#allocation6 + $0x190] sm:$0xff]
    %v3600 = vld [vmem:[#allocation6 + $0x198] sm:$0xff]
    %v3601 = vld [vmem:[#allocation6 + $0x1a0] sm:$0xff]
    %v3602 = vld [vmem:[#allocation6 + $0x1a8] sm:$0xff]
    %v3603 = vld [vmem:[#allocation6 + $0x1b0] sm:$0xff]
    %v3604 = vld [vmem:[#allocation6 + $0x1b8] sm:$0xff]
    %v3605 = vld [vmem:[#allocation6 + $0x1c0] sm:$0xff]
    %v3606 = vld [vmem:[#allocation6 + $0x1c8] sm:$0xff]
    %v3607 = vld [vmem:[#allocation6 + $0x1d0] sm:$0xff]
    %v3608 = vld [vmem:[#allocation6 + $0x1d8] sm:$0xff]
    %v3609 = vld [vmem:[#allocation6 + $0x1e0] sm:$0xff]
    %v3610 = vld [vmem:[#allocation6 + $0x1e8] sm:$0xff]
    %v3611 = vld [vmem:[#allocation6 + $0x1f0] sm:$0xff]
    %v3612 = vld [vmem:[#allocation6 + $0x1f8] sm:$0xff]
    %v3613 = vld [vmem:[#allocation6 + $0x200] sm:$0xff]
    %v3614 = vld [vmem:[#allocation6 + $0x208] sm:$0xff]
    %v3615 = vld [vmem:[#allocation6 + $0x210] sm:$0xff]
    %v3616 = vld [vmem:[#allocation6 + $0x218] sm:$0xff]
    %v3617 = vld [vmem:[#allocation6 + $0x220] sm:$0xff]
    %v3618 = vld [vmem:[#allocation6 + $0x228] sm:$0xff]
    %v3619 = vld [vmem:[#allocation6 + $0x230] sm:$0xff]
    %v3620 = vld [vmem:[#allocation6 + $0x238] sm:$0xff]
    %v3621 = vld [vmem:[#allocation6 + $0x240] sm:$0xff]
    %v3622 = vld [vmem:[#allocation6 + $0x248] sm:$0xff]
    %v3623 = vld [vmem:[#allocation6 + $0x250] sm:$0xff]
    %v3624 = vld [vmem:[#allocation6 + $0x258] sm:$0xff]
    %v3625 = vld [vmem:[#allocation6 + $0x260] sm:$0xff]
    %v3626 = vld [vmem:[#allocation6 + $0x268] sm:$0xff]
    %v3627 = vld [vmem:[#allocation6 + $0x270] sm:$0xff]
    %v3628 = vld [vmem:[#allocation6 + $0x278] sm:$0xff]
    %v3629 = vld [vmem:[#allocation6 + $0x280] sm:$0xff]
    %v3630 = vld [vmem:[#allocation6 + $0x288] sm:$0xff]
    %v3631 = vld [vmem:[#allocation6 + $0x290] sm:$0xff]
    %v3632 = vld [vmem:[#allocation6 + $0x298] sm:$0xff]
    %v3633 = vld [vmem:[#allocation6 + $0x2a0] sm:$0xff]
    %v3634 = vld [vmem:[#allocation6 + $0x2a8] sm:$0xff]
    %v3635 = vld [vmem:[#allocation6 + $0x2b0] sm:$0xff]
    %v3636 = vld [vmem:[#allocation6 + $0x2b8] sm:$0xff]
    %v3637 = vld [vmem:[#allocation6 + $0x2c0] sm:$0xff]
    %v3638 = vld [vmem:[#allocation6 + $0x2c8] sm:$0xff]
    %v3639 = vld [vmem:[#allocation6 + $0x2d0] sm:$0xff]
    %v3640 = vld [vmem:[#allocation6 + $0x2d8] sm:$0xff]
    %v3641 = vld [vmem:[#allocation6 + $0x2e0] sm:$0xff]
    %v3642 = vld [vmem:[#allocation6 + $0x2e8] sm:$0xff]
    %v3643 = vld [vmem:[#allocation6 + $0x2f0] sm:$0xff]
    %v3644 = vld [vmem:[#allocation6 + $0x2f8] sm:$0xff]
    %v3645 = vld [vmem:[#allocation6 + $0x300] sm:$0xff]
    %v3646 = vld [vmem:[#allocation6 + $0x308] sm:$0xff]
    %v3647 = vld [vmem:[#allocation6 + $0x310] sm:$0xff]
    %v3648 = vld [vmem:[#allocation6 + $0x318] sm:$0xff]
    %v3649 = vld [vmem:[#allocation6 + $0x320] sm:$0xff]
    %v3650 = vld [vmem:[#allocation6 + $0x328] sm:$0xff]
    %v3651 = vld [vmem:[#allocation6 + $0x330] sm:$0xff]
    %v3652 = vld [vmem:[#allocation6 + $0x338] sm:$0xff]
    %v3653 = vld [vmem:[#allocation6 + $0x340] sm:$0xff]
    %v3654 = vld [vmem:[#allocation6 + $0x348] sm:$0xff]
    %v3655 = vld [vmem:[#allocation6 + $0x350] sm:$0xff]
    %v3656 = vld [vmem:[#allocation6 + $0x358] sm:$0xff]
    %v3657 = vld [vmem:[#allocation6 + $0x360] sm:$0xff]
    %v3658 = vld [vmem:[#allocation6 + $0x368] sm:$0xff]
    %v3659 = vld [vmem:[#allocation6 + $0x370] sm:$0xff]
    %v3660 = vld [vmem:[#allocation6 + $0x378] sm:$0xff]
    %v3661 = vld [vmem:[#allocation6 + $0x380] sm:$0xff]
    %v3662 = vld [vmem:[#allocation6 + $0x388] sm:$0xff]
    %v3663 = vld [vmem:[#allocation6 + $0x390] sm:$0xff]
    %v3664 = vld [vmem:[#allocation6 + $0x398] sm:$0xff]
    %v3665 = vld [vmem:[#allocation6 + $0x3a0] sm:$0xff]
    %v3666 = vld [vmem:[#allocation6 + $0x3a8] sm:$0xff]
    %v3667 = vld [vmem:[#allocation6 + $0x3b0] sm:$0xff]
    %v3668 = vld [vmem:[#allocation6 + $0x3b8] sm:$0xff]
    %v3669 = vld [vmem:[#allocation6 + $0x3c0] sm:$0xff]
    %v3670 = vld [vmem:[#allocation6 + $0x3c8] sm:$0xff]
    %v3671 = vld [vmem:[#allocation6 + $0x3d0] sm:$0xff]
    %v3672 = vld [vmem:[#allocation6 + $0x3d8] sm:$0xff]
    %v3673 = vld [vmem:[#allocation6 + $0x3e0] sm:$0xff]
    %v3674 = vld [vmem:[#allocation6 + $0x3e8] sm:$0xff]
    %v3675 = vld [vmem:[#allocation6 + $0x3f0] sm:$0xff]
    %v3676 = vld [vmem:[#allocation6 + $0x3f8] sm:$0xff]
    %v3677 = vld [vmem:[#allocation2 + $0x20] sm:$0x11]
    %v3678 = vld [vmem:[#allocation2 + $0x28] sm:$0x11]
    %v3679 = vld [vmem:[#allocation2 + $0x50] sm:$0x11]
    %v3680 = vld [vmem:[#allocation2 + $0x58] sm:$0x11]
    %vm3681 = vsmask.f32 3328
    %vm3682 = vsmask.f32 7440
    %vm3683 = vmor %vm3681, %vm3682
    %v3685 = vshrl.u32 %v3541, 16
    %v3687 = vrot.slane %v3685, 4
    %v3688 = vshll.u32 %v3541, 16
    %v3690 = vrot.slane %v3688, 5
    %v3691 = vor.u32 %v3687, %v3690
    %v3692 = vrot.slane %v3691, 4
    %v3694 = vshll.u32 %v3543, 16
    %v3696 = vrot.slane %v3694, 5
    %v3697 = vsel %vm3683, %v3692, %v3696
    %v3699 = vshrl.u32 %v3542, 16
    %v3701 = vrot.slane %v3699, 4
    %v3702 = vshll.u32 %v3542, 16
    %v3704 = vrot.slane %v3702, 5
    %v3705 = vor.u32 %v3701, %v3704
    %v3706 = vrot.slane %v3705, 4
    %v3708 = vshll.u32 %v3544, 16
    %v3710 = vrot.slane %v3708, 5
    %v3711 = vsel %vm3683, %v3706, %v3710
    %v3712 = vshrl.u32 %v3543, 16
    %v3714 = vrot.slane %v3712, 4
    %v3715 = vor.u32 %v3714, %v3696
    %v3716 = vrot.slane %v3715, 4
    %v3718 = vshll.u32 %v3677, 16
    %v3720 = vrot.slane %v3718, 5
    %v3721 = vsel %vm3683, %v3716, %v3720
    %v3722 = vshrl.u32 %v3544, 16
    %v3724 = vrot.slane %v3722, 4
    %v3725 = vor.u32 %v3724, %v3710
    %v3726 = vrot.slane %v3725, 4
    %v3728 = vshll.u32 %v3678, 16
    %v3730 = vrot.slane %v3728, 5
    %v3731 = vsel %vm3683, %v3726, %v3730
    %v3733 = vshrl.u32 %v3545, 16
    %v3735 = vrot.slane %v3733, 4
    %v3736 = vshll.u32 %v3545, 16
    %v3738 = vrot.slane %v3736, 5
    %v3739 = vor.u32 %v3735, %v3738
    %v3740 = vrot.slane %v3739, 4
    %v3742 = vshll.u32 %v3547, 16
    %v3744 = vrot.slane %v3742, 5
    %v3745 = vsel %vm3683, %v3740, %v3744
    %v3747 = vshrl.u32 %v3546, 16
    %v3749 = vrot.slane %v3747, 4
    %v3750 = vshll.u32 %v3546, 16
    %v3752 = vrot.slane %v3750, 5
    %v3753 = vor.u32 %v3749, %v3752
    %v3754 = vrot.slane %v3753, 4
    %v3756 = vshll.u32 %v3548, 16
    %v3758 = vrot.slane %v3756, 5
    %v3759 = vsel %vm3683, %v3754, %v3758
    %v3760 = vshrl.u32 %v3547, 16
    %v3762 = vrot.slane %v3760, 4
    %v3763 = vor.u32 %v3762, %v3744
    %v3764 = vrot.slane %v3763, 4
    %v3766 = vshll.u32 %v3679, 16
    %v3768 = vrot.slane %v3766, 5
    %v3769 = vsel %vm3683, %v3764, %v3768
    %v3770 = vshrl.u32 %v3548, 16
    %v3772 = vrot.slane %v3770, 4
    %v3773 = vor.u32 %v3772, %v3758
    %v3774 = vrot.slane %v3773, 4
    %v3776 = vshll.u32 %v3680, 16
    %v3778 = vrot.slane %v3776, 5
    %v3779 = vsel %vm3683, %v3774, %v3778
    %s3780 = scalar_lea.vmem [#allocation6], 1024
    %v3781 = vld [vmem:[%s3780] sm:$0xff]
    %v3782 = vld [vmem:[%s3780 + $0x8] sm:$0xff]
    %v3783 = vld [vmem:[%s3780 + $0x10] sm:$0xff]
    %v3784 = vld [vmem:[%s3780 + $0x18] sm:$0xff]
    %v3785 = vld [vmem:[%s3780 + $0x20] sm:$0xff]
    %v3786 = vld [vmem:[%s3780 + $0x28] sm:$0xff]
    %v3787 = vld [vmem:[%s3780 + $0x30] sm:$0xff]
    %v3788 = vld [vmem:[%s3780 + $0x38] sm:$0xff]
    %v3789 = vld [vmem:[%s3780 + $0x40] sm:$0xff]
    %v3790 = vld [vmem:[%s3780 + $0x48] sm:$0xff]
    %v3791 = vld [vmem:[%s3780 + $0x50] sm:$0xff]
    %v3792 = vld [vmem:[%s3780 + $0x58] sm:$0xff]
    %v3793 = vld [vmem:[%s3780 + $0x60] sm:$0xff]
    %v3794 = vld [vmem:[%s3780 + $0x68] sm:$0xff]
    %v3795 = vld [vmem:[%s3780 + $0x70] sm:$0xff]
    %v3796 = vld [vmem:[%s3780 + $0x78] sm:$0xff]
    %v3797 = vld [vmem:[%s3780 + $0x80] sm:$0xff]
    %v3798 = vld [vmem:[%s3780 + $0x88] sm:$0xff]
    %v3799 = vld [vmem:[%s3780 + $0x90] sm:$0xff]
    %v3800 = vld [vmem:[%s3780 + $0x98] sm:$0xff]
    %v3801 = vld [vmem:[%s3780 + $0xa0] sm:$0xff]
    %v3802 = vld [vmem:[%s3780 + $0xa8] sm:$0xff]
    %v3803 = vld [vmem:[%s3780 + $0xb0] sm:$0xff]
    %v3804 = vld [vmem:[%s3780 + $0xb8] sm:$0xff]
    %v3805 = vld [vmem:[%s3780 + $0xc0] sm:$0xff]
    %v3806 = vld [vmem:[%s3780 + $0xc8] sm:$0xff]
    %v3807 = vld [vmem:[%s3780 + $0xd0] sm:$0xff]
    %v3808 = vld [vmem:[%s3780 + $0xd8] sm:$0xff]
    %v3809 = vld [vmem:[%s3780 + $0xe0] sm:$0xff]
    %v3810 = vld [vmem:[%s3780 + $0xe8] sm:$0xff]
    %v3811 = vld [vmem:[%s3780 + $0xf0] sm:$0xff]
    %v3812 = vld [vmem:[%s3780 + $0xf8] sm:$0xff]
    %v3813 = vld [vmem:[%s3780 + $0x100] sm:$0xff]
    %v3814 = vld [vmem:[%s3780 + $0x108] sm:$0xff]
    %v3815 = vld [vmem:[%s3780 + $0x110] sm:$0xff]
    %v3816 = vld [vmem:[%s3780 + $0x118] sm:$0xff]
    %v3817 = vld [vmem:[%s3780 + $0x120] sm:$0xff]
    %v3818 = vld [vmem:[%s3780 + $0x128] sm:$0xff]
    %v3819 = vld [vmem:[%s3780 + $0x130] sm:$0xff]
    %v3820 = vld [vmem:[%s3780 + $0x138] sm:$0xff]
    %v3821 = vld [vmem:[%s3780 + $0x140] sm:$0xff]
    %v3822 = vld [vmem:[%s3780 + $0x148] sm:$0xff]
    %v3823 = vld [vmem:[%s3780 + $0x150] sm:$0xff]
    %v3824 = vld [vmem:[%s3780 + $0x158] sm:$0xff]
    %v3825 = vld [vmem:[%s3780 + $0x160] sm:$0xff]
    %v3826 = vld [vmem:[%s3780 + $0x168] sm:$0xff]
    %v3827 = vld [vmem:[%s3780 + $0x170] sm:$0xff]
    %v3828 = vld [vmem:[%s3780 + $0x178] sm:$0xff]
    %v3829 = vld [vmem:[%s3780 + $0x180] sm:$0xff]
    %v3830 = vld [vmem:[%s3780 + $0x188] sm:$0xff]
    %v3831 = vld [vmem:[%s3780 + $0x190] sm:$0xff]
    %v3832 = vld [vmem:[%s3780 + $0x198] sm:$0xff]
    %v3833 = vld [vmem:[%s3780 + $0x1a0] sm:$0xff]
    %v3834 = vld [vmem:[%s3780 + $0x1a8] sm:$0xff]
    %v3835 = vld [vmem:[%s3780 + $0x1b0] sm:$0xff]
    %v3836 = vld [vmem:[%s3780 + $0x1b8] sm:$0xff]
    %v3837 = vld [vmem:[%s3780 + $0x1c0] sm:$0xff]
    %v3838 = vld [vmem:[%s3780 + $0x1c8] sm:$0xff]
    %v3839 = vld [vmem:[%s3780 + $0x1d0] sm:$0xff]
    %v3840 = vld [vmem:[%s3780 + $0x1d8] sm:$0xff]
    %v3841 = vld [vmem:[%s3780 + $0x1e0] sm:$0xff]
    %v3842 = vld [vmem:[%s3780 + $0x1e8] sm:$0xff]
    %v3843 = vld [vmem:[%s3780 + $0x1f0] sm:$0xff]
    %v3844 = vld [vmem:[%s3780 + $0x1f8] sm:$0xff]
    %v3845 = vld [vmem:[%s3780 + $0x200] sm:$0xff]
    %v3846 = vld [vmem:[%s3780 + $0x208] sm:$0xff]
    %v3847 = vld [vmem:[%s3780 + $0x210] sm:$0xff]
    %v3848 = vld [vmem:[%s3780 + $0x218] sm:$0xff]
    %v3849 = vld [vmem:[%s3780 + $0x220] sm:$0xff]
    %v3850 = vld [vmem:[%s3780 + $0x228] sm:$0xff]
    %v3851 = vld [vmem:[%s3780 + $0x230] sm:$0xff]
    %v3852 = vld [vmem:[%s3780 + $0x238] sm:$0xff]
    %v3853 = vld [vmem:[%s3780 + $0x240] sm:$0xff]
    %v3854 = vld [vmem:[%s3780 + $0x248] sm:$0xff]
    %v3855 = vld [vmem:[%s3780 + $0x250] sm:$0xff]
    %v3856 = vld [vmem:[%s3780 + $0x258] sm:$0xff]
    %v3857 = vld [vmem:[%s3780 + $0x260] sm:$0xff]
    %v3858 = vld [vmem:[%s3780 + $0x268] sm:$0xff]
    %v3859 = vld [vmem:[%s3780 + $0x270] sm:$0xff]
    %v3860 = vld [vmem:[%s3780 + $0x278] sm:$0xff]
    %v3861 = vld [vmem:[%s3780 + $0x280] sm:$0xff]
    %v3862 = vld [vmem:[%s3780 + $0x288] sm:$0xff]
    %v3863 = vld [vmem:[%s3780 + $0x290] sm:$0xff]
    %v3864 = vld [vmem:[%s3780 + $0x298] sm:$0xff]
    %v3865 = vld [vmem:[%s3780 + $0x2a0] sm:$0xff]
    %v3866 = vld [vmem:[%s3780 + $0x2a8] sm:$0xff]
    %v3867 = vld [vmem:[%s3780 + $0x2b0] sm:$0xff]
    %v3868 = vld [vmem:[%s3780 + $0x2b8] sm:$0xff]
    %v3869 = vld [vmem:[%s3780 + $0x2c0] sm:$0xff]
    %v3870 = vld [vmem:[%s3780 + $0x2c8] sm:$0xff]
    %v3871 = vld [vmem:[%s3780 + $0x2d0] sm:$0xff]
    %v3872 = vld [vmem:[%s3780 + $0x2d8] sm:$0xff]
    %v3873 = vld [vmem:[%s3780 + $0x2e0] sm:$0xff]
    %v3874 = vld [vmem:[%s3780 + $0x2e8] sm:$0xff]
    %v3875 = vld [vmem:[%s3780 + $0x2f0] sm:$0xff]
    %v3876 = vld [vmem:[%s3780 + $0x2f8] sm:$0xff]
    %v3877 = vld [vmem:[%s3780 + $0x300] sm:$0xff]
    %v3878 = vld [vmem:[%s3780 + $0x308] sm:$0xff]
    %v3879 = vld [vmem:[%s3780 + $0x310] sm:$0xff]
    %v3880 = vld [vmem:[%s3780 + $0x318] sm:$0xff]
    %v3881 = vld [vmem:[%s3780 + $0x320] sm:$0xff]
    %v3882 = vld [vmem:[%s3780 + $0x328] sm:$0xff]
    %v3883 = vld [vmem:[%s3780 + $0x330] sm:$0xff]
    %v3884 = vld [vmem:[%s3780 + $0x338] sm:$0xff]
    %v3885 = vld [vmem:[%s3780 + $0x340] sm:$0xff]
    %v3886 = vld [vmem:[%s3780 + $0x348] sm:$0xff]
    %v3887 = vld [vmem:[%s3780 + $0x350] sm:$0xff]
    %v3888 = vld [vmem:[%s3780 + $0x358] sm:$0xff]
    %v3889 = vld [vmem:[%s3780 + $0x360] sm:$0xff]
    %v3890 = vld [vmem:[%s3780 + $0x368] sm:$0xff]
    %v3891 = vld [vmem:[%s3780 + $0x370] sm:$0xff]
    %v3892 = vld [vmem:[%s3780 + $0x378] sm:$0xff]
    %v3893 = vld [vmem:[%s3780 + $0x380] sm:$0xff]
    %v3894 = vld [vmem:[%s3780 + $0x388] sm:$0xff]
    %v3895 = vld [vmem:[%s3780 + $0x390] sm:$0xff]
    %v3896 = vld [vmem:[%s3780 + $0x398] sm:$0xff]
    %v3897 = vld [vmem:[%s3780 + $0x3a0] sm:$0xff]
    %v3898 = vld [vmem:[%s3780 + $0x3a8] sm:$0xff]
    %v3899 = vld [vmem:[%s3780 + $0x3b0] sm:$0xff]
    %v3900 = vld [vmem:[%s3780 + $0x3b8] sm:$0xff]
    %v3901 = vld [vmem:[%s3780 + $0x3c0] sm:$0xff]
    %v3902 = vld [vmem:[%s3780 + $0x3c8] sm:$0xff]
    %v3903 = vld [vmem:[%s3780 + $0x3d0] sm:$0xff]
    %v3904 = vld [vmem:[%s3780 + $0x3d8] sm:$0xff]
    %v3905 = vld [vmem:[%s3780 + $0x3e0] sm:$0xff]
    %v3906 = vld [vmem:[%s3780 + $0x3e8] sm:$0xff]
    %v3907 = vld [vmem:[%s3780 + $0x3f0] sm:$0xff]
    %v3908 = vld [vmem:[%s3780 + $0x3f8] sm:$0xff]
    %v3909 = vunpack.c.l.b16 %v3697
    %v3910 = vunpack.c.h.b16 %v3697
    %v3911 = vunpack.c.l.b16 %v3711
    %v3912 = vunpack.c.h.b16 %v3711
    %v3913 = vunpack.c.l.b16 %v3721
    %v3914 = vunpack.c.h.b16 %v3721
    %v3915 = vunpack.c.l.b16 %v3731
    %v3916 = vunpack.c.h.b16 %v3731
    %v3917 = vunpack.c.l.b16 %v3745
    %v3918 = vunpack.c.h.b16 %v3745
    %v3919 = vunpack.c.l.b16 %v3759
    %v3920 = vunpack.c.h.b16 %v3759
    %v3921 = vunpack.c.l.b16 %v3769
    %v3922 = vunpack.c.h.b16 %v3769
    %v3923 = vunpack.c.l.b16 %v3779
    %v3924 = vunpack.c.h.b16 %v3779
    %v3925 = vpack.c.b16 %v3913, %v3909
    %v3926 = vpack.c.b16 %v3914, %v3910
    %v3927 = vpack.c.b16 %v3915, %v3911
    %v3928 = vpack.c.b16 %v3916, %v3912
    %v3929 = vpack.c.b16 %v3921, %v3917
    %v3930 = vpack.c.b16 %v3922, %v3918
    %v3931 = vpack.c.b16 %v3923, %v3919
    %v3932 = vpack.c.b16 %v3924, %v3920
    %v4069 = vunpack.c.l.b16 %v3781
    %v4070 = vunpack.c.h.b16 %v3781
    %v4071 = vunpack.c.l.b16 %v3782
    %v4072 = vunpack.c.h.b16 %v3782
    %v4073 = vunpack.c.l.b16 %v3783
    %v4074 = vunpack.c.h.b16 %v3783
    %v4075 = vunpack.c.l.b16 %v3784
    %v4076 = vunpack.c.h.b16 %v3784
    %v4077 = vunpack.c.l.b16 %v3785
    %v4078 = vunpack.c.h.b16 %v3785
    %v4079 = vunpack.c.l.b16 %v3786
    %v4080 = vunpack.c.h.b16 %v3786
    %v4081 = vunpack.c.l.b16 %v3787
    %v4082 = vunpack.c.h.b16 %v3787
    %v4083 = vunpack.c.l.b16 %v3788
    %v4084 = vunpack.c.h.b16 %v3788
    %v4085 = vunpack.c.l.b16 %v3789
    %v4086 = vunpack.c.h.b16 %v3789
    %v4087 = vunpack.c.l.b16 %v3790
    %v4088 = vunpack.c.h.b16 %v3790
    %v4089 = vunpack.c.l.b16 %v3791
    %v4090 = vunpack.c.h.b16 %v3791
    %v4091 = vunpack.c.l.b16 %v3792
    %v4092 = vunpack.c.h.b16 %v3792
    %v4093 = vunpack.c.l.b16 %v3793
    %v4094 = vunpack.c.h.b16 %v3793
    %v4095 = vunpack.c.l.b16 %v3794
    %v4096 = vunpack.c.h.b16 %v3794
    %v4097 = vunpack.c.l.b16 %v3795
    %v4098 = vunpack.c.h.b16 %v3795
    %v4099 = vunpack.c.l.b16 %v3796
    %v4100 = vunpack.c.h.b16 %v3796
    %v4101 = vunpack.c.l.b16 %v3797
    %v4102 = vunpack.c.h.b16 %v3797
    %v4103 = vunpack.c.l.b16 %v3798
    %v4104 = vunpack.c.h.b16 %v3798
    %v4105 = vunpack.c.l.b16 %v3799
    %v4106 = vunpack.c.h.b16 %v3799
    %v4107 = vunpack.c.l.b16 %v3800
    %v4108 = vunpack.c.h.b16 %v3800
    %v4109 = vunpack.c.l.b16 %v3801
    %v4110 = vunpack.c.h.b16 %v3801
    %v4111 = vunpack.c.l.b16 %v3802
    %v4112 = vunpack.c.h.b16 %v3802
    %v4113 = vunpack.c.l.b16 %v3803
    %v4114 = vunpack.c.h.b16 %v3803
    %v4115 = vunpack.c.l.b16 %v3804
    %v4116 = vunpack.c.h.b16 %v3804
    %v4117 = vunpack.c.l.b16 %v3805
    %v4118 = vunpack.c.h.b16 %v3805
    %v4119 = vunpack.c.l.b16 %v3806
    %v4120 = vunpack.c.h.b16 %v3806
    %v4121 = vunpack.c.l.b16 %v3807
    %v4122 = vunpack.c.h.b16 %v3807
    %v4123 = vunpack.c.l.b16 %v3808
    %v4124 = vunpack.c.h.b16 %v3808
    %v4125 = vunpack.c.l.b16 %v3809
    %v4126 = vunpack.c.h.b16 %v3809
    %v4127 = vunpack.c.l.b16 %v3810
    %v4128 = vunpack.c.h.b16 %v3810
    %v4129 = vunpack.c.l.b16 %v3811
    %v4130 = vunpack.c.h.b16 %v3811
    %v4131 = vunpack.c.l.b16 %v3812
    %v4132 = vunpack.c.h.b16 %v3812
    %v4133 = vunpack.c.l.b16 %v3813
    %v4134 = vunpack.c.h.b16 %v3813
    %v4135 = vunpack.c.l.b16 %v3814
    %v4136 = vunpack.c.h.b16 %v3814
    %v4137 = vunpack.c.l.b16 %v3815
    %v4138 = vunpack.c.h.b16 %v3815
    %v4139 = vunpack.c.l.b16 %v3816
    %v4140 = vunpack.c.h.b16 %v3816
    %v4141 = vunpack.c.l.b16 %v3817
    %v4142 = vunpack.c.h.b16 %v3817
    %v4143 = vunpack.c.l.b16 %v3818
    %v4144 = vunpack.c.h.b16 %v3818
    %v4145 = vunpack.c.l.b16 %v3819
    %v4146 = vunpack.c.h.b16 %v3819
    %v4147 = vunpack.c.l.b16 %v3820
    %v4148 = vunpack.c.h.b16 %v3820
    %v4149 = vunpack.c.l.b16 %v3821
    %v4150 = vunpack.c.h.b16 %v3821
    %v4151 = vunpack.c.l.b16 %v3822
    %v4152 = vunpack.c.h.b16 %v3822
    %v4153 = vunpack.c.l.b16 %v3823
    %v4154 = vunpack.c.h.b16 %v3823
    %v4155 = vunpack.c.l.b16 %v3824
    %v4156 = vunpack.c.h.b16 %v3824
    %v4157 = vunpack.c.l.b16 %v3825
    %v4158 = vunpack.c.h.b16 %v3825
    %v4159 = vunpack.c.l.b16 %v3826
    %v4160 = vunpack.c.h.b16 %v3826
    %v4161 = vunpack.c.l.b16 %v3827
    %v4162 = vunpack.c.h.b16 %v3827
    %v4163 = vunpack.c.l.b16 %v3828
    %v4164 = vunpack.c.h.b16 %v3828
    %v4165 = vunpack.c.l.b16 %v3829
    %v4166 = vunpack.c.h.b16 %v3829
    %v4167 = vunpack.c.l.b16 %v3830
    %v4168 = vunpack.c.h.b16 %v3830
    %v4169 = vunpack.c.l.b16 %v3831
    %v4170 = vunpack.c.h.b16 %v3831
    %v4171 = vunpack.c.l.b16 %v3832
    %v4172 = vunpack.c.h.b16 %v3832
    %v4173 = vunpack.c.l.b16 %v3833
    %v4174 = vunpack.c.h.b16 %v3833
    %v4175 = vunpack.c.l.b16 %v3834
    %v4176 = vunpack.c.h.b16 %v3834
    %v4177 = vunpack.c.l.b16 %v3835
    %v4178 = vunpack.c.h.b16 %v3835
    %v4179 = vunpack.c.l.b16 %v3836
    %v4180 = vunpack.c.h.b16 %v3836
    %v4181 = vunpack.c.l.b16 %v3837
    %v4182 = vunpack.c.h.b16 %v3837
    %v4183 = vunpack.c.l.b16 %v3838
    %v4184 = vunpack.c.h.b16 %v3838
    %v4185 = vunpack.c.l.b16 %v3839
    %v4186 = vunpack.c.h.b16 %v3839
    %v4187 = vunpack.c.l.b16 %v3840
    %v4188 = vunpack.c.h.b16 %v3840
    %v4189 = vunpack.c.l.b16 %v3841
    %v4190 = vunpack.c.h.b16 %v3841
    %v4191 = vunpack.c.l.b16 %v3842
    %v4192 = vunpack.c.h.b16 %v3842
    %v4193 = vunpack.c.l.b16 %v3843
    %v4194 = vunpack.c.h.b16 %v3843
    %v4195 = vunpack.c.l.b16 %v3844
    %v4196 = vunpack.c.h.b16 %v3844
    %v4197 = vunpack.c.l.b16 %v3845
    %v4198 = vunpack.c.h.b16 %v3845
    %v4199 = vunpack.c.l.b16 %v3846
    %v4200 = vunpack.c.h.b16 %v3846
    %v4201 = vunpack.c.l.b16 %v3847
    %v4202 = vunpack.c.h.b16 %v3847
    %v4203 = vunpack.c.l.b16 %v3848
    %v4204 = vunpack.c.h.b16 %v3848
    %v4205 = vunpack.c.l.b16 %v3849
    %v4206 = vunpack.c.h.b16 %v3849
    %v4207 = vunpack.c.l.b16 %v3850
    %v4208 = vunpack.c.h.b16 %v3850
    %v4209 = vunpack.c.l.b16 %v3851
    %v4210 = vunpack.c.h.b16 %v3851
    %v4211 = vunpack.c.l.b16 %v3852
    %v4212 = vunpack.c.h.b16 %v3852
    %v4213 = vunpack.c.l.b16 %v3853
    %v4214 = vunpack.c.h.b16 %v3853
    %v4215 = vunpack.c.l.b16 %v3854
    %v4216 = vunpack.c.h.b16 %v3854
    %v4217 = vunpack.c.l.b16 %v3855
    %v4218 = vunpack.c.h.b16 %v3855
    %v4219 = vunpack.c.l.b16 %v3856
    %v4220 = vunpack.c.h.b16 %v3856
    %v4221 = vunpack.c.l.b16 %v3857
    %v4222 = vunpack.c.h.b16 %v3857
    %v4223 = vunpack.c.l.b16 %v3858
    %v4224 = vunpack.c.h.b16 %v3858
    %v4225 = vunpack.c.l.b16 %v3859
    %v4226 = vunpack.c.h.b16 %v3859
    %v4227 = vunpack.c.l.b16 %v3860
    %v4228 = vunpack.c.h.b16 %v3860
    %v4229 = vunpack.c.l.b16 %v3861
    %v4230 = vunpack.c.h.b16 %v3861
    %v4231 = vunpack.c.l.b16 %v3862
    %v4232 = vunpack.c.h.b16 %v3862
    %v4233 = vunpack.c.l.b16 %v3863
    %v4234 = vunpack.c.h.b16 %v3863
    %v4235 = vunpack.c.l.b16 %v3864
    %v4236 = vunpack.c.h.b16 %v3864
    %v4237 = vunpack.c.l.b16 %v3865
    %v4238 = vunpack.c.h.b16 %v3865
    %v4239 = vunpack.c.l.b16 %v3866
    %v4240 = vunpack.c.h.b16 %v3866
    %v4241 = vunpack.c.l.b16 %v3867
    %v4242 = vunpack.c.h.b16 %v3867
    %v4243 = vunpack.c.l.b16 %v3868
    %v4244 = vunpack.c.h.b16 %v3868
    %v4245 = vunpack.c.l.b16 %v3869
    %v4246 = vunpack.c.h.b16 %v3869
    %v4247 = vunpack.c.l.b16 %v3870
    %v4248 = vunpack.c.h.b16 %v3870
    %v4249 = vunpack.c.l.b16 %v3871
    %v4250 = vunpack.c.h.b16 %v3871
    %v4251 = vunpack.c.l.b16 %v3872
    %v4252 = vunpack.c.h.b16 %v3872
    %v4253 = vunpack.c.l.b16 %v3873
    %v4254 = vunpack.c.h.b16 %v3873
    %v4255 = vunpack.c.l.b16 %v3874
    %v4256 = vunpack.c.h.b16 %v3874
    %v4257 = vunpack.c.l.b16 %v3875
    %v4258 = vunpack.c.h.b16 %v3875
    %v4259 = vunpack.c.l.b16 %v3876
    %v4260 = vunpack.c.h.b16 %v3876
    %v4261 = vunpack.c.l.b16 %v3877
    %v4262 = vunpack.c.h.b16 %v3877
    %v4263 = vunpack.c.l.b16 %v3878
    %v4264 = vunpack.c.h.b16 %v3878
    %v4265 = vunpack.c.l.b16 %v3879
    %v4266 = vunpack.c.h.b16 %v3879
    %v4267 = vunpack.c.l.b16 %v3880
    %v4268 = vunpack.c.h.b16 %v3880
    %v4269 = vunpack.c.l.b16 %v3881
    %v4270 = vunpack.c.h.b16 %v3881
    %v4271 = vunpack.c.l.b16 %v3882
    %v4272 = vunpack.c.h.b16 %v3882
    %v4273 = vunpack.c.l.b16 %v3883
    %v4274 = vunpack.c.h.b16 %v3883
    %v4275 = vunpack.c.l.b16 %v3884
    %v4276 = vunpack.c.h.b16 %v3884
    %v4277 = vunpack.c.l.b16 %v3885
    %v4278 = vunpack.c.h.b16 %v3885
    %v4279 = vunpack.c.l.b16 %v3886
    %v4280 = vunpack.c.h.b16 %v3886
    %v4281 = vunpack.c.l.b16 %v3887
    %v4282 = vunpack.c.h.b16 %v3887
    %v4283 = vunpack.c.l.b16 %v3888
    %v4284 = vunpack.c.h.b16 %v3888
    %v4285 = vunpack.c.l.b16 %v3889
    %v4286 = vunpack.c.h.b16 %v3889
    %v4287 = vunpack.c.l.b16 %v3890
    %v4288 = vunpack.c.h.b16 %v3890
    %v4289 = vunpack.c.l.b16 %v3891
    %v4290 = vunpack.c.h.b16 %v3891
    %v4291 = vunpack.c.l.b16 %v3892
    %v4292 = vunpack.c.h.b16 %v3892
    %v4293 = vunpack.c.l.b16 %v3893
    %v4294 = vunpack.c.h.b16 %v3893
    %v4295 = vunpack.c.l.b16 %v3894
    %v4296 = vunpack.c.h.b16 %v3894
    %v4297 = vunpack.c.l.b16 %v3895
    %v4298 = vunpack.c.h.b16 %v3895
    %v4299 = vunpack.c.l.b16 %v3896
    %v4300 = vunpack.c.h.b16 %v3896
    %v4301 = vunpack.c.l.b16 %v3897
    %v4302 = vunpack.c.h.b16 %v3897
    %v4303 = vunpack.c.l.b16 %v3898
    %v4304 = vunpack.c.h.b16 %v3898
    %v4305 = vunpack.c.l.b16 %v3899
    %v4306 = vunpack.c.h.b16 %v3899
    %v4307 = vunpack.c.l.b16 %v3900
    %v4308 = vunpack.c.h.b16 %v3900
    %v4309 = vunpack.c.l.b16 %v3901
    %v4310 = vunpack.c.h.b16 %v3901
    %v4311 = vunpack.c.l.b16 %v3902
    %v4312 = vunpack.c.h.b16 %v3902
    %v4313 = vunpack.c.l.b16 %v3903
    %v4314 = vunpack.c.h.b16 %v3903
    %v4315 = vunpack.c.l.b16 %v3904
    %v4316 = vunpack.c.h.b16 %v3904
    %v4317 = vunpack.c.l.b16 %v3905
    %v4318 = vunpack.c.h.b16 %v3905
    %v4319 = vunpack.c.l.b16 %v3906
    %v4320 = vunpack.c.h.b16 %v3906
    %v4321 = vunpack.c.l.b16 %v3907
    %v4322 = vunpack.c.h.b16 %v3907
    %v4323 = vunpack.c.l.b16 %v3908
    %v4324 = vunpack.c.h.b16 %v3908
    %v4325 = vpack.c.b16 %v4073, %v4069
    %v4326 = vpack.c.b16 %v4074, %v4070
    %v4327 = vpack.c.b16 %v4075, %v4071
    %v4328 = vpack.c.b16 %v4076, %v4072
    %v4329 = vpack.c.b16 %v4081, %v4077
    %v4330 = vpack.c.b16 %v4082, %v4078
    %v4331 = vpack.c.b16 %v4083, %v4079
    %v4332 = vpack.c.b16 %v4084, %v4080
    %v4333 = vpack.c.b16 %v4089, %v4085
    %v4334 = vpack.c.b16 %v4090, %v4086
    %v4335 = vpack.c.b16 %v4091, %v4087
    %v4336 = vpack.c.b16 %v4092, %v4088
    %v4337 = vpack.c.b16 %v4097, %v4093
    %v4338 = vpack.c.b16 %v4098, %v4094
    %v4339 = vpack.c.b16 %v4099, %v4095
    %v4340 = vpack.c.b16 %v4100, %v4096
    %v4341 = vpack.c.b16 %v4105, %v4101
    %v4342 = vpack.c.b16 %v4106, %v4102
    %v4343 = vpack.c.b16 %v4107, %v4103
    %v4344 = vpack.c.b16 %v4108, %v4104
    %v4345 = vpack.c.b16 %v4113, %v4109
    %v4346 = vpack.c.b16 %v4114, %v4110
    %v4347 = vpack.c.b16 %v4115, %v4111
    %v4348 = vpack.c.b16 %v4116, %v4112
    %v4349 = vpack.c.b16 %v4121, %v4117
    %v4350 = vpack.c.b16 %v4122, %v4118
    %v4351 = vpack.c.b16 %v4123, %v4119
    %v4352 = vpack.c.b16 %v4124, %v4120
    %v4353 = vpack.c.b16 %v4129, %v4125
    %v4354 = vpack.c.b16 %v4130, %v4126
    %v4355 = vpack.c.b16 %v4131, %v4127
    %v4356 = vpack.c.b16 %v4132, %v4128
    %v4357 = vpack.c.b16 %v4137, %v4133
    %v4358 = vpack.c.b16 %v4138, %v4134
    %v4359 = vpack.c.b16 %v4139, %v4135
    %v4360 = vpack.c.b16 %v4140, %v4136
    %v4361 = vpack.c.b16 %v4145, %v4141
    %v4362 = vpack.c.b16 %v4146, %v4142
    %v4363 = vpack.c.b16 %v4147, %v4143
    %v4364 = vpack.c.b16 %v4148, %v4144
    %v4365 = vpack.c.b16 %v4153, %v4149
    %v4366 = vpack.c.b16 %v4154, %v4150
    %v4367 = vpack.c.b16 %v4155, %v4151
    %v4368 = vpack.c.b16 %v4156, %v4152
    %v4369 = vpack.c.b16 %v4161, %v4157
    %v4370 = vpack.c.b16 %v4162, %v4158
    %v4371 = vpack.c.b16 %v4163, %v4159
    %v4372 = vpack.c.b16 %v4164, %v4160
    %v4373 = vpack.c.b16 %v4169, %v4165
    %v4374 = vpack.c.b16 %v4170, %v4166
    %v4375 = vpack.c.b16 %v4171, %v4167
    %v4376 = vpack.c.b16 %v4172, %v4168
    %v4377 = vpack.c.b16 %v4177, %v4173
    %v4378 = vpack.c.b16 %v4178, %v4174
    %v4379 = vpack.c.b16 %v4179, %v4175
    %v4380 = vpack.c.b16 %v4180, %v4176
    %v4381 = vpack.c.b16 %v4185, %v4181
    %v4382 = vpack.c.b16 %v4186, %v4182
    %v4383 = vpack.c.b16 %v4187, %v4183
    %v4384 = vpack.c.b16 %v4188, %v4184
    %v4385 = vpack.c.b16 %v4193, %v4189
    %v4386 = vpack.c.b16 %v4194, %v4190
    %v4387 = vpack.c.b16 %v4195, %v4191
    %v4388 = vpack.c.b16 %v4196, %v4192
    %v4389 = vpack.c.b16 %v4201, %v4197
    %v4390 = vpack.c.b16 %v4202, %v4198
    %v4391 = vpack.c.b16 %v4203, %v4199
    %v4392 = vpack.c.b16 %v4204, %v4200
    %v4393 = vpack.c.b16 %v4209, %v4205
    %v4394 = vpack.c.b16 %v4210, %v4206
    %v4395 = vpack.c.b16 %v4211, %v4207
    %v4396 = vpack.c.b16 %v4212, %v4208
    %v4397 = vpack.c.b16 %v4217, %v4213
    %v4398 = vpack.c.b16 %v4218, %v4214
    %v4399 = vpack.c.b16 %v4219, %v4215
    %v4400 = vpack.c.b16 %v4220, %v4216
    %v4401 = vpack.c.b16 %v4225, %v4221
    %v4402 = vpack.c.b16 %v4226, %v4222
    %v4403 = vpack.c.b16 %v4227, %v4223
    %v4404 = vpack.c.b16 %v4228, %v4224
    %v4405 = vpack.c.b16 %v4233, %v4229
    %v4406 = vpack.c.b16 %v4234, %v4230
    %v4407 = vpack.c.b16 %v4235, %v4231
    %v4408 = vpack.c.b16 %v4236, %v4232
    %v4409 = vpack.c.b16 %v4241, %v4237
    %v4410 = vpack.c.b16 %v4242, %v4238
    %v4411 = vpack.c.b16 %v4243, %v4239
    %v4412 = vpack.c.b16 %v4244, %v4240
    %v4413 = vpack.c.b16 %v4249, %v4245
    %v4414 = vpack.c.b16 %v4250, %v4246
    %v4415 = vpack.c.b16 %v4251, %v4247
    %v4416 = vpack.c.b16 %v4252, %v4248
    %v4417 = vpack.c.b16 %v4257, %v4253
    %v4418 = vpack.c.b16 %v4258, %v4254
    %v4419 = vpack.c.b16 %v4259, %v4255
    %v4420 = vpack.c.b16 %v4260, %v4256
    %v4421 = vpack.c.b16 %v4265, %v4261
    %v4422 = vpack.c.b16 %v4266, %v4262
    %v4423 = vpack.c.b16 %v4267, %v4263
    %v4424 = vpack.c.b16 %v4268, %v4264
    %v4425 = vpack.c.b16 %v4273, %v4269
    %v4426 = vpack.c.b16 %v4274, %v4270
    %v4427 = vpack.c.b16 %v4275, %v4271
    %v4428 = vpack.c.b16 %v4276, %v4272
    %v4429 = vpack.c.b16 %v4281, %v4277
    %v4430 = vpack.c.b16 %v4282, %v4278
    %v4431 = vpack.c.b16 %v4283, %v4279
    %v4432 = vpack.c.b16 %v4284, %v4280
    %v4433 = vpack.c.b16 %v4289, %v4285
    %v4434 = vpack.c.b16 %v4290, %v4286
    %v4435 = vpack.c.b16 %v4291, %v4287
    %v4436 = vpack.c.b16 %v4292, %v4288
    %v4437 = vpack.c.b16 %v4297, %v4293
    %v4438 = vpack.c.b16 %v4298, %v4294
    %v4439 = vpack.c.b16 %v4299, %v4295
    %v4440 = vpack.c.b16 %v4300, %v4296
    %v4441 = vpack.c.b16 %v4305, %v4301
    %v4442 = vpack.c.b16 %v4306, %v4302
    %v4443 = vpack.c.b16 %v4307, %v4303
    %v4444 = vpack.c.b16 %v4308, %v4304
    %v4445 = vpack.c.b16 %v4313, %v4309
    %v4446 = vpack.c.b16 %v4314, %v4310
    %v4447 = vpack.c.b16 %v4315, %v4311
    %v4448 = vpack.c.b16 %v4316, %v4312
    %v4449 = vpack.c.b16 %v4321, %v4317
    %v4450 = vpack.c.b16 %v4322, %v4318
    %v4451 = vpack.c.b16 %v4323, %v4319
    %v4452 = vpack.c.b16 %v4324, %v4320
    %4581 = vmatprep.subr.bf16.mxu0 %v4326
    %4582 = vmatpush1.bf16.msra.mxu0 %v4325
    %4583 = vmatprep.subr.bf16.mxu0 %v4330
    %4584 = vmatpush1.bf16.msra.mxu0 %v4329
    %4585 = vmatprep.subr.bf16.mxu0 %v4334
    %4586 = vmatpush1.bf16.msra.mxu0 %v4333
    %4587 = vmatprep.subr.bf16.mxu0 %v4338
    %4588 = vmatpush1.bf16.msra.mxu0 %v4337
    %4589 = vmatprep.subr.bf16.mxu0 %v4342
    %4590 = vmatpush1.bf16.msra.mxu0 %v4341
    %4591 = vmatprep.subr.bf16.mxu0 %v4346
    %4592 = vmatpush1.bf16.msra.mxu0 %v4345
    %4593 = vmatprep.subr.bf16.mxu0 %v4350
    %4594 = vmatpush1.bf16.msra.mxu0 %v4349
    %4595 = vmatprep.subr.bf16.mxu0 %v4354
    %4596 = vmatpush1.bf16.msra.mxu0 %v4353
    %4597 = vmatprep.subr.bf16.mxu0 %v4358
    %4598 = vmatpush1.bf16.msra.mxu0 %v4357
    %4599 = vmatprep.subr.bf16.mxu0 %v4362
    %4600 = vmatpush1.bf16.msra.mxu0 %v4361
    %4601 = vmatprep.subr.bf16.mxu0 %v4366
    %4602 = vmatpush1.bf16.msra.mxu0 %v4365
    %4603 = vmatprep.subr.bf16.mxu0 %v4370
    %4604 = vmatpush1.bf16.msra.mxu0 %v4369
    %4605 = vmatprep.subr.bf16.mxu0 %v4374
    %4606 = vmatpush1.bf16.msra.mxu0 %v4373
    %4607 = vmatprep.subr.bf16.mxu0 %v4378
    %4608 = vmatpush1.bf16.msra.mxu0 %v4377
    %4609 = vmatprep.subr.bf16.mxu0 %v4382
    %4610 = vmatpush1.bf16.msra.mxu0 %v4381
    %4611 = vmatprep.subr.bf16.mxu0 %v4386
    %4612 = vmatpush1.bf16.msra.mxu0 %v4385
    %4613 = vmatprep.mubr.bf16.mxu0 %v3926
    %4614 = vmatmul.mubr.bf16.gmra.mrb[0].mxu0 %v3925
    %v4615 = vpop.f32.mrb[0].mxu0
    %v4616 = vadd.f32 0.0, %v4615
    %v4617 = vpop.f32.mrb[0].mxu0
    %v4618 = vadd.f32 0.0, %v4617
    %v4619 = vpop.f32.mrb[0].mxu0
    %v4620 = vadd.f32 0.0, %v4619
    %v4621 = vpop.f32.mrb[0].mxu0
    %v4622 = vadd.f32 0.0, %v4621
    %4623 = vmatprep.mubr.bf16.mxu0 %v3930
    %4624 = vmatmul.mubr.bf16.gmra.mrb[0].mxu0 %v3929
    %v4625 = vpop.f32.mrb[0].mxu0
    %v4626 = vadd.f32 0.0, %v4625
    %v4627 = vpop.f32.mrb[0].mxu0
    %v4628 = vadd.f32 0.0, %v4627
    %v4629 = vpop.f32.mrb[0].mxu0
    %v4630 = vadd.f32 0.0, %v4629
    %v4631 = vpop.f32.mrb[0].mxu0
    %v4632 = vadd.f32 0.0, %v4631
    %4633 = vdwg.mxu0
    %4634 = vmatprep.subr.bf16.mxu0 %v4390
    %4635 = vmatpush1.bf16.msra.mxu0 %v4389
    %4636 = vmatprep.subr.bf16.mxu0 %v4394
    %4637 = vmatpush1.bf16.msra.mxu0 %v4393
    %4638 = vmatprep.subr.bf16.mxu0 %v4398
    %4639 = vmatpush1.bf16.msra.mxu0 %v4397
    %4640 = vmatprep.subr.bf16.mxu0 %v4402
    %4641 = vmatpush1.bf16.msra.mxu0 %v4401
    %4642 = vmatprep.subr.bf16.mxu0 %v4406
    %4643 = vmatpush1.bf16.msra.mxu0 %v4405
    %4644 = vmatprep.subr.bf16.mxu0 %v4410
    %4645 = vmatpush1.bf16.msra.mxu0 %v4409
    %4646 = vmatprep.subr.bf16.mxu0 %v4414
    %4647 = vmatpush1.bf16.msra.mxu0 %v4413
    %4648 = vmatprep.subr.bf16.mxu0 %v4418
    %4649 = vmatpush1.bf16.msra.mxu0 %v4417
    %4650 = vmatprep.subr.bf16.mxu0 %v4422
    %4651 = vmatpush1.bf16.msra.mxu0 %v4421
    %4652 = vmatprep.subr.bf16.mxu0 %v4426
    %4653 = vmatpush1.bf16.msra.mxu0 %v4425
    %4654 = vmatprep.subr.bf16.mxu0 %v4430
    %4655 = vmatpush1.bf16.msra.mxu0 %v4429
    %4656 = vmatprep.subr.bf16.mxu0 %v4434
    %4657 = vmatpush1.bf16.msra.mxu0 %v4433
    %4658 = vmatprep.subr.bf16.mxu0 %v4438
    %4659 = vmatpush1.bf16.msra.mxu0 %v4437
    %4660 = vmatprep.subr.bf16.mxu0 %v4442
    %4661 = vmatpush1.bf16.msra.mxu0 %v4441
    %4662 = vmatprep.subr.bf16.mxu0 %v4446
    %4663 = vmatpush1.bf16.msra.mxu0 %v4445
    %4664 = vmatprep.subr.bf16.mxu0 %v4450
    %4665 = vmatpush1.bf16.msra.mxu0 %v4449
    %4666 = vmatprep.mubr.bf16.mxu0 %v3928
    %4667 = vmatmul.mubr.bf16.gmra.mrb[0].mxu0 %v3927
    %v4668 = vpop.f32.mrb[0].mxu0
    %v4669 = vadd.f32 %v4616, %v4668
    %v4670 = vpop.f32.mrb[0].mxu0
    %v4671 = vadd.f32 %v4618, %v4670
    %v4672 = vpop.f32.mrb[0].mxu0
    %v4673 = vadd.f32 %v4620, %v4672
    %v4674 = vpop.f32.mrb[0].mxu0
    %v4675 = vadd.f32 %v4622, %v4674
    %4676 = vmatprep.mubr.bf16.mxu0 %v3932
    %4677 = vmatmul.mubr.bf16.gmra.mrb[0].mxu0 %v3931
    %v4678 = vpop.f32.mrb[0].mxu0
    %v4679 = vadd.f32 %v4626, %v4678
    %v4680 = vpop.f32.mrb[0].mxu0
    %v4681 = vadd.f32 %v4628, %v4680
    %v4682 = vpop.f32.mrb[0].mxu0
    %v4683 = vadd.f32 %v4630, %v4682
    %v4684 = vpop.f32.mrb[0].mxu0
    %v4685 = vadd.f32 %v4632, %v4684
    %4686 = vdwg.mxu0
    %4687 = vmatprep.subr.bf16.mxu0 %v4328
    %4688 = vmatpush1.bf16.msra.mxu0 %v4327
    %4689 = vmatprep.subr.bf16.mxu0 %v4332
    %4690 = vmatpush1.bf16.msra.mxu0 %v4331
    %4691 = vmatprep.subr.bf16.mxu0 %v4336
    %4692 = vmatpush1.bf16.msra.mxu0 %v4335
    %4693 = vmatprep.subr.bf16.mxu0 %v4340
    %4694 = vmatpush1.bf16.msra.mxu0 %v4339
    %4695 = vmatprep.subr.bf16.mxu0 %v4344
    %4696 = vmatpush1.bf16.msra.mxu0 %v4343
    %4697 = vmatprep.subr.bf16.mxu0 %v4348
    %4698 = vmatpush1.bf16.msra.mxu0 %v4347
    %4699 = vmatprep.subr.bf16.mxu0 %v4352
    %4700 = vmatpush1.bf16.msra.mxu0 %v4351
    %4701 = vmatprep.subr.bf16.mxu0 %v4356
    %4702 = vmatpush1.bf16.msra.mxu0 %v4355
    %4703 = vmatprep.subr.bf16.mxu0 %v4360
    %4704 = vmatpush1.bf16.msra.mxu0 %v4359
    %4705 = vmatprep.subr.bf16.mxu0 %v4364
    %4706 = vmatpush1.bf16.msra.mxu0 %v4363
    %4707 = vmatprep.subr.bf16.mxu0 %v4368
    %4708 = vmatpush1.bf16.msra.mxu0 %v4367
    %4709 = vmatprep.subr.bf16.mxu0 %v4372
    %4710 = vmatpush1.bf16.msra.mxu0 %v4371
    %4711 = vmatprep.subr.bf16.mxu0 %v4376
    %4712 = vmatpush1.bf16.msra.mxu0 %v4375
    %4713 = vmatprep.subr.bf16.mxu0 %v4380
    %4714 = vmatpush1.bf16.msra.mxu0 %v4379
    %4715 = vmatprep.subr.bf16.mxu0 %v4384
    %4716 = vmatpush1.bf16.msra.mxu0 %v4383
    %4717 = vmatprep.subr.bf16.mxu0 %v4388
    %4718 = vmatpush1.bf16.msra.mxu0 %v4387
    %4719 = vmatprep.mubr.bf16.mxu0 %v3926
    %4720 = vmatmul.mubr.bf16.gmra.mrb[0].mxu0 %v3925
    %v4721 = vpop.f32.mrb[0].mxu0
    %v4722 = vadd.f32 0.0, %v4721
    %v4723 = vpop.f32.mrb[0].mxu0
    %v4724 = vadd.f32 0.0, %v4723
    %v4725 = vpop.f32.mrb[0].mxu0
    %v4726 = vadd.f32 0.0, %v4725
    %v4727 = vpop.f32.mrb[0].mxu0
    %v4728 = vadd.f32 0.0, %v4727
    %4729 = vmatprep.mubr.bf16.mxu0 %v3930
    %4730 = vmatmul.mubr.bf16.gmra.mrb[0].mxu0 %v3929
    %v4731 = vpop.f32.mrb[0].mxu0
    %v4732 = vadd.f32 0.0, %v4731
    %v4733 = vpop.f32.mrb[0].mxu0
    %v4734 = vadd.f32 0.0, %v4733
    %v4735 = vpop.f32.mrb[0].mxu0
    %v4736 = vadd.f32 0.0, %v4735
    %v4737 = vpop.f32.mrb[0].mxu0
    %v4738 = vadd.f32 0.0, %v4737
    %4739 = vdwg.mxu0
    %4740 = vmatprep.subr.bf16.mxu0 %v4392
    %4741 = vmatpush1.bf16.msra.mxu0 %v4391
    %4742 = vmatprep.subr.bf16.mxu0 %v4396
    %4743 = vmatpush1.bf16.msra.mxu0 %v4395
    %4744 = vmatprep.subr.bf16.mxu0 %v4400
    %4745 = vmatpush1.bf16.msra.mxu0 %v4399
    %4746 = vmatprep.subr.bf16.mxu0 %v4404
    %4747 = vmatpush1.bf16.msra.mxu0 %v4403
    %4748 = vmatprep.subr.bf16.mxu0 %v4408
    %4749 = vmatpush1.bf16.msra.mxu0 %v4407
    %4750 = vmatprep.subr.bf16.mxu0 %v4412
    %4751 = vmatpush1.bf16.msra.mxu0 %v4411
    %4752 = vmatprep.subr.bf16.mxu0 %v4416
    %4753 = vmatpush1.bf16.msra.mxu0 %v4415
    %4754 = vmatprep.subr.bf16.mxu0 %v4420
    %4755 = vmatpush1.bf16.msra.mxu0 %v4419
    %4756 = vmatprep.subr.bf16.mxu0 %v4424
    %4757 = vmatpush1.bf16.msra.mxu0 %v4423
    %4758 = vmatprep.subr.bf16.mxu0 %v4428
    %4759 = vmatpush1.bf16.msra.mxu0 %v4427
    %4760 = vmatprep.subr.bf16.mxu0 %v4432
    %4761 = vmatpush1.bf16.msra.mxu0 %v4431
    %4762 = vmatprep.subr.bf16.mxu0 %v4436
    %4763 = vmatpush1.bf16.msra.mxu0 %v4435
    %4764 = vmatprep.subr.bf16.mxu0 %v4440
    %4765 = vmatpush1.bf16.msra.mxu0 %v4439
    %4766 = vmatprep.subr.bf16.mxu0 %v4444
    %4767 = vmatpush1.bf16.msra.mxu0 %v4443
    %4768 = vmatprep.subr.bf16.mxu0 %v4448
    %4769 = vmatpush1.bf16.msra.mxu0 %v4447
    %4770 = vmatprep.subr.bf16.mxu0 %v4452
    %4771 = vmatpush1.bf16.msra.mxu0 %v4451
    %4772 = vmatprep.mubr.bf16.mxu0 %v3928
    %4773 = vmatmul.mubr.bf16.gmra.mrb[0].mxu0 %v3927
    %v4774 = vpop.f32.mrb[0].mxu0
    %v4775 = vadd.f32 %v4722, %v4774
    %v4776 = vpop.f32.mrb[0].mxu0
    %v4777 = vadd.f32 %v4724, %v4776
    %v4778 = vpop.f32.mrb[0].mxu0
    %v4779 = vadd.f32 %v4726, %v4778
    %v4780 = vpop.f32.mrb[0].mxu0
    %v4781 = vadd.f32 %v4728, %v4780
    %4782 = vmatprep.mubr.bf16.mxu0 %v3932
    %4783 = vmatmul.mubr.bf16.gmra.mrb[0].mxu0 %v3931
    %v4784 = vpop.f32.mrb[0].mxu0
    %v4785 = vadd.f32 %v4732, %v4784
    %v4786 = vpop.f32.mrb[0].mxu0
    %v4787 = vadd.f32 %v4734, %v4786
    %v4788 = vpop.f32.mrb[0].mxu0
    %v4789 = vadd.f32 %v4736, %v4788
    %v4790 = vpop.f32.mrb[0].mxu0
    %v4791 = vadd.f32 %v4738, %v4790
    %4792 = vdwg.mxu0
    %v4801 = vunpack.c.l.b16 %v3541
    %v4802 = vunpack.c.h.b16 %v3541
    %v4803 = vunpack.c.l.b16 %v3542
    %v4804 = vunpack.c.h.b16 %v3542
    %v4805 = vunpack.c.l.b16 %v3543
    %v4806 = vunpack.c.h.b16 %v3543
    %v4807 = vunpack.c.l.b16 %v3544
    %v4808 = vunpack.c.h.b16 %v3544
    %v4809 = vunpack.c.l.b16 %v3545
    %v4810 = vunpack.c.h.b16 %v3545
    %v4811 = vunpack.c.l.b16 %v3546
    %v4812 = vunpack.c.h.b16 %v3546
    %v4813 = vunpack.c.l.b16 %v3547
    %v4814 = vunpack.c.h.b16 %v3547
    %v4815 = vunpack.c.l.b16 %v3548
    %v4816 = vunpack.c.h.b16 %v3548
    %v4817 = vpack.c.b16 %v4805, %v4801
    %v4818 = vpack.c.b16 %v4806, %v4802
    %v4819 = vpack.c.b16 %v4807, %v4803
    %v4820 = vpack.c.b16 %v4808, %v4804
    %v4821 = vpack.c.b16 %v4813, %v4809
    %v4822 = vpack.c.b16 %v4814, %v4810
    %v4823 = vpack.c.b16 %v4815, %v4811
    %v4824 = vpack.c.b16 %v4816, %v4812
    %v4961 = vunpack.c.l.b16 %v3549
    %v4962 = vunpack.c.h.b16 %v3549
    %v4963 = vunpack.c.l.b16 %v3550
    %v4964 = vunpack.c.h.b16 %v3550
    %v4965 = vunpack.c.l.b16 %v3551
    %v4966 = vunpack.c.h.b16 %v3551
    %v4967 = vunpack.c.l.b16 %v3552
    %v4968 = vunpack.c.h.b16 %v3552
    %v4969 = vunpack.c.l.b16 %v3553
    %v4970 = vunpack.c.h.b16 %v3553
    %v4971 = vunpack.c.l.b16 %v3554
    %v4972 = vunpack.c.h.b16 %v3554
    %v4973 = vunpack.c.l.b16 %v3555
    %v4974 = vunpack.c.h.b16 %v3555
    %v4975 = vunpack.c.l.b16 %v3556
    %v4976 = vunpack.c.h.b16 %v3556
    %v4977 = vunpack.c.l.b16 %v3557
    %v4978 = vunpack.c.h.b16 %v3557
    %v4979 = vunpack.c.l.b16 %v3558
    %v4980 = vunpack.c.h.b16 %v3558
    %v4981 = vunpack.c.l.b16 %v3559
    %v4982 = vunpack.c.h.b16 %v3559
    %v4983 = vunpack.c.l.b16 %v3560
    %v4984 = vunpack.c.h.b16 %v3560
    %v4985 = vunpack.c.l.b16 %v3561
    %v4986 = vunpack.c.h.b16 %v3561
    %v4987 = vunpack.c.l.b16 %v3562
    %v4988 = vunpack.c.h.b16 %v3562
    %v4989 = vunpack.c.l.b16 %v3563
    %v4990 = vunpack.c.h.b16 %v3563
    %v4991 = vunpack.c.l.b16 %v3564
    %v4992 = vunpack.c.h.b16 %v3564
    %v4993 = vunpack.c.l.b16 %v3565
    %v4994 = vunpack.c.h.b16 %v3565
    %v4995 = vunpack.c.l.b16 %v3566
    %v4996 = vunpack.c.h.b16 %v3566
    %v4997 = vunpack.c.l.b16 %v3567
    %v4998 = vunpack.c.h.b16 %v3567
    %v4999 = vunpack.c.l.b16 %v3568
    %v5000 = vunpack.c.h.b16 %v3568
    %v5001 = vunpack.c.l.b16 %v3569
    %v5002 = vunpack.c.h.b16 %v3569
    %v5003 = vunpack.c.l.b16 %v3570
    %v5004 = vunpack.c.h.b16 %v3570
    %v5005 = vunpack.c.l.b16 %v3571
    %v5006 = vunpack.c.h.b16 %v3571
    %v5007 = vunpack.c.l.b16 %v3572
    %v5008 = vunpack.c.h.b16 %v3572
    %v5009 = vunpack.c.l.b16 %v3573
    %v5010 = vunpack.c.h.b16 %v3573
    %v5011 = vunpack.c.l.b16 %v3574
    %v5012 = vunpack.c.h.b16 %v3574
    %v5013 = vunpack.c.l.b16 %v3575
    %v5014 = vunpack.c.h.b16 %v3575
    %v5015 = vunpack.c.l.b16 %v3576
    %v5016 = vunpack.c.h.b16 %v3576
    %v5017 = vunpack.c.l.b16 %v3577
    %v5018 = vunpack.c.h.b16 %v3577
    %v5019 = vunpack.c.l.b16 %v3578
    %v5020 = vunpack.c.h.b16 %v3578
    %v5021 = vunpack.c.l.b16 %v3579
    %v5022 = vunpack.c.h.b16 %v3579
    %v5023 = vunpack.c.l.b16 %v3580
    %v5024 = vunpack.c.h.b16 %v3580
    %v5025 = vunpack.c.l.b16 %v3581
    %v5026 = vunpack.c.h.b16 %v3581
    %v5027 = vunpack.c.l.b16 %v3582
    %v5028 = vunpack.c.h.b16 %v3582
    %v5029 = vunpack.c.l.b16 %v3583
    %v5030 = vunpack.c.h.b16 %v3583
    %v5031 = vunpack.c.l.b16 %v3584
    %v5032 = vunpack.c.h.b16 %v3584
    %v5033 = vunpack.c.l.b16 %v3585
    %v5034 = vunpack.c.h.b16 %v3585
    %v5035 = vunpack.c.l.b16 %v3586
    %v5036 = vunpack.c.h.b16 %v3586
    %v5037 = vunpack.c.l.b16 %v3587
    %v5038 = vunpack.c.h.b16 %v3587
    %v5039 = vunpack.c.l.b16 %v3588
    %v5040 = vunpack.c.h.b16 %v3588
    %v5041 = vunpack.c.l.b16 %v3589
    %v5042 = vunpack.c.h.b16 %v3589
    %v5043 = vunpack.c.l.b16 %v3590
    %v5044 = vunpack.c.h.b16 %v3590
    %v5045 = vunpack.c.l.b16 %v3591
    %v5046 = vunpack.c.h.b16 %v3591
    %v5047 = vunpack.c.l.b16 %v3592
    %v5048 = vunpack.c.h.b16 %v3592
    %v5049 = vunpack.c.l.b16 %v3593
    %v5050 = vunpack.c.h.b16 %v3593
    %v5051 = vunpack.c.l.b16 %v3594
    %v5052 = vunpack.c.h.b16 %v3594
    %v5053 = vunpack.c.l.b16 %v3595
    %v5054 = vunpack.c.h.b16 %v3595
    %v5055 = vunpack.c.l.b16 %v3596
    %v5056 = vunpack.c.h.b16 %v3596
    %v5057 = vunpack.c.l.b16 %v3597
    %v5058 = vunpack.c.h.b16 %v3597
    %v5059 = vunpack.c.l.b16 %v3598
    %v5060 = vunpack.c.h.b16 %v3598
    %v5061 = vunpack.c.l.b16 %v3599
    %v5062 = vunpack.c.h.b16 %v3599
    %v5063 = vunpack.c.l.b16 %v3600
    %v5064 = vunpack.c.h.b16 %v3600
    %v5065 = vunpack.c.l.b16 %v3601
    %v5066 = vunpack.c.h.b16 %v3601
    %v5067 = vunpack.c.l.b16 %v3602
    %v5068 = vunpack.c.h.b16 %v3602
    %v5069 = vunpack.c.l.b16 %v3603
    %v5070 = vunpack.c.h.b16 %v3603
    %v5071 = vunpack.c.l.b16 %v3604
    %v5072 = vunpack.c.h.b16 %v3604
    %v5073 = vunpack.c.l.b16 %v3605
    %v5074 = vunpack.c.h.b16 %v3605
    %v5075 = vunpack.c.l.b16 %v3606
    %v5076 = vunpack.c.h.b16 %v3606
    %v5077 = vunpack.c.l.b16 %v3607
    %v5078 = vunpack.c.h.b16 %v3607
    %v5079 = vunpack.c.l.b16 %v3608
    %v5080 = vunpack.c.h.b16 %v3608
    %v5081 = vunpack.c.l.b16 %v3609
    %v5082 = vunpack.c.h.b16 %v3609
    %v5083 = vunpack.c.l.b16 %v3610
    %v5084 = vunpack.c.h.b16 %v3610
    %v5085 = vunpack.c.l.b16 %v3611
    %v5086 = vunpack.c.h.b16 %v3611
    %v5087 = vunpack.c.l.b16 %v3612
    %v5088 = vunpack.c.h.b16 %v3612
    %v5089 = vunpack.c.l.b16 %v3613
    %v5090 = vunpack.c.h.b16 %v3613
    %v5091 = vunpack.c.l.b16 %v3614
    %v5092 = vunpack.c.h.b16 %v3614
    %v5093 = vunpack.c.l.b16 %v3615
    %v5094 = vunpack.c.h.b16 %v3615
    %v5095 = vunpack.c.l.b16 %v3616
    %v5096 = vunpack.c.h.b16 %v3616
    %v5097 = vunpack.c.l.b16 %v3617
    %v5098 = vunpack.c.h.b16 %v3617
    %v5099 = vunpack.c.l.b16 %v3618
    %v5100 = vunpack.c.h.b16 %v3618
    %v5101 = vunpack.c.l.b16 %v3619
    %v5102 = vunpack.c.h.b16 %v3619
    %v5103 = vunpack.c.l.b16 %v3620
    %v5104 = vunpack.c.h.b16 %v3620
    %v5105 = vunpack.c.l.b16 %v3621
    %v5106 = vunpack.c.h.b16 %v3621
    %v5107 = vunpack.c.l.b16 %v3622
    %v5108 = vunpack.c.h.b16 %v3622
    %v5109 = vunpack.c.l.b16 %v3623
    %v5110 = vunpack.c.h.b16 %v3623
    %v5111 = vunpack.c.l.b16 %v3624
    %v5112 = vunpack.c.h.b16 %v3624
    %v5113 = vunpack.c.l.b16 %v3625
    %v5114 = vunpack.c.h.b16 %v3625
    %v5115 = vunpack.c.l.b16 %v3626
    %v5116 = vunpack.c.h.b16 %v3626
    %v5117 = vunpack.c.l.b16 %v3627
    %v5118 = vunpack.c.h.b16 %v3627
    %v5119 = vunpack.c.l.b16 %v3628
    %v5120 = vunpack.c.h.b16 %v3628
    %v5121 = vunpack.c.l.b16 %v3629
    %v5122 = vunpack.c.h.b16 %v3629
    %v5123 = vunpack.c.l.b16 %v3630
    %v5124 = vunpack.c.h.b16 %v3630
    %v5125 = vunpack.c.l.b16 %v3631
    %v5126 = vunpack.c.h.b16 %v3631
    %v5127 = vunpack.c.l.b16 %v3632
    %v5128 = vunpack.c.h.b16 %v3632
    %v5129 = vunpack.c.l.b16 %v3633
    %v5130 = vunpack.c.h.b16 %v3633
    %v5131 = vunpack.c.l.b16 %v3634
    %v5132 = vunpack.c.h.b16 %v3634
    %v5133 = vunpack.c.l.b16 %v3635
    %v5134 = vunpack.c.h.b16 %v3635
    %v5135 = vunpack.c.l.b16 %v3636
    %v5136 = vunpack.c.h.b16 %v3636
    %v5137 = vunpack.c.l.b16 %v3637
    %v5138 = vunpack.c.h.b16 %v3637
    %v5139 = vunpack.c.l.b16 %v3638
    %v5140 = vunpack.c.h.b16 %v3638
    %v5141 = vunpack.c.l.b16 %v3639
    %v5142 = vunpack.c.h.b16 %v3639
    %v5143 = vunpack.c.l.b16 %v3640
    %v5144 = vunpack.c.h.b16 %v3640
    %v5145 = vunpack.c.l.b16 %v3641
    %v5146 = vunpack.c.h.b16 %v3641
    %v5147 = vunpack.c.l.b16 %v3642
    %v5148 = vunpack.c.h.b16 %v3642
    %v5149 = vunpack.c.l.b16 %v3643
    %v5150 = vunpack.c.h.b16 %v3643
    %v5151 = vunpack.c.l.b16 %v3644
    %v5152 = vunpack.c.h.b16 %v3644
    %v5153 = vunpack.c.l.b16 %v3645
    %v5154 = vunpack.c.h.b16 %v3645
    %v5155 = vunpack.c.l.b16 %v3646
    %v5156 = vunpack.c.h.b16 %v3646
    %v5157 = vunpack.c.l.b16 %v3647
    %v5158 = vunpack.c.h.b16 %v3647
    %v5159 = vunpack.c.l.b16 %v3648
    %v5160 = vunpack.c.h.b16 %v3648
    %v5161 = vunpack.c.l.b16 %v3649
    %v5162 = vunpack.c.h.b16 %v3649
    %v5163 = vunpack.c.l.b16 %v3650
    %v5164 = vunpack.c.h.b16 %v3650
    %v5165 = vunpack.c.l.b16 %v3651
    %v5166 = vunpack.c.h.b16 %v3651
    %v5167 = vunpack.c.l.b16 %v3652
    %v5168 = vunpack.c.h.b16 %v3652
    %v5169 = vunpack.c.l.b16 %v3653
    %v5170 = vunpack.c.h.b16 %v3653
    %v5171 = vunpack.c.l.b16 %v3654
    %v5172 = vunpack.c.h.b16 %v3654
    %v5173 = vunpack.c.l.b16 %v3655
    %v5174 = vunpack.c.h.b16 %v3655
    %v5175 = vunpack.c.l.b16 %v3656
    %v5176 = vunpack.c.h.b16 %v3656
    %v5177 = vunpack.c.l.b16 %v3657
    %v5178 = vunpack.c.h.b16 %v3657
    %v5179 = vunpack.c.l.b16 %v3658
    %v5180 = vunpack.c.h.b16 %v3658
    %v5181 = vunpack.c.l.b16 %v3659
    %v5182 = vunpack.c.h.b16 %v3659
    %v5183 = vunpack.c.l.b16 %v3660
    %v5184 = vunpack.c.h.b16 %v3660
    %v5185 = vunpack.c.l.b16 %v3661
    %v5186 = vunpack.c.h.b16 %v3661
    %v5187 = vunpack.c.l.b16 %v3662
    %v5188 = vunpack.c.h.b16 %v3662
    %v5189 = vunpack.c.l.b16 %v3663
    %v5190 = vunpack.c.h.b16 %v3663
    %v5191 = vunpack.c.l.b16 %v3664
    %v5192 = vunpack.c.h.b16 %v3664
    %v5193 = vunpack.c.l.b16 %v3665
    %v5194 = vunpack.c.h.b16 %v3665
    %v5195 = vunpack.c.l.b16 %v3666
    %v5196 = vunpack.c.h.b16 %v3666
    %v5197 = vunpack.c.l.b16 %v3667
    %v5198 = vunpack.c.h.b16 %v3667
    %v5199 = vunpack.c.l.b16 %v3668
    %v5200 = vunpack.c.h.b16 %v3668
    %v5201 = vunpack.c.l.b16 %v3669
    %v5202 = vunpack.c.h.b16 %v3669
    %v5203 = vunpack.c.l.b16 %v3670
    %v5204 = vunpack.c.h.b16 %v3670
    %v5205 = vunpack.c.l.b16 %v3671
    %v5206 = vunpack.c.h.b16 %v3671
    %v5207 = vunpack.c.l.b16 %v3672
    %v5208 = vunpack.c.h.b16 %v3672
    %v5209 = vunpack.c.l.b16 %v3673
    %v5210 = vunpack.c.h.b16 %v3673
    %v5211 = vunpack.c.l.b16 %v3674
    %v5212 = vunpack.c.h.b16 %v3674
    %v5213 = vunpack.c.l.b16 %v3675
    %v5214 = vunpack.c.h.b16 %v3675
    %v5215 = vunpack.c.l.b16 %v3676
    %v5216 = vunpack.c.h.b16 %v3676
    %v5217 = vpack.c.b16 %v4965, %v4961
    %v5218 = vpack.c.b16 %v4966, %v4962
    %v5219 = vpack.c.b16 %v4967, %v4963
    %v5220 = vpack.c.b16 %v4968, %v4964
    %v5221 = vpack.c.b16 %v4973, %v4969
    %v5222 = vpack.c.b16 %v4974, %v4970
    %v5223 = vpack.c.b16 %v4975, %v4971
    %v5224 = vpack.c.b16 %v4976, %v4972
    %v5225 = vpack.c.b16 %v4981, %v4977
    %v5226 = vpack.c.b16 %v4982, %v4978
    %v5227 = vpack.c.b16 %v4983, %v4979
    %v5228 = vpack.c.b16 %v4984, %v4980
    %v5229 = vpack.c.b16 %v4989, %v4985
    %v5230 = vpack.c.b16 %v4990, %v4986
    %v5231 = vpack.c.b16 %v4991, %v4987
    %v5232 = vpack.c.b16 %v4992, %v4988
    %v5233 = vpack.c.b16 %v4997, %v4993
    %v5234 = vpack.c.b16 %v4998, %v4994
    %v5235 = vpack.c.b16 %v4999, %v4995
    %v5236 = vpack.c.b16 %v5000, %v4996
    %v5237 = vpack.c.b16 %v5005, %v5001
    %v5238 = vpack.c.b16 %v5006, %v5002
    %v5239 = vpack.c.b16 %v5007, %v5003
    %v5240 = vpack.c.b16 %v5008, %v5004
    %v5241 = vpack.c.b16 %v5013, %v5009
    %v5242 = vpack.c.b16 %v5014, %v5010
    %v5243 = vpack.c.b16 %v5015, %v5011
    %v5244 = vpack.c.b16 %v5016, %v5012
    %v5245 = vpack.c.b16 %v5021, %v5017
    %v5246 = vpack.c.b16 %v5022, %v5018
    %v5247 = vpack.c.b16 %v5023, %v5019
    %v5248 = vpack.c.b16 %v5024, %v5020
    %v5249 = vpack.c.b16 %v5029, %v5025
    %v5250 = vpack.c.b16 %v5030, %v5026
    %v5251 = vpack.c.b16 %v5031, %v5027
    %v5252 = vpack.c.b16 %v5032, %v5028
    %v5253 = vpack.c.b16 %v5037, %v5033
    %v5254 = vpack.c.b16 %v5038, %v5034
    %v5255 = vpack.c.b16 %v5039, %v5035
    %v5256 = vpack.c.b16 %v5040, %v5036
    %v5257 = vpack.c.b16 %v5045, %v5041
    %v5258 = vpack.c.b16 %v5046, %v5042
    %v5259 = vpack.c.b16 %v5047, %v5043
    %v5260 = vpack.c.b16 %v5048, %v5044
    %v5261 = vpack.c.b16 %v5053, %v5049
    %v5262 = vpack.c.b16 %v5054, %v5050
    %v5263 = vpack.c.b16 %v5055, %v5051
    %v5264 = vpack.c.b16 %v5056, %v5052
    %v5265 = vpack.c.b16 %v5061, %v5057
    %v5266 = vpack.c.b16 %v5062, %v5058
    %v5267 = vpack.c.b16 %v5063, %v5059
    %v5268 = vpack.c.b16 %v5064, %v5060
    %v5269 = vpack.c.b16 %v5069, %v5065
    %v5270 = vpack.c.b16 %v5070, %v5066
    %v5271 = vpack.c.b16 %v5071, %v5067
    %v5272 = vpack.c.b16 %v5072, %v5068
    %v5273 = vpack.c.b16 %v5077, %v5073
    %v5274 = vpack.c.b16 %v5078, %v5074
    %v5275 = vpack.c.b16 %v5079, %v5075
    %v5276 = vpack.c.b16 %v5080, %v5076
    %v5277 = vpack.c.b16 %v5085, %v5081
    %v5278 = vpack.c.b16 %v5086, %v5082
    %v5279 = vpack.c.b16 %v5087, %v5083
    %v5280 = vpack.c.b16 %v5088, %v5084
    %v5281 = vpack.c.b16 %v5093, %v5089
    %v5282 = vpack.c.b16 %v5094, %v5090
    %v5283 = vpack.c.b16 %v5095, %v5091
    %v5284 = vpack.c.b16 %v5096, %v5092
    %v5285 = vpack.c.b16 %v5101, %v5097
    %v5286 = vpack.c.b16 %v5102, %v5098
    %v5287 = vpack.c.b16 %v5103, %v5099
    %v5288 = vpack.c.b16 %v5104, %v5100
    %v5289 = vpack.c.b16 %v5109, %v5105
    %v5290 = vpack.c.b16 %v5110, %v5106
    %v5291 = vpack.c.b16 %v5111, %v5107
    %v5292 = vpack.c.b16 %v5112, %v5108
    %v5293 = vpack.c.b16 %v5117, %v5113
    %v5294 = vpack.c.b16 %v5118, %v5114
    %v5295 = vpack.c.b16 %v5119, %v5115
    %v5296 = vpack.c.b16 %v5120, %v5116
    %v5297 = vpack.c.b16 %v5125, %v5121
    %v5298 = vpack.c.b16 %v5126, %v5122
    %v5299 = vpack.c.b16 %v5127, %v5123
    %v5300 = vpack.c.b16 %v5128, %v5124
    %v5301 = vpack.c.b16 %v5133, %v5129
    %v5302 = vpack.c.b16 %v5134, %v5130
    %v5303 = vpack.c.b16 %v5135, %v5131
    %v5304 = vpack.c.b16 %v5136, %v5132
    %v5305 = vpack.c.b16 %v5141, %v5137
    %v5306 = vpack.c.b16 %v5142, %v5138
    %v5307 = vpack.c.b16 %v5143, %v5139
    %v5308 = vpack.c.b16 %v5144, %v5140
    %v5309 = vpack.c.b16 %v5149, %v5145
    %v5310 = vpack.c.b16 %v5150, %v5146
    %v5311 = vpack.c.b16 %v5151, %v5147
    %v5312 = vpack.c.b16 %v5152, %v5148
    %v5313 = vpack.c.b16 %v5157, %v5153
    %v5314 = vpack.c.b16 %v5158, %v5154
    %v5315 = vpack.c.b16 %v5159, %v5155
    %v5316 = vpack.c.b16 %v5160, %v5156
    %v5317 = vpack.c.b16 %v5165, %v5161
    %v5318 = vpack.c.b16 %v5166, %v5162
    %v5319 = vpack.c.b16 %v5167, %v5163
    %v5320 = vpack.c.b16 %v5168, %v5164
    %v5321 = vpack.c.b16 %v5173, %v5169
    %v5322 = vpack.c.b16 %v5174, %v5170
    %v5323 = vpack.c.b16 %v5175, %v5171
    %v5324 = vpack.c.b16 %v5176, %v5172
    %v5325 = vpack.c.b16 %v5181, %v5177
    %v5326 = vpack.c.b16 %v5182, %v5178
    %v5327 = vpack.c.b16 %v5183, %v5179
    %v5328 = vpack.c.b16 %v5184, %v5180
    %v5329 = vpack.c.b16 %v5189, %v5185
    %v5330 = vpack.c.b16 %v5190, %v5186
    %v5331 = vpack.c.b16 %v5191, %v5187
    %v5332 = vpack.c.b16 %v5192, %v5188
    %v5333 = vpack.c.b16 %v5197, %v5193
    %v5334 = vpack.c.b16 %v5198, %v5194
    %v5335 = vpack.c.b16 %v5199, %v5195
    %v5336 = vpack.c.b16 %v5200, %v5196
    %v5337 = vpack.c.b16 %v5205, %v5201
    %v5338 = vpack.c.b16 %v5206, %v5202
    %v5339 = vpack.c.b16 %v5207, %v5203
    %v5340 = vpack.c.b16 %v5208, %v5204
    %v5341 = vpack.c.b16 %v5213, %v5209
    %v5342 = vpack.c.b16 %v5214, %v5210
    %v5343 = vpack.c.b16 %v5215, %v5211
    %v5344 = vpack.c.b16 %v5216, %v5212
    %5473 = vmatprep.subr.bf16.mxu0 %v5218
    %5474 = vmatpush1.bf16.msra.mxu0 %v5217
    %5475 = vmatprep.subr.bf16.mxu0 %v5222
    %5476 = vmatpush1.bf16.msra.mxu0 %v5221
    %5477 = vmatprep.subr.bf16.mxu0 %v5226
    %5478 = vmatpush1.bf16.msra.mxu0 %v5225
    %5479 = vmatprep.subr.bf16.mxu0 %v5230
    %5480 = vmatpush1.bf16.msra.mxu0 %v5229
    %5481 = vmatprep.subr.bf16.mxu0 %v5234
    %5482 = vmatpush1.bf16.msra.mxu0 %v5233
    %5483 = vmatprep.subr.bf16.mxu0 %v5238
    %5484 = vmatpush1.bf16.msra.mxu0 %v5237
    %5485 = vmatprep.subr.bf16.mxu0 %v5242
    %5486 = vmatpush1.bf16.msra.mxu0 %v5241
    %5487 = vmatprep.subr.bf16.mxu0 %v5246
    %5488 = vmatpush1.bf16.msra.mxu0 %v5245
    %5489 = vmatprep.subr.bf16.mxu0 %v5250
    %5490 = vmatpush1.bf16.msra.mxu0 %v5249
    %5491 = vmatprep.subr.bf16.mxu0 %v5254
    %5492 = vmatpush1.bf16.msra.mxu0 %v5253
    %5493 = vmatprep.subr.bf16.mxu0 %v5258
    %5494 = vmatpush1.bf16.msra.mxu0 %v5257
    %5495 = vmatprep.subr.bf16.mxu0 %v5262
    %5496 = vmatpush1.bf16.msra.mxu0 %v5261
    %5497 = vmatprep.subr.bf16.mxu0 %v5266
    %5498 = vmatpush1.bf16.msra.mxu0 %v5265
    %5499 = vmatprep.subr.bf16.mxu0 %v5270
    %5500 = vmatpush1.bf16.msra.mxu0 %v5269
    %5501 = vmatprep.subr.bf16.mxu0 %v5274
    %5502 = vmatpush1.bf16.msra.mxu0 %v5273
    %5503 = vmatprep.subr.bf16.mxu0 %v5278
    %5504 = vmatpush1.bf16.msra.mxu0 %v5277
    %5505 = vmatprep.mubr.bf16.mxu0 %v4818
    %5506 = vmatmul.mubr.bf16.gmra.mrb[0].mxu0 %v4817
    %v5507 = vpop.f32.mrb[0].mxu0
    %v5508 = vadd.f32 %v4669, %v5507
    %v5509 = vpop.f32.mrb[0].mxu0
    %v5510 = vadd.f32 %v4671, %v5509
    %v5511 = vpop.f32.mrb[0].mxu0
    %v5512 = vadd.f32 %v4673, %v5511
    %v5513 = vpop.f32.mrb[0].mxu0
    %v5514 = vadd.f32 %v4675, %v5513
    %5515 = vmatprep.mubr.bf16.mxu0 %v4822
    %5516 = vmatmul.mubr.bf16.gmra.mrb[0].mxu0 %v4821
    %v5517 = vpop.f32.mrb[0].mxu0
    %v5518 = vadd.f32 %v4679, %v5517
    %v5519 = vpop.f32.mrb[0].mxu0
    %v5520 = vadd.f32 %v4681, %v5519
    %v5521 = vpop.f32.mrb[0].mxu0
    %v5522 = vadd.f32 %v4683, %v5521
    %v5523 = vpop.f32.mrb[0].mxu0
    %v5524 = vadd.f32 %v4685, %v5523
    %5525 = vdwg.mxu0
    %5526 = vmatprep.subr.bf16.mxu0 %v5282
    %5527 = vmatpush1.bf16.msra.mxu0 %v5281
    %5528 = vmatprep.subr.bf16.mxu0 %v5286
    %5529 = vmatpush1.bf16.msra.mxu0 %v5285
    %5530 = vmatprep.subr.bf16.mxu0 %v5290
    %5531 = vmatpush1.bf16.msra.mxu0 %v5289
    %5532 = vmatprep.subr.bf16.mxu0 %v5294
    %5533 = vmatpush1.bf16.msra.mxu0 %v5293
    %5534 = vmatprep.subr.bf16.mxu0 %v5298
    %5535 = vmatpush1.bf16.msra.mxu0 %v5297
    %5536 = vmatprep.subr.bf16.mxu0 %v5302
    %5537 = vmatpush1.bf16.msra.mxu0 %v5301
    %5538 = vmatprep.subr.bf16.mxu0 %v5306
    %5539 = vmatpush1.bf16.msra.mxu0 %v5305
    %5540 = vmatprep.subr.bf16.mxu0 %v5310
    %5541 = vmatpush1.bf16.msra.mxu0 %v5309
    %5542 = vmatprep.subr.bf16.mxu0 %v5314
    %5543 = vmatpush1.bf16.msra.mxu0 %v5313
    %5544 = vmatprep.subr.bf16.mxu0 %v5318
    %5545 = vmatpush1.bf16.msra.mxu0 %v5317
    %5546 = vmatprep.subr.bf16.mxu0 %v5322
    %5547 = vmatpush1.bf16.msra.mxu0 %v5321
    %5548 = vmatprep.subr.bf16.mxu0 %v5326
    %5549 = vmatpush1.bf16.msra.mxu0 %v5325
    %5550 = vmatprep.subr.bf16.mxu0 %v5330
    %5551 = vmatpush1.bf16.msra.mxu0 %v5329
    %5552 = vmatprep.subr.bf16.mxu0 %v5334
    %5553 = vmatpush1.bf16.msra.mxu0 %v5333
    %5554 = vmatprep.subr.bf16.mxu0 %v5338
    %5555 = vmatpush1.bf16.msra.mxu0 %v5337
    %5556 = vmatprep.subr.bf16.mxu0 %v5342
    %5557 = vmatpush1.bf16.msra.mxu0 %v5341
    %5558 = vmatprep.mubr.bf16.mxu0 %v4820
    %5559 = vmatmul.mubr.bf16.gmra.mrb[0].mxu0 %v4819
    %v5560 = vpop.f32.mrb[0].mxu0
    %v5561 = vadd.f32 %v5508, %v5560
    %v5562 = vpop.f32.mrb[0].mxu0
    %v5563 = vadd.f32 %v5510, %v5562
    %v5564 = vpop.f32.mrb[0].mxu0
    %v5565 = vadd.f32 %v5512, %v5564
    %v5566 = vpop.f32.mrb[0].mxu0
    %v5567 = vadd.f32 %v5514, %v5566
    %5568 = vmatprep.mubr.bf16.mxu0 %v4824
    %5569 = vmatmul.mubr.bf16.gmra.mrb[0].mxu0 %v4823
    %v5570 = vpop.f32.mrb[0].mxu0
    %v5571 = vadd.f32 %v5518, %v5570
    %v5572 = vpop.f32.mrb[0].mxu0
    %v5573 = vadd.f32 %v5520, %v5572
    %v5574 = vpop.f32.mrb[0].mxu0
    %v5575 = vadd.f32 %v5522, %v5574
    %v5576 = vpop.f32.mrb[0].mxu0
    %v5577 = vadd.f32 %v5524, %v5576
    %5578 = vdwg.mxu0
    %5579 = vmatprep.subr.bf16.mxu0 %v5220
    %5580 = vmatpush1.bf16.msra.mxu0 %v5219
    %5581 = vmatprep.subr.bf16.mxu0 %v5224
    %5582 = vmatpush1.bf16.msra.mxu0 %v5223
    %5583 = vmatprep.subr.bf16.mxu0 %v5228
    %5584 = vmatpush1.bf16.msra.mxu0 %v5227
    %5585 = vmatprep.subr.bf16.mxu0 %v5232
    %5586 = vmatpush1.bf16.msra.mxu0 %v5231
    %5587 = vmatprep.subr.bf16.mxu0 %v5236
    %5588 = vmatpush1.bf16.msra.mxu0 %v5235
    %5589 = vmatprep.subr.bf16.mxu0 %v5240
    %5590 = vmatpush1.bf16.msra.mxu0 %v5239
    %5591 = vmatprep.subr.bf16.mxu0 %v5244
    %5592 = vmatpush1.bf16.msra.mxu0 %v5243
    %5593 = vmatprep.subr.bf16.mxu0 %v5248
    %5594 = vmatpush1.bf16.msra.mxu0 %v5247
    %5595 = vmatprep.subr.bf16.mxu0 %v5252
    %5596 = vmatpush1.bf16.msra.mxu0 %v5251
    %5597 = vmatprep.subr.bf16.mxu0 %v5256
    %5598 = vmatpush1.bf16.msra.mxu0 %v5255
    %5599 = vmatprep.subr.bf16.mxu0 %v5260
    %5600 = vmatpush1.bf16.msra.mxu0 %v5259
    %5601 = vmatprep.subr.bf16.mxu0 %v5264
    %5602 = vmatpush1.bf16.msra.mxu0 %v5263
    %5603 = vmatprep.subr.bf16.mxu0 %v5268
    %5604 = vmatpush1.bf16.msra.mxu0 %v5267
    %5605 = vmatprep.subr.bf16.mxu0 %v5272
    %5606 = vmatpush1.bf16.msra.mxu0 %v5271
    %5607 = vmatprep.subr.bf16.mxu0 %v5276
    %5608 = vmatpush1.bf16.msra.mxu0 %v5275
    %5609 = vmatprep.subr.bf16.mxu0 %v5280
    %5610 = vmatpush1.bf16.msra.mxu0 %v5279
    %5611 = vmatprep.mubr.bf16.mxu0 %v4818
    %5612 = vmatmul.mubr.bf16.gmra.mrb[0].mxu0 %v4817
    %v5613 = vpop.f32.mrb[0].mxu0
    %v5614 = vadd.f32 %v4775, %v5613
    %v5615 = vpop.f32.mrb[0].mxu0
    %v5616 = vadd.f32 %v4777, %v5615
    %v5617 = vpop.f32.mrb[0].mxu0
    %v5618 = vadd.f32 %v4779, %v5617
    %v5619 = vpop.f32.mrb[0].mxu0
    %v5620 = vadd.f32 %v4781, %v5619
    %5621 = vmatprep.mubr.bf16.mxu0 %v4822
    %5622 = vmatmul.mubr.bf16.gmra.mrb[0].mxu0 %v4821
    %v5623 = vpop.f32.mrb[0].mxu0
    %v5624 = vadd.f32 %v4785, %v5623
    %v5625 = vpop.f32.mrb[0].mxu0
    %v5626 = vadd.f32 %v4787, %v5625
    %v5627 = vpop.f32.mrb[0].mxu0
    %v5628 = vadd.f32 %v4789, %v5627
    %v5629 = vpop.f32.mrb[0].mxu0
    %v5630 = vadd.f32 %v4791, %v5629
    %5631 = vdwg.mxu0
    %5632 = vmatprep.subr.bf16.mxu0 %v5284
    %5633 = vmatpush1.bf16.msra.mxu0 %v5283
    %5634 = vmatprep.subr.bf16.mxu0 %v5288
    %5635 = vmatpush1.bf16.msra.mxu0 %v5287
    %5636 = vmatprep.subr.bf16.mxu0 %v5292
    %5637 = vmatpush1.bf16.msra.mxu0 %v5291
    %5638 = vmatprep.subr.bf16.mxu0 %v5296
    %5639 = vmatpush1.bf16.msra.mxu0 %v5295
    %5640 = vmatprep.subr.bf16.mxu0 %v5300
    %5641 = vmatpush1.bf16.msra.mxu0 %v5299
    %5642 = vmatprep.subr.bf16.mxu0 %v5304
    %5643 = vmatpush1.bf16.msra.mxu0 %v5303
    %5644 = vmatprep.subr.bf16.mxu0 %v5308
    %5645 = vmatpush1.bf16.msra.mxu0 %v5307
    %5646 = vmatprep.subr.bf16.mxu0 %v5312
    %5647 = vmatpush1.bf16.msra.mxu0 %v5311
    %5648 = vmatprep.subr.bf16.mxu0 %v5316
    %5649 = vmatpush1.bf16.msra.mxu0 %v5315
    %5650 = vmatprep.subr.bf16.mxu0 %v5320
    %5651 = vmatpush1.bf16.msra.mxu0 %v5319
    %5652 = vmatprep.subr.bf16.mxu0 %v5324
    %5653 = vmatpush1.bf16.msra.mxu0 %v5323
    %5654 = vmatprep.subr.bf16.mxu0 %v5328
    %5655 = vmatpush1.bf16.msra.mxu0 %v5327
    %5656 = vmatprep.subr.bf16.mxu0 %v5332
    %5657 = vmatpush1.bf16.msra.mxu0 %v5331
    %5658 = vmatprep.subr.bf16.mxu0 %v5336
    %5659 = vmatpush1.bf16.msra.mxu0 %v5335
    %5660 = vmatprep.subr.bf16.mxu0 %v5340
    %5661 = vmatpush1.bf16.msra.mxu0 %v5339
    %5662 = vmatprep.subr.bf16.mxu0 %v5344
    %5663 = vmatpush1.bf16.msra.mxu0 %v5343
    %5664 = vmatprep.mubr.bf16.mxu0 %v4820
    %5665 = vmatmul.mubr.bf16.gmra.mrb[0].mxu0 %v4819
    %v5666 = vpop.f32.mrb[0].mxu0
    %v5667 = vadd.f32 %v5614, %v5666
    %v5668 = vpop.f32.mrb[0].mxu0
    %v5669 = vadd.f32 %v5616, %v5668
    %v5670 = vpop.f32.mrb[0].mxu0
    %v5671 = vadd.f32 %v5618, %v5670
    %v5672 = vpop.f32.mrb[0].mxu0
    %v5673 = vadd.f32 %v5620, %v5672
    %5674 = vmatprep.mubr.bf16.mxu0 %v4824
    %5675 = vmatmul.mubr.bf16.gmra.mrb[0].mxu0 %v4823
    %v5676 = vpop.f32.mrb[0].mxu0
    %v5677 = vadd.f32 %v5624, %v5676
    %v5678 = vpop.f32.mrb[0].mxu0
    %v5679 = vadd.f32 %v5626, %v5678
    %v5680 = vpop.f32.mrb[0].mxu0
    %v5681 = vadd.f32 %v5628, %v5680
    %v5682 = vpop.f32.mrb[0].mxu0
    %v5683 = vadd.f32 %v5630, %v5682
    %5684 = vdwg.mxu0
    %v5685 = vld [vmem:[#allocation2] sm:$0xee]
    %v5686 = vld [vmem:[#allocation2 + $0x8] sm:$0xee]
    %v5687 = vld [vmem:[#allocation2 + $0x30] sm:$0xee]
    %v5688 = vld [vmem:[#allocation2 + $0x38] sm:$0xee]
    %vm5697 = vcmask 1042432
    %vm5698 = vcmask 1046532
    %vm5699 = vmor %vm5697, %vm5698
    %v5700 = vrot.slane %v5685, 5
    %v5701 = vrot.slane %v5700, 4
    %v5702 = vrot.slane %v3543, 5
    %v5703 = vsel %vm5699, %v5701, %v5702
    %v5704 = vrot.slane %v5686, 5
    %v5705 = vrot.slane %v5704, 4
    %v5706 = vrot.slane %v3544, 5
    %v5707 = vsel %vm5699, %v5705, %v5706
    %v5708 = vrot.slane %v5702, 4
    %v5709 = vrot.slane %v3677, 5
    %v5710 = vsel %vm5699, %v5708, %v5709
    %v5711 = vrot.slane %v5706, 4
    %v5712 = vrot.slane %v3678, 5
    %v5713 = vsel %vm5699, %v5711, %v5712
    %v5714 = vrot.slane %v5687, 5
    %v5715 = vrot.slane %v5714, 4
    %v5716 = vrot.slane %v3547, 5
    %v5717 = vsel %vm5699, %v5715, %v5716
    %v5718 = vrot.slane %v5688, 5
    %v5719 = vrot.slane %v5718, 4
    %v5720 = vrot.slane %v3548, 5
    %v5721 = vsel %vm5699, %v5719, %v5720
    %v5722 = vrot.slane %v5716, 4
    %v5723 = vrot.slane %v3679, 5
    %v5724 = vsel %vm5699, %v5722, %v5723
    %v5725 = vrot.slane %v5720, 4
    %v5726 = vrot.slane %v3680, 5
    %v5727 = vsel %vm5699, %v5725, %v5726
    %s5728 = scalar_lea.vmem [#allocation6], 2048
    %v5729 = vld [vmem:[%s5728] sm:$0xff]
    %v5730 = vld [vmem:[%s5728 + $0x8] sm:$0xff]
    %v5731 = vld [vmem:[%s5728 + $0x10] sm:$0xff]
    %v5732 = vld [vmem:[%s5728 + $0x18] sm:$0xff]
    %v5733 = vld [vmem:[%s5728 + $0x20] sm:$0xff]
    %v5734 = vld [vmem:[%s5728 + $0x28] sm:$0xff]
    %v5735 = vld [vmem:[%s5728 + $0x30] sm:$0xff]
    %v5736 = vld [vmem:[%s5728 + $0x38] sm:$0xff]
    %v5737 = vld [vmem:[%s5728 + $0x40] sm:$0xff]
    %v5738 = vld [vmem:[%s5728 + $0x48] sm:$0xff]
    %v5739 = vld [vmem:[%s5728 + $0x50] sm:$0xff]
    %v5740 = vld [vmem:[%s5728 + $0x58] sm:$0xff]
    %v5741 = vld [vmem:[%s5728 + $0x60] sm:$0xff]
    %v5742 = vld [vmem:[%s5728 + $0x68] sm:$0xff]
    %v5743 = vld [vmem:[%s5728 + $0x70] sm:$0xff]
    %v5744 = vld [vmem:[%s5728 + $0x78] sm:$0xff]
    %v5745 = vld [vmem:[%s5728 + $0x80] sm:$0xff]
    %v5746 = vld [vmem:[%s5728 + $0x88] sm:$0xff]
    %v5747 = vld [vmem:[%s5728 + $0x90] sm:$0xff]
    %v5748 = vld [vmem:[%s5728 + $0x98] sm:$0xff]
    %v5749 = vld [vmem:[%s5728 + $0xa0] sm:$0xff]
    %v5750 = vld [vmem:[%s5728 + $0xa8] sm:$0xff]
    %v5751 = vld [vmem:[%s5728 + $0xb0] sm:$0xff]
    %v5752 = vld [vmem:[%s5728 + $0xb8] sm:$0xff]
    %v5753 = vld [vmem:[%s5728 + $0xc0] sm:$0xff]
    %v5754 = vld [vmem:[%s5728 + $0xc8] sm:$0xff]
    %v5755 = vld [vmem:[%s5728 + $0xd0] sm:$0xff]
    %v5756 = vld [vmem:[%s5728 + $0xd8] sm:$0xff]
    %v5757 = vld [vmem:[%s5728 + $0xe0] sm:$0xff]
    %v5758 = vld [vmem:[%s5728 + $0xe8] sm:$0xff]
    %v5759 = vld [vmem:[%s5728 + $0xf0] sm:$0xff]
    %v5760 = vld [vmem:[%s5728 + $0xf8] sm:$0xff]
    %v5761 = vld [vmem:[%s5728 + $0x100] sm:$0xff]
    %v5762 = vld [vmem:[%s5728 + $0x108] sm:$0xff]
    %v5763 = vld [vmem:[%s5728 + $0x110] sm:$0xff]
    %v5764 = vld [vmem:[%s5728 + $0x118] sm:$0xff]
    %v5765 = vld [vmem:[%s5728 + $0x120] sm:$0xff]
    %v5766 = vld [vmem:[%s5728 + $0x128] sm:$0xff]
    %v5767 = vld [vmem:[%s5728 + $0x130] sm:$0xff]
    %v5768 = vld [vmem:[%s5728 + $0x138] sm:$0xff]
    %v5769 = vld [vmem:[%s5728 + $0x140] sm:$0xff]
    %v5770 = vld [vmem:[%s5728 + $0x148] sm:$0xff]
    %v5771 = vld [vmem:[%s5728 + $0x150] sm:$0xff]
    %v5772 = vld [vmem:[%s5728 + $0x158] sm:$0xff]
    %v5773 = vld [vmem:[%s5728 + $0x160] sm:$0xff]
    %v5774 = vld [vmem:[%s5728 + $0x168] sm:$0xff]
    %v5775 = vld [vmem:[%s5728 + $0x170] sm:$0xff]
    %v5776 = vld [vmem:[%s5728 + $0x178] sm:$0xff]
    %v5777 = vld [vmem:[%s5728 + $0x180] sm:$0xff]
    %v5778 = vld [vmem:[%s5728 + $0x188] sm:$0xff]
    %v5779 = vld [vmem:[%s5728 + $0x190] sm:$0xff]
    %v5780 = vld [vmem:[%s5728 + $0x198] sm:$0xff]
    %v5781 = vld [vmem:[%s5728 + $0x1a0] sm:$0xff]
    %v5782 = vld [vmem:[%s5728 + $0x1a8] sm:$0xff]
    %v5783 = vld [vmem:[%s5728 + $0x1b0] sm:$0xff]
    %v5784 = vld [vmem:[%s5728 + $0x1b8] sm:$0xff]
    %v5785 = vld [vmem:[%s5728 + $0x1c0] sm:$0xff]
    %v5786 = vld [vmem:[%s5728 + $0x1c8] sm:$0xff]
    %v5787 = vld [vmem:[%s5728 + $0x1d0] sm:$0xff]
    %v5788 = vld [vmem:[%s5728 + $0x1d8] sm:$0xff]
    %v5789 = vld [vmem:[%s5728 + $0x1e0] sm:$0xff]
    %v5790 = vld [vmem:[%s5728 + $0x1e8] sm:$0xff]
    %v5791 = vld [vmem:[%s5728 + $0x1f0] sm:$0xff]
    %v5792 = vld [vmem:[%s5728 + $0x1f8] sm:$0xff]
    %v5793 = vld [vmem:[%s5728 + $0x200] sm:$0xff]
    %v5794 = vld [vmem:[%s5728 + $0x208] sm:$0xff]
    %v5795 = vld [vmem:[%s5728 + $0x210] sm:$0xff]
    %v5796 = vld [vmem:[%s5728 + $0x218] sm:$0xff]
    %v5797 = vld [vmem:[%s5728 + $0x220] sm:$0xff]
    %v5798 = vld [vmem:[%s5728 + $0x228] sm:$0xff]
    %v5799 = vld [vmem:[%s5728 + $0x230] sm:$0xff]
    %v5800 = vld [vmem:[%s5728 + $0x238] sm:$0xff]
    %v5801 = vld [vmem:[%s5728 + $0x240] sm:$0xff]
    %v5802 = vld [vmem:[%s5728 + $0x248] sm:$0xff]
    %v5803 = vld [vmem:[%s5728 + $0x250] sm:$0xff]
    %v5804 = vld [vmem:[%s5728 + $0x258] sm:$0xff]
    %v5805 = vld [vmem:[%s5728 + $0x260] sm:$0xff]
    %v5806 = vld [vmem:[%s5728 + $0x268] sm:$0xff]
    %v5807 = vld [vmem:[%s5728 + $0x270] sm:$0xff]
    %v5808 = vld [vmem:[%s5728 + $0x278] sm:$0xff]
    %v5809 = vld [vmem:[%s5728 + $0x280] sm:$0xff]
    %v5810 = vld [vmem:[%s5728 + $0x288] sm:$0xff]
    %v5811 = vld [vmem:[%s5728 + $0x290] sm:$0xff]
    %v5812 = vld [vmem:[%s5728 + $0x298] sm:$0xff]
    %v5813 = vld [vmem:[%s5728 + $0x2a0] sm:$0xff]
    %v5814 = vld [vmem:[%s5728 + $0x2a8] sm:$0xff]
    %v5815 = vld [vmem:[%s5728 + $0x2b0] sm:$0xff]
    %v5816 = vld [vmem:[%s5728 + $0x2b8] sm:$0xff]
    %v5817 = vld [vmem:[%s5728 + $0x2c0] sm:$0xff]
    %v5818 = vld [vmem:[%s5728 + $0x2c8] sm:$0xff]
    %v5819 = vld [vmem:[%s5728 + $0x2d0] sm:$0xff]
    %v5820 = vld [vmem:[%s5728 + $0x2d8] sm:$0xff]
    %v5821 = vld [vmem:[%s5728 + $0x2e0] sm:$0xff]
    %v5822 = vld [vmem:[%s5728 + $0x2e8] sm:$0xff]
    %v5823 = vld [vmem:[%s5728 + $0x2f0] sm:$0xff]
    %v5824 = vld [vmem:[%s5728 + $0x2f8] sm:$0xff]
    %v5825 = vld [vmem:[%s5728 + $0x300] sm:$0xff]
    %v5826 = vld [vmem:[%s5728 + $0x308] sm:$0xff]
    %v5827 = vld [vmem:[%s5728 + $0x310] sm:$0xff]
    %v5828 = vld [vmem:[%s5728 + $0x318] sm:$0xff]
    %v5829 = vld [vmem:[%s5728 + $0x320] sm:$0xff]
    %v5830 = vld [vmem:[%s5728 + $0x328] sm:$0xff]
    %v5831 = vld [vmem:[%s5728 + $0x330] sm:$0xff]
    %v5832 = vld [vmem:[%s5728 + $0x338] sm:$0xff]
    %v5833 = vld [vmem:[%s5728 + $0x340] sm:$0xff]
    %v5834 = vld [vmem:[%s5728 + $0x348] sm:$0xff]
    %v5835 = vld [vmem:[%s5728 + $0x350] sm:$0xff]
    %v5836 = vld [vmem:[%s5728 + $0x358] sm:$0xff]
    %v5837 = vld [vmem:[%s5728 + $0x360] sm:$0xff]
    %v5838 = vld [vmem:[%s5728 + $0x368] sm:$0xff]
    %v5839 = vld [vmem:[%s5728 + $0x370] sm:$0xff]
    %v5840 = vld [vmem:[%s5728 + $0x378] sm:$0xff]
    %v5841 = vld [vmem:[%s5728 + $0x380] sm:$0xff]
    %v5842 = vld [vmem:[%s5728 + $0x388] sm:$0xff]
    %v5843 = vld [vmem:[%s5728 + $0x390] sm:$0xff]
    %v5844 = vld [vmem:[%s5728 + $0x398] sm:$0xff]
    %v5845 = vld [vmem:[%s5728 + $0x3a0] sm:$0xff]
    %v5846 = vld [vmem:[%s5728 + $0x3a8] sm:$0xff]
    %v5847 = vld [vmem:[%s5728 + $0x3b0] sm:$0xff]
    %v5848 = vld [vmem:[%s5728 + $0x3b8] sm:$0xff]
    %v5849 = vld [vmem:[%s5728 + $0x3c0] sm:$0xff]
    %v5850 = vld [vmem:[%s5728 + $0x3c8] sm:$0xff]
    %v5851 = vld [vmem:[%s5728 + $0x3d0] sm:$0xff]
    %v5852 = vld [vmem:[%s5728 + $0x3d8] sm:$0xff]
    %v5853 = vld [vmem:[%s5728 + $0x3e0] sm:$0xff]
    %v5854 = vld [vmem:[%s5728 + $0x3e8] sm:$0xff]
    %v5855 = vld [vmem:[%s5728 + $0x3f0] sm:$0xff]
    %v5856 = vld [vmem:[%s5728 + $0x3f8] sm:$0xff]
    %v5857 = vunpack.c.l.b16 %v5703
    %v5858 = vunpack.c.h.b16 %v5703
    %v5859 = vunpack.c.l.b16 %v5707
    %v5860 = vunpack.c.h.b16 %v5707
    %v5861 = vunpack.c.l.b16 %v5710
    %v5862 = vunpack.c.h.b16 %v5710
    %v5863 = vunpack.c.l.b16 %v5713
    %v5864 = vunpack.c.h.b16 %v5713
    %v5865 = vunpack.c.l.b16 %v5717
    %v5866 = vunpack.c.h.b16 %v5717
    %v5867 = vunpack.c.l.b16 %v5721
    %v5868 = vunpack.c.h.b16 %v5721
    %v5869 = vunpack.c.l.b16 %v5724
    %v5870 = vunpack.c.h.b16 %v5724
    %v5871 = vunpack.c.l.b16 %v5727
    %v5872 = vunpack.c.h.b16 %v5727
    %v5873 = vpack.c.b16 %v5861, %v5857
    %v5874 = vpack.c.b16 %v5862, %v5858
    %v5875 = vpack.c.b16 %v5863, %v5859
    %v5876 = vpack.c.b16 %v5864, %v5860
    %v5877 = vpack.c.b16 %v5869, %v5865
    %v5878 = vpack.c.b16 %v5870, %v5866
    %v5879 = vpack.c.b16 %v5871, %v5867
    %v5880 = vpack.c.b16 %v5872, %v5868
    %v6017 = vunpack.c.l.b16 %v5729
    %v6018 = vunpack.c.h.b16 %v5729
    %v6019 = vunpack.c.l.b16 %v5730
    %v6020 = vunpack.c.h.b16 %v5730
    %v6021 = vunpack.c.l.b16 %v5731
    %v6022 = vunpack.c.h.b16 %v5731
    %v6023 = vunpack.c.l.b16 %v5732
    %v6024 = vunpack.c.h.b16 %v5732
    %v6025 = vunpack.c.l.b16 %v5733
    %v6026 = vunpack.c.h.b16 %v5733
    %v6027 = vunpack.c.l.b16 %v5734
    %v6028 = vunpack.c.h.b16 %v5734
    %v6029 = vunpack.c.l.b16 %v5735
    %v6030 = vunpack.c.h.b16 %v5735
    %v6031 = vunpack.c.l.b16 %v5736
    %v6032 = vunpack.c.h.b16 %v5736
    %v6033 = vunpack.c.l.b16 %v5737
    %v6034 = vunpack.c.h.b16 %v5737
    %v6035 = vunpack.c.l.b16 %v5738
    %v6036 = vunpack.c.h.b16 %v5738
    %v6037 = vunpack.c.l.b16 %v5739
    %v6038 = vunpack.c.h.b16 %v5739
    %v6039 = vunpack.c.l.b16 %v5740
    %v6040 = vunpack.c.h.b16 %v5740
    %v6041 = vunpack.c.l.b16 %v5741
    %v6042 = vunpack.c.h.b16 %v5741
    %v6043 = vunpack.c.l.b16 %v5742
    %v6044 = vunpack.c.h.b16 %v5742
    %v6045 = vunpack.c.l.b16 %v5743
    %v6046 = vunpack.c.h.b16 %v5743
    %v6047 = vunpack.c.l.b16 %v5744
    %v6048 = vunpack.c.h.b16 %v5744
    %v6049 = vunpack.c.l.b16 %v5745
    %v6050 = vunpack.c.h.b16 %v5745
    %v6051 = vunpack.c.l.b16 %v5746
    %v6052 = vunpack.c.h.b16 %v5746
    %v6053 = vunpack.c.l.b16 %v5747
    %v6054 = vunpack.c.h.b16 %v5747
    %v6055 = vunpack.c.l.b16 %v5748
    %v6056 = vunpack.c.h.b16 %v5748
    %v6057 = vunpack.c.l.b16 %v5749
    %v6058 = vunpack.c.h.b16 %v5749
    %v6059 = vunpack.c.l.b16 %v5750
    %v6060 = vunpack.c.h.b16 %v5750
    %v6061 = vunpack.c.l.b16 %v5751
    %v6062 = vunpack.c.h.b16 %v5751
    %v6063 = vunpack.c.l.b16 %v5752
    %v6064 = vunpack.c.h.b16 %v5752
    %v6065 = vunpack.c.l.b16 %v5753
    %v6066 = vunpack.c.h.b16 %v5753
    %v6067 = vunpack.c.l.b16 %v5754
    %v6068 = vunpack.c.h.b16 %v5754
    %v6069 = vunpack.c.l.b16 %v5755
    %v6070 = vunpack.c.h.b16 %v5755
    %v6071 = vunpack.c.l.b16 %v5756
    %v6072 = vunpack.c.h.b16 %v5756
    %v6073 = vunpack.c.l.b16 %v5757
    %v6074 = vunpack.c.h.b16 %v5757
    %v6075 = vunpack.c.l.b16 %v5758
    %v6076 = vunpack.c.h.b16 %v5758
    %v6077 = vunpack.c.l.b16 %v5759
    %v6078 = vunpack.c.h.b16 %v5759
    %v6079 = vunpack.c.l.b16 %v5760
    %v6080 = vunpack.c.h.b16 %v5760
    %v6081 = vunpack.c.l.b16 %v5761
    %v6082 = vunpack.c.h.b16 %v5761
    %v6083 = vunpack.c.l.b16 %v5762
    %v6084 = vunpack.c.h.b16 %v5762
    %v6085 = vunpack.c.l.b16 %v5763
    %v6086 = vunpack.c.h.b16 %v5763
    %v6087 = vunpack.c.l.b16 %v5764
    %v6088 = vunpack.c.h.b16 %v5764
    %v6089 = vunpack.c.l.b16 %v5765
    %v6090 = vunpack.c.h.b16 %v5765
    %v6091 = vunpack.c.l.b16 %v5766
    %v6092 = vunpack.c.h.b16 %v5766
    %v6093 = vunpack.c.l.b16 %v5767
    %v6094 = vunpack.c.h.b16 %v5767
    %v6095 = vunpack.c.l.b16 %v5768
    %v6096 = vunpack.c.h.b16 %v5768
    %v6097 = vunpack.c.l.b16 %v5769
    %v6098 = vunpack.c.h.b16 %v5769
    %v6099 = vunpack.c.l.b16 %v5770
    %v6100 = vunpack.c.h.b16 %v5770
    %v6101 = vunpack.c.l.b16 %v5771
    %v6102 = vunpack.c.h.b16 %v5771
    %v6103 = vunpack.c.l.b16 %v5772
    %v6104 = vunpack.c.h.b16 %v5772
    %v6105 = vunpack.c.l.b16 %v5773
    %v6106 = vunpack.c.h.b16 %v5773
    %v6107 = vunpack.c.l.b16 %v5774
    %v6108 = vunpack.c.h.b16 %v5774
    %v6109 = vunpack.c.l.b16 %v5775
    %v6110 = vunpack.c.h.b16 %v5775
    %v6111 = vunpack.c.l.b16 %v5776
    %v6112 = vunpack.c.h.b16 %v5776
    %v6113 = vunpack.c.l.b16 %v5777
    %v6114 = vunpack.c.h.b16 %v5777
    %v6115 = vunpack.c.l.b16 %v5778
    %v6116 = vunpack.c.h.b16 %v5778
    %v6117 = vunpack.c.l.b16 %v5779
    %v6118 = vunpack.c.h.b16 %v5779
    %v6119 = vunpack.c.l.b16 %v5780
    %v6120 = vunpack.c.h.b16 %v5780
    %v6121 = vunpack.c.l.b16 %v5781
    %v6122 = vunpack.c.h.b16 %v5781
    %v6123 = vunpack.c.l.b16 %v5782
    %v6124 = vunpack.c.h.b16 %v5782
    %v6125 = vunpack.c.l.b16 %v5783
    %v6126 = vunpack.c.h.b16 %v5783
    %v6127 = vunpack.c.l.b16 %v5784
    %v6128 = vunpack.c.h.b16 %v5784
    %v6129 = vunpack.c.l.b16 %v5785
    %v6130 = vunpack.c.h.b16 %v5785
    %v6131 = vunpack.c.l.b16 %v5786
    %v6132 = vunpack.c.h.b16 %v5786
    %v6133 = vunpack.c.l.b16 %v5787
    %v6134 = vunpack.c.h.b16 %v5787
    %v6135 = vunpack.c.l.b16 %v5788
    %v6136 = vunpack.c.h.b16 %v5788
    %v6137 = vunpack.c.l.b16 %v5789
    %v6138 = vunpack.c.h.b16 %v5789
    %v6139 = vunpack.c.l.b16 %v5790
    %v6140 = vunpack.c.h.b16 %v5790
    %v6141 = vunpack.c.l.b16 %v5791
    %v6142 = vunpack.c.h.b16 %v5791
    %v6143 = vunpack.c.l.b16 %v5792
    %v6144 = vunpack.c.h.b16 %v5792
    %v6145 = vunpack.c.l.b16 %v5793
    %v6146 = vunpack.c.h.b16 %v5793
    %v6147 = vunpack.c.l.b16 %v5794
    %v6148 = vunpack.c.h.b16 %v5794
    %v6149 = vunpack.c.l.b16 %v5795
    %v6150 = vunpack.c.h.b16 %v5795
    %v6151 = vunpack.c.l.b16 %v5796
    %v6152 = vunpack.c.h.b16 %v5796
    %v6153 = vunpack.c.l.b16 %v5797
    %v6154 = vunpack.c.h.b16 %v5797
    %v6155 = vunpack.c.l.b16 %v5798
    %v6156 = vunpack.c.h.b16 %v5798
    %v6157 = vunpack.c.l.b16 %v5799
    %v6158 = vunpack.c.h.b16 %v5799
    %v6159 = vunpack.c.l.b16 %v5800
    %v6160 = vunpack.c.h.b16 %v5800
    %v6161 = vunpack.c.l.b16 %v5801
    %v6162 = vunpack.c.h.b16 %v5801
    %v6163 = vunpack.c.l.b16 %v5802
    %v6164 = vunpack.c.h.b16 %v5802
    %v6165 = vunpack.c.l.b16 %v5803
    %v6166 = vunpack.c.h.b16 %v5803
    %v6167 = vunpack.c.l.b16 %v5804
    %v6168 = vunpack.c.h.b16 %v5804
    %v6169 = vunpack.c.l.b16 %v5805
    %v6170 = vunpack.c.h.b16 %v5805
    %v6171 = vunpack.c.l.b16 %v5806
    %v6172 = vunpack.c.h.b16 %v5806
    %v6173 = vunpack.c.l.b16 %v5807
    %v6174 = vunpack.c.h.b16 %v5807
    %v6175 = vunpack.c.l.b16 %v5808
    %v6176 = vunpack.c.h.b16 %v5808
    %v6177 = vunpack.c.l.b16 %v5809
    %v6178 = vunpack.c.h.b16 %v5809
    %v6179 = vunpack.c.l.b16 %v5810
    %v6180 = vunpack.c.h.b16 %v5810
    %v6181 = vunpack.c.l.b16 %v5811
    %v6182 = vunpack.c.h.b16 %v5811
    %v6183 = vunpack.c.l.b16 %v5812
    %v6184 = vunpack.c.h.b16 %v5812
    %v6185 = vunpack.c.l.b16 %v5813
    %v6186 = vunpack.c.h.b16 %v5813
    %v6187 = vunpack.c.l.b16 %v5814
    %v6188 = vunpack.c.h.b16 %v5814
    %v6189 = vunpack.c.l.b16 %v5815
    %v6190 = vunpack.c.h.b16 %v5815
    %v6191 = vunpack.c.l.b16 %v5816
    %v6192 = vunpack.c.h.b16 %v5816
    %v6193 = vunpack.c.l.b16 %v5817
    %v6194 = vunpack.c.h.b16 %v5817
    %v6195 = vunpack.c.l.b16 %v5818
    %v6196 = vunpack.c.h.b16 %v5818
    %v6197 = vunpack.c.l.b16 %v5819
    %v6198 = vunpack.c.h.b16 %v5819
    %v6199 = vunpack.c.l.b16 %v5820
    %v6200 = vunpack.c.h.b16 %v5820
    %v6201 = vunpack.c.l.b16 %v5821
    %v6202 = vunpack.c.h.b16 %v5821
    %v6203 = vunpack.c.l.b16 %v5822
    %v6204 = vunpack.c.h.b16 %v5822
    %v6205 = vunpack.c.l.b16 %v5823
    %v6206 = vunpack.c.h.b16 %v5823
    %v6207 = vunpack.c.l.b16 %v5824
    %v6208 = vunpack.c.h.b16 %v5824
    %v6209 = vunpack.c.l.b16 %v5825
    %v6210 = vunpack.c.h.b16 %v5825
    %v6211 = vunpack.c.l.b16 %v5826
    %v6212 = vunpack.c.h.b16 %v5826
    %v6213 = vunpack.c.l.b16 %v5827
    %v6214 = vunpack.c.h.b16 %v5827
    %v6215 = vunpack.c.l.b16 %v5828
    %v6216 = vunpack.c.h.b16 %v5828
    %v6217 = vunpack.c.l.b16 %v5829
    %v6218 = vunpack.c.h.b16 %v5829
    %v6219 = vunpack.c.l.b16 %v5830
    %v6220 = vunpack.c.h.b16 %v5830
    %v6221 = vunpack.c.l.b16 %v5831
    %v6222 = vunpack.c.h.b16 %v5831
    %v6223 = vunpack.c.l.b16 %v5832
    %v6224 = vunpack.c.h.b16 %v5832
    %v6225 = vunpack.c.l.b16 %v5833
    %v6226 = vunpack.c.h.b16 %v5833
    %v6227 = vunpack.c.l.b16 %v5834
    %v6228 = vunpack.c.h.b16 %v5834
    %v6229 = vunpack.c.l.b16 %v5835
    %v6230 = vunpack.c.h.b16 %v5835
    %v6231 = vunpack.c.l.b16 %v5836
    %v6232 = vunpack.c.h.b16 %v5836
    %v6233 = vunpack.c.l.b16 %v5837
    %v6234 = vunpack.c.h.b16 %v5837
    %v6235 = vunpack.c.l.b16 %v5838
    %v6236 = vunpack.c.h.b16 %v5838
    %v6237 = vunpack.c.l.b16 %v5839
    %v6238 = vunpack.c.h.b16 %v5839
    %v6239 = vunpack.c.l.b16 %v5840
    %v6240 = vunpack.c.h.b16 %v5840
    %v6241 = vunpack.c.l.b16 %v5841
    %v6242 = vunpack.c.h.b16 %v5841
    %v6243 = vunpack.c.l.b16 %v5842
    %v6244 = vunpack.c.h.b16 %v5842
    %v6245 = vunpack.c.l.b16 %v5843
    %v6246 = vunpack.c.h.b16 %v5843
    %v6247 = vunpack.c.l.b16 %v5844
    %v6248 = vunpack.c.h.b16 %v5844
    %v6249 = vunpack.c.l.b16 %v5845
    %v6250 = vunpack.c.h.b16 %v5845
    %v6251 = vunpack.c.l.b16 %v5846
    %v6252 = vunpack.c.h.b16 %v5846
    %v6253 = vunpack.c.l.b16 %v5847
    %v6254 = vunpack.c.h.b16 %v5847
    %v6255 = vunpack.c.l.b16 %v5848
    %v6256 = vunpack.c.h.b16 %v5848
    %v6257 = vunpack.c.l.b16 %v5849
    %v6258 = vunpack.c.h.b16 %v5849
    %v6259 = vunpack.c.l.b16 %v5850
    %v6260 = vunpack.c.h.b16 %v5850
    %v6261 = vunpack.c.l.b16 %v5851
    %v6262 = vunpack.c.h.b16 %v5851
    %v6263 = vunpack.c.l.b16 %v5852
    %v6264 = vunpack.c.h.b16 %v5852
    %v6265 = vunpack.c.l.b16 %v5853
    %v6266 = vunpack.c.h.b16 %v5853
    %v6267 = vunpack.c.l.b16 %v5854
    %v6268 = vunpack.c.h.b16 %v5854
    %v6269 = vunpack.c.l.b16 %v5855
    %v6270 = vunpack.c.h.b16 %v5855
    %v6271 = vunpack.c.l.b16 %v5856
    %v6272 = vunpack.c.h.b16 %v5856
    %v6273 = vpack.c.b16 %v6021, %v6017
    %v6274 = vpack.c.b16 %v6022, %v6018
    %v6275 = vpack.c.b16 %v6023, %v6019
    %v6276 = vpack.c.b16 %v6024, %v6020
    %v6277 = vpack.c.b16 %v6029, %v6025
    %v6278 = vpack.c.b16 %v6030, %v6026
    %v6279 = vpack.c.b16 %v6031, %v6027
    %v6280 = vpack.c.b16 %v6032, %v6028
    %v6281 = vpack.c.b16 %v6037, %v6033
    %v6282 = vpack.c.b16 %v6038, %v6034
    %v6283 = vpack.c.b16 %v6039, %v6035
    %v6284 = vpack.c.b16 %v6040, %v6036
    %v6285 = vpack.c.b16 %v6045, %v6041
    %v6286 = vpack.c.b16 %v6046, %v6042
    %v6287 = vpack.c.b16 %v6047, %v6043
    %v6288 = vpack.c.b16 %v6048, %v6044
    %v6289 = vpack.c.b16 %v6053, %v6049
    %v6290 = vpack.c.b16 %v6054, %v6050
    %v6291 = vpack.c.b16 %v6055, %v6051
    %v6292 = vpack.c.b16 %v6056, %v6052
    %v6293 = vpack.c.b16 %v6061, %v6057
    %v6294 = vpack.c.b16 %v6062, %v6058
    %v6295 = vpack.c.b16 %v6063, %v6059
    %v6296 = vpack.c.b16 %v6064, %v6060
    %v6297 = vpack.c.b16 %v6069, %v6065
    %v6298 = vpack.c.b16 %v6070, %v6066
    %v6299 = vpack.c.b16 %v6071, %v6067
    %v6300 = vpack.c.b16 %v6072, %v6068
    %v6301 = vpack.c.b16 %v6077, %v6073
    %v6302 = vpack.c.b16 %v6078, %v6074
    %v6303 = vpack.c.b16 %v6079, %v6075
    %v6304 = vpack.c.b16 %v6080, %v6076
    %v6305 = vpack.c.b16 %v6085, %v6081
    %v6306 = vpack.c.b16 %v6086, %v6082
    %v6307 = vpack.c.b16 %v6087, %v6083
    %v6308 = vpack.c.b16 %v6088, %v6084
    %v6309 = vpack.c.b16 %v6093, %v6089
    %v6310 = vpack.c.b16 %v6094, %v6090
    %v6311 = vpack.c.b16 %v6095, %v6091
    %v6312 = vpack.c.b16 %v6096, %v6092
    %v6313 = vpack.c.b16 %v6101, %v6097
    %v6314 = vpack.c.b16 %v6102, %v6098
    %v6315 = vpack.c.b16 %v6103, %v6099
    %v6316 = vpack.c.b16 %v6104, %v6100
    %v6317 = vpack.c.b16 %v6109, %v6105
    %v6318 = vpack.c.b16 %v6110, %v6106
    %v6319 = vpack.c.b16 %v6111, %v6107
    %v6320 = vpack.c.b16 %v6112, %v6108
    %v6321 = vpack.c.b16 %v6117, %v6113
    %v6322 = vpack.c.b16 %v6118, %v6114
    %v6323 = vpack.c.b16 %v6119, %v6115
    %v6324 = vpack.c.b16 %v6120, %v6116
    %v6325 = vpack.c.b16 %v6125, %v6121
    %v6326 = vpack.c.b16 %v6126, %v6122
    %v6327 = vpack.c.b16 %v6127, %v6123
    %v6328 = vpack.c.b16 %v6128, %v6124
    %v6329 = vpack.c.b16 %v6133, %v6129
    %v6330 = vpack.c.b16 %v6134, %v6130
    %v6331 = vpack.c.b16 %v6135, %v6131
    %v6332 = vpack.c.b16 %v6136, %v6132
    %v6333 = vpack.c.b16 %v6141, %v6137
    %v6334 = vpack.c.b16 %v6142, %v6138
    %v6335 = vpack.c.b16 %v6143, %v6139
    %v6336 = vpack.c.b16 %v6144, %v6140
    %v6337 = vpack.c.b16 %v6149, %v6145
    %v6338 = vpack.c.b16 %v6150, %v6146
    %v6339 = vpack.c.b16 %v6151, %v6147
    %v6340 = vpack.c.b16 %v6152, %v6148
    %v6341 = vpack.c.b16 %v6157, %v6153
    %v6342 = vpack.c.b16 %v6158, %v6154
    %v6343 = vpack.c.b16 %v6159, %v6155
    %v6344 = vpack.c.b16 %v6160, %v6156
    %v6345 = vpack.c.b16 %v6165, %v6161
    %v6346 = vpack.c.b16 %v6166, %v6162
    %v6347 = vpack.c.b16 %v6167, %v6163
    %v6348 = vpack.c.b16 %v6168, %v6164
    %v6349 = vpack.c.b16 %v6173, %v6169
    %v6350 = vpack.c.b16 %v6174, %v6170
    %v6351 = vpack.c.b16 %v6175, %v6171
    %v6352 = vpack.c.b16 %v6176, %v6172
    %v6353 = vpack.c.b16 %v6181, %v6177
    %v6354 = vpack.c.b16 %v6182, %v6178
    %v6355 = vpack.c.b16 %v6183, %v6179
    %v6356 = vpack.c.b16 %v6184, %v6180
    %v6357 = vpack.c.b16 %v6189, %v6185
    %v6358 = vpack.c.b16 %v6190, %v6186
    %v6359 = vpack.c.b16 %v6191, %v6187
    %v6360 = vpack.c.b16 %v6192, %v6188
    %v6361 = vpack.c.b16 %v6197, %v6193
    %v6362 = vpack.c.b16 %v6198, %v6194
    %v6363 = vpack.c.b16 %v6199, %v6195
    %v6364 = vpack.c.b16 %v6200, %v6196
    %v6365 = vpack.c.b16 %v6205, %v6201
    %v6366 = vpack.c.b16 %v6206, %v6202
    %v6367 = vpack.c.b16 %v6207, %v6203
    %v6368 = vpack.c.b16 %v6208, %v6204
    %v6369 = vpack.c.b16 %v6213, %v6209
    %v6370 = vpack.c.b16 %v6214, %v6210
    %v6371 = vpack.c.b16 %v6215, %v6211
    %v6372 = vpack.c.b16 %v6216, %v6212
    %v6373 = vpack.c.b16 %v6221, %v6217
    %v6374 = vpack.c.b16 %v6222, %v6218
    %v6375 = vpack.c.b16 %v6223, %v6219
    %v6376 = vpack.c.b16 %v6224, %v6220
    %v6377 = vpack.c.b16 %v6229, %v6225
    %v6378 = vpack.c.b16 %v6230, %v6226
    %v6379 = vpack.c.b16 %v6231, %v6227
    %v6380 = vpack.c.b16 %v6232, %v6228
    %v6381 = vpack.c.b16 %v6237, %v6233
    %v6382 = vpack.c.b16 %v6238, %v6234
    %v6383 = vpack.c.b16 %v6239, %v6235
    %v6384 = vpack.c.b16 %v6240, %v6236
    %v6385 = vpack.c.b16 %v6245, %v6241
    %v6386 = vpack.c.b16 %v6246, %v6242
    %v6387 = vpack.c.b16 %v6247, %v6243
    %v6388 = vpack.c.b16 %v6248, %v6244
    %v6389 = vpack.c.b16 %v6253, %v6249
    %v6390 = vpack.c.b16 %v6254, %v6250
    %v6391 = vpack.c.b16 %v6255, %v6251
    %v6392 = vpack.c.b16 %v6256, %v6252
    %v6393 = vpack.c.b16 %v6261, %v6257
    %v6394 = vpack.c.b16 %v6262, %v6258
    %v6395 = vpack.c.b16 %v6263, %v6259
    %v6396 = vpack.c.b16 %v6264, %v6260
    %v6397 = vpack.c.b16 %v6269, %v6265
    %v6398 = vpack.c.b16 %v6270, %v6266
    %v6399 = vpack.c.b16 %v6271, %v6267
    %v6400 = vpack.c.b16 %v6272, %v6268
    %6529 = vmatprep.subr.bf16.mxu0 %v6274
    %6530 = vmatpush1.bf16.msra.mxu0 %v6273
    %6531 = vmatprep.subr.bf16.mxu0 %v6278
    %6532 = vmatpush1.bf16.msra.mxu0 %v6277
    %6533 = vmatprep.subr.bf16.mxu0 %v6282
    %6534 = vmatpush1.bf16.msra.mxu0 %v6281
    %6535 = vmatprep.subr.bf16.mxu0 %v6286
    %6536 = vmatpush1.bf16.msra.mxu0 %v6285
    %6537 = vmatprep.subr.bf16.mxu0 %v6290
    %6538 = vmatpush1.bf16.msra.mxu0 %v6289
    %6539 = vmatprep.subr.bf16.mxu0 %v6294
    %6540 = vmatpush1.bf16.msra.mxu0 %v6293
    %6541 = vmatprep.subr.bf16.mxu0 %v6298
    %6542 = vmatpush1.bf16.msra.mxu0 %v6297
    %6543 = vmatprep.subr.bf16.mxu0 %v6302
    %6544 = vmatpush1.bf16.msra.mxu0 %v6301
    %6545 = vmatprep.subr.bf16.mxu0 %v6306
    %6546 = vmatpush1.bf16.msra.mxu0 %v6305
    %6547 = vmatprep.subr.bf16.mxu0 %v6310
    %6548 = vmatpush1.bf16.msra.mxu0 %v6309
    %6549 = vmatprep.subr.bf16.mxu0 %v6314
    %6550 = vmatpush1.bf16.msra.mxu0 %v6313
    %6551 = vmatprep.subr.bf16.mxu0 %v6318
    %6552 = vmatpush1.bf16.msra.mxu0 %v6317
    %6553 = vmatprep.subr.bf16.mxu0 %v6322
    %6554 = vmatpush1.bf16.msra.mxu0 %v6321
    %6555 = vmatprep.subr.bf16.mxu0 %v6326
    %6556 = vmatpush1.bf16.msra.mxu0 %v6325
    %6557 = vmatprep.subr.bf16.mxu0 %v6330
    %6558 = vmatpush1.bf16.msra.mxu0 %v6329
    %6559 = vmatprep.subr.bf16.mxu0 %v6334
    %6560 = vmatpush1.bf16.msra.mxu0 %v6333
    %6561 = vmatprep.mubr.bf16.mxu0 %v5874
    %6562 = vmatmul.mubr.bf16.gmra.mrb[0].mxu0 %v5873
    %v6563 = vpop.f32.mrb[0].mxu0
    %v6564 = vadd.f32 0.0, %v6563
    %v6565 = vpop.f32.mrb[0].mxu0
    %v6566 = vadd.f32 0.0, %v6565
    %v6567 = vpop.f32.mrb[0].mxu0
    %v6568 = vadd.f32 0.0, %v6567
    %v6569 = vpop.f32.mrb[0].mxu0
    %v6570 = vadd.f32 0.0, %v6569
    %6571 = vmatprep.mubr.bf16.mxu0 %v5878
    %6572 = vmatmul.mubr.bf16.gmra.mrb[0].mxu0 %v5877
    %v6573 = vpop.f32.mrb[0].mxu0
    %v6574 = vadd.f32 0.0, %v6573
    %v6575 = vpop.f32.mrb[0].mxu0
    %v6576 = vadd.f32 0.0, %v6575
    %v6577 = vpop.f32.mrb[0].mxu0
    %v6578 = vadd.f32 0.0, %v6577
    %v6579 = vpop.f32.mrb[0].mxu0
    %v6580 = vadd.f32 0.0, %v6579
    %6581 = vdwg.mxu0
    %6582 = vmatprep.subr.bf16.mxu0 %v6338
    %6583 = vmatpush1.bf16.msra.mxu0 %v6337
    %6584 = vmatprep.subr.bf16.mxu0 %v6342
    %6585 = vmatpush1.bf16.msra.mxu0 %v6341
    %6586 = vmatprep.subr.bf16.mxu0 %v6346
    %6587 = vmatpush1.bf16.msra.mxu0 %v6345
    %6588 = vmatprep.subr.bf16.mxu0 %v6350
    %6589 = vmatpush1.bf16.msra.mxu0 %v6349
    %6590 = vmatprep.subr.bf16.mxu0 %v6354
    %6591 = vmatpush1.bf16.msra.mxu0 %v6353
    %6592 = vmatprep.subr.bf16.mxu0 %v6358
    %6593 = vmatpush1.bf16.msra.mxu0 %v6357
    %6594 = vmatprep.subr.bf16.mxu0 %v6362
    %6595 = vmatpush1.bf16.msra.mxu0 %v6361
    %6596 = vmatprep.subr.bf16.mxu0 %v6366
    %6597 = vmatpush1.bf16.msra.mxu0 %v6365
    %6598 = vmatprep.subr.bf16.mxu0 %v6370
    %6599 = vmatpush1.bf16.msra.mxu0 %v6369
    %6600 = vmatprep.subr.bf16.mxu0 %v6374
    %6601 = vmatpush1.bf16.msra.mxu0 %v6373
    %6602 = vmatprep.subr.bf16.mxu0 %v6378
    %6603 = vmatpush1.bf16.msra.mxu0 %v6377
    %6604 = vmatprep.subr.bf16.mxu0 %v6382
    %6605 = vmatpush1.bf16.msra.mxu0 %v6381
    %6606 = vmatprep.subr.bf16.mxu0 %v6386
    %6607 = vmatpush1.bf16.msra.mxu0 %v6385
    %6608 = vmatprep.subr.bf16.mxu0 %v6390
    %6609 = vmatpush1.bf16.msra.mxu0 %v6389
    %6610 = vmatprep.subr.bf16.mxu0 %v6394
    %6611 = vmatpush1.bf16.msra.mxu0 %v6393
    %6612 = vmatprep.subr.bf16.mxu0 %v6398
    %6613 = vmatpush1.bf16.msra.mxu0 %v6397
    %6614 = vmatprep.mubr.bf16.mxu0 %v5876
    %6615 = vmatmul.mubr.bf16.gmra.mrb[0].mxu0 %v5875
    %v6616 = vpop.f32.mrb[0].mxu0
    %v6617 = vadd.f32 %v6564, %v6616
    %v6618 = vpop.f32.mrb[0].mxu0
    %v6619 = vadd.f32 %v6566, %v6618
    %v6620 = vpop.f32.mrb[0].mxu0
    %v6621 = vadd.f32 %v6568, %v6620
    %v6622 = vpop.f32.mrb[0].mxu0
    %v6623 = vadd.f32 %v6570, %v6622
    %6624 = vmatprep.mubr.bf16.mxu0 %v5880
    %6625 = vmatmul.mubr.bf16.gmra.mrb[0].mxu0 %v5879
    %v6626 = vpop.f32.mrb[0].mxu0
    %v6627 = vadd.f32 %v6574, %v6626
    %v6628 = vpop.f32.mrb[0].mxu0
    %v6629 = vadd.f32 %v6576, %v6628
    %v6630 = vpop.f32.mrb[0].mxu0
    %v6631 = vadd.f32 %v6578, %v6630
    %v6632 = vpop.f32.mrb[0].mxu0
    %v6633 = vadd.f32 %v6580, %v6632
    %6634 = vdwg.mxu0
    %6635 = vmatprep.subr.bf16.mxu0 %v6276
    %6636 = vmatpush1.bf16.msra.mxu0 %v6275
    %6637 = vmatprep.subr.bf16.mxu0 %v6280
    %6638 = vmatpush1.bf16.msra.mxu0 %v6279
    %6639 = vmatprep.subr.bf16.mxu0 %v6284
    %6640 = vmatpush1.bf16.msra.mxu0 %v6283
    %6641 = vmatprep.subr.bf16.mxu0 %v6288
    %6642 = vmatpush1.bf16.msra.mxu0 %v6287
    %6643 = vmatprep.subr.bf16.mxu0 %v6292
    %6644 = vmatpush1.bf16.msra.mxu0 %v6291
    %6645 = vmatprep.subr.bf16.mxu0 %v6296
    %6646 = vmatpush1.bf16.msra.mxu0 %v6295
    %6647 = vmatprep.subr.bf16.mxu0 %v6300
    %6648 = vmatpush1.bf16.msra.mxu0 %v6299
    %6649 = vmatprep.subr.bf16.mxu0 %v6304
    %6650 = vmatpush1.bf16.msra.mxu0 %v6303
    %6651 = vmatprep.subr.bf16.mxu0 %v6308
    %6652 = vmatpush1.bf16.msra.mxu0 %v6307
    %6653 = vmatprep.subr.bf16.mxu0 %v6312
    %6654 = vmatpush1.bf16.msra.mxu0 %v6311
    %6655 = vmatprep.subr.bf16.mxu0 %v6316
    %6656 = vmatpush1.bf16.msra.mxu0 %v6315
    %6657 = vmatprep.subr.bf16.mxu0 %v6320
    %6658 = vmatpush1.bf16.msra.mxu0 %v6319
    %6659 = vmatprep.subr.bf16.mxu0 %v6324
    %6660 = vmatpush1.bf16.msra.mxu0 %v6323
    %6661 = vmatprep.subr.bf16.mxu0 %v6328
    %6662 = vmatpush1.bf16.msra.mxu0 %v6327
    %6663 = vmatprep.subr.bf16.mxu0 %v6332
    %6664 = vmatpush1.bf16.msra.mxu0 %v6331
    %6665 = vmatprep.subr.bf16.mxu0 %v6336
    %6666 = vmatpush1.bf16.msra.mxu0 %v6335
    %6667 = vmatprep.mubr.bf16.mxu0 %v5874
    %6668 = vmatmul.mubr.bf16.gmra.mrb[0].mxu0 %v5873
    %v6669 = vpop.f32.mrb[0].mxu0
    %v6670 = vadd.f32 0.0, %v6669
    %v6671 = vpop.f32.mrb[0].mxu0
    %v6672 = vadd.f32 0.0, %v6671
    %v6673 = vpop.f32.mrb[0].mxu0
    %v6674 = vadd.f32 0.0, %v6673
    %v6675 = vpop.f32.mrb[0].mxu0
    %v6676 = vadd.f32 0.0, %v6675
    %6677 = vmatprep.mubr.bf16.mxu0 %v5878
    %6678 = vmatmul.mubr.bf16.gmra.mrb[0].mxu0 %v5877
    %v6679 = vpop.f32.mrb[0].mxu0
    %v6680 = vadd.f32 0.0, %v6679
    %v6681 = vpop.f32.mrb[0].mxu0
    %v6682 = vadd.f32 0.0, %v6681
    %v6683 = vpop.f32.mrb[0].mxu0
    %v6684 = vadd.f32 0.0, %v6683
    %v6685 = vpop.f32.mrb[0].mxu0
    %v6686 = vadd.f32 0.0, %v6685
    %6687 = vdwg.mxu0
    %6688 = vmatprep.subr.bf16.mxu0 %v6340
    %6689 = vmatpush1.bf16.msra.mxu0 %v6339
    %6690 = vmatprep.subr.bf16.mxu0 %v6344
    %6691 = vmatpush1.bf16.msra.mxu0 %v6343
    %6692 = vmatprep.subr.bf16.mxu0 %v6348
    %6693 = vmatpush1.bf16.msra.mxu0 %v6347
    %6694 = vmatprep.subr.bf16.mxu0 %v6352
    %6695 = vmatpush1.bf16.msra.mxu0 %v6351
    %6696 = vmatprep.subr.bf16.mxu0 %v6356
    %6697 = vmatpush1.bf16.msra.mxu0 %v6355
    %6698 = vmatprep.subr.bf16.mxu0 %v6360
    %6699 = vmatpush1.bf16.msra.mxu0 %v6359
    %6700 = vmatprep.subr.bf16.mxu0 %v6364
    %6701 = vmatpush1.bf16.msra.mxu0 %v6363
    %6702 = vmatprep.subr.bf16.mxu0 %v6368
    %6703 = vmatpush1.bf16.msra.mxu0 %v6367
    %6704 = vmatprep.subr.bf16.mxu0 %v6372
    %6705 = vmatpush1.bf16.msra.mxu0 %v6371
    %6706 = vmatprep.subr.bf16.mxu0 %v6376
    %6707 = vmatpush1.bf16.msra.mxu0 %v6375
    %6708 = vmatprep.subr.bf16.mxu0 %v6380
    %6709 = vmatpush1.bf16.msra.mxu0 %v6379
    %6710 = vmatprep.subr.bf16.mxu0 %v6384
    %6711 = vmatpush1.bf16.msra.mxu0 %v6383
    %6712 = vmatprep.subr.bf16.mxu0 %v6388
    %6713 = vmatpush1.bf16.msra.mxu0 %v6387
    %6714 = vmatprep.subr.bf16.mxu0 %v6392
    %6715 = vmatpush1.bf16.msra.mxu0 %v6391
    %6716 = vmatprep.subr.bf16.mxu0 %v6396
    %6717 = vmatpush1.bf16.msra.mxu0 %v6395
    %6718 = vmatprep.subr.bf16.mxu0 %v6400
    %6719 = vmatpush1.bf16.msra.mxu0 %v6399
    %6720 = vmatprep.mubr.bf16.mxu0 %v5876
    %6721 = vmatmul.mubr.bf16.gmra.mrb[0].mxu0 %v5875
    %v6722 = vpop.f32.mrb[0].mxu0
    %v6723 = vadd.f32 %v6670, %v6722
    %v6724 = vpop.f32.mrb[0].mxu0
    %v6725 = vadd.f32 %v6672, %v6724
    %v6726 = vpop.f32.mrb[0].mxu0
    %v6727 = vadd.f32 %v6674, %v6726
    %v6728 = vpop.f32.mrb[0].mxu0
    %v6729 = vadd.f32 %v6676, %v6728
    %6730 = vmatprep.mubr.bf16.mxu0 %v5880
    %6731 = vmatmul.mubr.bf16.gmra.mrb[0].mxu0 %v5879
    %v6732 = vpop.f32.mrb[0].mxu0
    %v6733 = vadd.f32 %v6680, %v6732
    %v6734 = vpop.f32.mrb[0].mxu0
    %v6735 = vadd.f32 %v6682, %v6734
    %v6736 = vpop.f32.mrb[0].mxu0
    %v6737 = vadd.f32 %v6684, %v6736
    %v6738 = vpop.f32.mrb[0].mxu0
    %v6739 = vadd.f32 %v6686, %v6738
    %6740 = vdwg.mxu0
    %v6741 = vadd.f32 %v5561, %v6617
    %v6742 = vadd.f32 %v5563, %v6619
    %v6743 = vadd.f32 %v5667, %v6723
    %v6744 = vadd.f32 %v5669, %v6725
    %v6745 = vadd.f32 %v5565, %v6621
    %v6746 = vadd.f32 %v5567, %v6623
    %v6747 = vadd.f32 %v5671, %v6727
    %v6748 = vadd.f32 %v5673, %v6729
    %v6749 = vadd.f32 %v5571, %v6627
    %v6750 = vadd.f32 %v5573, %v6629
    %v6751 = vadd.f32 %v5677, %v6733
    %v6752 = vadd.f32 %v5679, %v6735
    %v6753 = vadd.f32 %v5575, %v6631
    %v6754 = vadd.f32 %v5577, %v6633
    %v6755 = vadd.f32 %v5681, %v6737
    %v6756 = vadd.f32 %v5683, %v6739
    %v6757 = vmul.f32 %v6741, %v3279
    %v6758 = vmul.f32 %v6742, %v3283
    %v6759 = vmul.f32 %v6743, %v3287
    %v6760 = vmul.f32 %v6744, %v3291
    %v6761 = vmul.f32 %v6745, %v3279
    %v6762 = vmul.f32 %v6746, %v3283
    %v6763 = vmul.f32 %v6747, %v3287
    %v6764 = vmul.f32 %v6748, %v3291
    %v6765 = vmul.f32 %v6749, %v3279
    %v6766 = vmul.f32 %v6750, %v3283
    %v6767 = vmul.f32 %v6751, %v3287
    %v6768 = vmul.f32 %v6752, %v3291
    %v6769 = vmul.f32 %v6753, %v3279
    %v6770 = vmul.f32 %v6754, %v3283
    %v6771 = vmul.f32 %v6755, %v3287
    %v6772 = vmul.f32 %v6756, %v3291
    %v6773 = vadd.f32 %v6757, %v3316
    %v6774 = vadd.f32 %v6758, %v3320
    %v6775 = vadd.f32 %v6759, %v3324
    %v6776 = vadd.f32 %v6760, %v3328
    %v6777 = vadd.f32 %v6761, %v3316
    %v6778 = vadd.f32 %v6762, %v3320
    %v6779 = vadd.f32 %v6763, %v3324
    %v6780 = vadd.f32 %v6764, %v3328
    %v6781 = vadd.f32 %v6765, %v3316
    %v6782 = vadd.f32 %v6766, %v3320
    %v6783 = vadd.f32 %v6767, %v3324
    %v6784 = vadd.f32 %v6768, %v3328
    %v6785 = vadd.f32 %v6769, %v3316
    %v6786 = vadd.f32 %v6770, %v3320
    %v6787 = vadd.f32 %v6771, %v3324
    %v6788 = vadd.f32 %v6772, %v3328
    %v6789 = vld [vmem:[%s0] sm:$0xfe]
    %v6790 = vld [vmem:[%s0 + $0x8] sm:$0xfe]
    %v6791 = vld [vmem:[%s0 + $0x10] sm:$0xfe]
    %v6792 = vld [vmem:[%s0 + $0x18] sm:$0xfe]
    %v6793 = vld [vmem:[%s0 + $0x20] sm:$0xff]
    %v6794 = vld [vmem:[%s0 + $0x28] sm:$0xff]
    %v6795 = vld [vmem:[%s0 + $0x30] sm:$0xff]
    %v6796 = vld [vmem:[%s0 + $0x38] sm:$0xff]
    %v6797 = vld [vmem:[%s0 + $0x40] sm:$0x1]
    %v6798 = vld [vmem:[%s0 + $0x48] sm:$0x1]
    %v6799 = vld [vmem:[%s0 + $0x50] sm:$0x1]
    %v6800 = vld [vmem:[%s0 + $0x58] sm:$0x1]
    %v6801 = vld [vmem:[%s0 + $0x60] sm:$0xfe]
    %v6802 = vld [vmem:[%s0 + $0x68] sm:$0xfe]
    %v6803 = vld [vmem:[%s0 + $0x70] sm:$0xfe]
    %v6804 = vld [vmem:[%s0 + $0x78] sm:$0xfe]
    %v6805 = vld [vmem:[%s0 + $0x80] sm:$0xff]
    %v6806 = vld [vmem:[%s0 + $0x88] sm:$0xff]
    %v6807 = vld [vmem:[%s0 + $0x90] sm:$0xff]
    %v6808 = vld [vmem:[%s0 + $0x98] sm:$0xff]
    %v6809 = vld [vmem:[%s0 + $0xa0] sm:$0x1]
    %v6810 = vld [vmem:[%s0 + $0xa8] sm:$0x1]
    %v6811 = vld [vmem:[%s0 + $0xb0] sm:$0x1]
    %v6812 = vld [vmem:[%s0 + $0xb8] sm:$0x1]
    %vm6837 = vcmask 1046528
    %v6838 = vrot.slane %v6789, 1
    %v6839 = vrot.slane %v6793, 1
    %v6840 = vsel %vm6837, %v6838, %v6839
    %v6841 = vrot.slane %v6790, 1
    %v6842 = vrot.slane %v6794, 1
    %v6843 = vsel %vm6837, %v6841, %v6842
    %v6844 = vrot.slane %v6791, 1
    %v6845 = vrot.slane %v6795, 1
    %v6846 = vsel %vm6837, %v6844, %v6845
    %v6847 = vrot.slane %v6792, 1
    %v6848 = vrot.slane %v6796, 1
    %v6849 = vsel %vm6837, %v6847, %v6848
    %v6850 = vrot.slane %v6797, 1
    %v6851 = vsel %vm6837, %v6839, %v6850
    %v6852 = vrot.slane %v6798, 1
    %v6853 = vsel %vm6837, %v6842, %v6852
    %v6854 = vrot.slane %v6799, 1
    %v6855 = vsel %vm6837, %v6845, %v6854
    %v6856 = vrot.slane %v6800, 1
    %v6857 = vsel %vm6837, %v6848, %v6856
    %v6858 = vrot.slane %v6801, 1
    %v6859 = vrot.slane %v6805, 1
    %v6860 = vsel %vm6837, %v6858, %v6859
    %v6861 = vrot.slane %v6802, 1
    %v6862 = vrot.slane %v6806, 1
    %v6863 = vsel %vm6837, %v6861, %v6862
    %v6864 = vrot.slane %v6803, 1
    %v6865 = vrot.slane %v6807, 1
    %v6866 = vsel %vm6837, %v6864, %v6865
    %v6867 = vrot.slane %v6804, 1
    %v6868 = vrot.slane %v6808, 1
    %v6869 = vsel %vm6837, %v6867, %v6868
    %v6870 = vrot.slane %v6809, 1
    %v6871 = vsel %vm6837, %v6859, %v6870
    %v6872 = vrot.slane %v6810, 1
    %v6873 = vsel %vm6837, %v6862, %v6872
    %v6874 = vrot.slane %v6811, 1
    %v6875 = vsel %vm6837, %v6865, %v6874
    %v6876 = vrot.slane %v6812, 1
    %v6877 = vsel %vm6837, %v6868, %v6876
    %v6894 = vadd.f32 %v6773, %v6840
    %v6895 = vadd.f32 %v6774, %v6843
    %v6896 = vadd.f32 %v6775, %v6846
    %v6897 = vadd.f32 %v6776, %v6849
    %v6898 = vadd.f32 %v6777, %v6851
    %v6899 = vadd.f32 %v6778, %v6853
    %v6900 = vadd.f32 %v6779, %v6855
    %v6901 = vadd.f32 %v6780, %v6857
    %v6902 = vadd.f32 %v6781, %v6860
    %v6903 = vadd.f32 %v6782, %v6863
    %v6904 = vadd.f32 %v6783, %v6866
    %v6905 = vadd.f32 %v6784, %v6869
    %v6906 = vadd.f32 %v6785, %v6871
    %v6907 = vadd.f32 %v6786, %v6873
    %v6908 = vadd.f32 %v6787, %v6875
    %v6909 = vadd.f32 %v6788, %v6877
    %v6910 = vmax.f32 %v6894, 0.0
    %v6911 = vmax.f32 %v6895, 0.0
    %v6912 = vmax.f32 %v6896, 0.0
    %v6913 = vmax.f32 %v6897, 0.0
    %v6914 = vmax.f32 %v6898, 0.0
    %v6915 = vmax.f32 %v6899, 0.0
    %v6916 = vmax.f32 %v6900, 0.0
    %v6917 = vmax.f32 %v6901, 0.0
    %v6918 = vmax.f32 %v6902, 0.0
    %v6919 = vmax.f32 %v6903, 0.0
    %v6920 = vmax.f32 %v6904, 0.0
    %v6921 = vmax.f32 %v6905, 0.0
    %v6922 = vmax.f32 %v6906, 0.0
    %v6923 = vmax.f32 %v6907, 0.0
    %v6924 = vmax.f32 %v6908, 0.0
    %v6925 = vmax.f32 %v6909, 0.0
    %6926 = vst [vmem:[#allocation11] sm:$0xff] %v6910
    %6927 = vst [vmem:[#allocation11 + $0x8] sm:$0xff] %v6911
    %6928 = vst [vmem:[#allocation11 + $0x10] sm:$0xff] %v6912
    %6929 = vst [vmem:[#allocation11 + $0x18] sm:$0xff] %v6913
    %6930 = vst [vmem:[#allocation11 + $0x20] sm:$0xff] %v6914
    %6931 = vst [vmem:[#allocation11 + $0x28] sm:$0xff] %v6915
    %6932 = vst [vmem:[#allocation11 + $0x30] sm:$0xff] %v6916
    %6933 = vst [vmem:[#allocation11 + $0x38] sm:$0xff] %v6917
    %6934 = vst [vmem:[#allocation11 + $0x40] sm:$0xff] %v6918
    %6935 = vst [vmem:[#allocation11 + $0x48] sm:$0xff] %v6919
    %6936 = vst [vmem:[#allocation11 + $0x50] sm:$0xff] %v6920
    %6937 = vst [vmem:[#allocation11 + $0x58] sm:$0xff] %v6921
    %6938 = vst [vmem:[#allocation11 + $0x60] sm:$0xff] %v6922
    %6939 = vst [vmem:[#allocation11 + $0x68] sm:$0xff] %v6923
    %6940 = vst [vmem:[#allocation11 + $0x70] sm:$0xff] %v6924
    %6941 = vst [vmem:[#allocation11 + $0x78] sm:$0xff] %v6925
    // Predicated region
    $region38: #{tpu_custom_call.1} parent=1 // pred_check
      _
    $region39: #{tpu_custom_call.1} parent=1 // pred_check_branch
      %6943 = sbr.rel (0) target = $region41
    $region40: #{tpu_custom_call.1} parent=1 // pred_region
      %s6945 = ssub.s32 2048, 2048
      %6946 = vsyncadd [#allocation5], %s6945
      %s6947 = sshll.u32 [#allocation11], 4
      %s6948 = int_to_ptr.vmem [resolvable:$true] %s6947
      %6953 = dma.vmem_to_hbm [thread:$0]  %s6948, 2048, %s5, [#allocation5], 512, 512, 32
    $region41: #{tpu_custom_call.1} parent=1 // pred_fallthru
      _
    // Predicated region
    $region42: #{tpu_custom_call.1} parent=1 // pred_check
      _
    $region43: #{tpu_custom_call.1} parent=1 // pred_check_branch
      %6955 = sbr.rel (0) target = $region45
    $region44: #{tpu_custom_call.1} parent=1 // pred_region
      %6956 = dma.done [#allocation5], 2048
    $region45: #{tpu_custom_call.1} parent=1 // pred_fallthru
      _
    %6957 = vsyncpa [#allocation4], 1
    %6958 = vsyncpa [#allocation7], 1
    %6959 = vsyncpa [#allocation10], 1
    %6960 = vsyncpa [#allocation5], 1

</llo_original>
